<compile_context>
chip_gen: v7x
topology: tpu7x:2x2x1
jax: 0.10.0
libtpu: 0.0.40
codegen_flags: <defaults>
</compile_context>

<pallas_src>
import functools

import jax
import jax.numpy as jnp
from jax import lax
from jax.experimental import pallas as pl
from jax.experimental.pallas import tpu as pltpu


KH, KW = 6, 5                  # Conv2d kernel size hard-coded in PreEncoder
SH, SW = 3, 3                  # Conv2d stride
# Composition of the two stride-3 convs (valid because there is no BN/ReLU between them):
KHE = (KH - 1) * SH + KH       # 21  effective kernel rows
KWE = (KW - 1) * SW + KW       # 17  effective kernel cols
SHE, SWE = SH * SH, SW * SW    # 9, 9 effective stride
NQH = -(-KHE // SHE)           # 3   stride-blocks spanned by the effective kernel (rows)
NQW = -(-KWE // SWE)           # 2   (cols)
NQ = NQH * NQW                 # 6


def _conv_out(n, k, s):
    return (n - k) // s + 1


# ------------------------------- fused kernel ------------------------------- #
def _preencoder_kernel(oh2, ow2, y_ref, w_ref, b_ref, out_ref):
    """One batch tile per grid step.

    y_ref:   (Bt, hb, wb, KD)  bf16  stride-9 space-to-depth input blocks
    w_ref:   (NQ, KD, COUT)    bf16  composed conv(+xyz) weights, one slab per offset
    b_ref:   (1, COUT)         f32   composed bias (feats | xyz | zero pad)
    out_ref: (Bt, p2, COUT)    f32   feats(256) | xyz(4) | pad, lane-dense
    """
    bt = y_ref.shape[0]
    kd = y_ref.shape[-1]
    cout = w_ref.shape[-1]
    p2 = oh2 * ow2

    acc = jnp.zeros((bt * p2, cout), jnp.float32)
    for q in range(NQ):                       # 6 well-shaped matmuls, unrolled
        qi, qj = q // NQW, q % NQW
        # in-VMEM im2col slab for this offset: (Bt*p2, KD)
        lhs = y_ref[:, qi:qi + oh2, qj:qj + ow2, :].reshape(bt * p2, kd)
        acc = acc + jnp.dot(lhs, w_ref[q], preferred_element_type=jnp.float32)

    out = acc + b_ref[...]                    # bias added exactly once
    out_ref[...] = out.reshape(bt, p2, cout).astype(out_ref.dtype)


# --------------------------------- wrapper ---------------------------------- #
class PreEncoderPallas:
    """Pallas/TPU forward for PreEncoder (Conv2d branch, preencoder_type != 'resnet18')."""

    C_XYZ = 4
    XYZ_PAD = 128     # pad feats(256)+xyz(4) to 384 output lanes -> lane-dense store

    def __init__(self, mlp, key):
        assert len(mlp) == 3 and mlp[-1] == 256, "fused kernel expects mlp=[Cin, C1, 256]"
        self.c_in, self.c1, self.c2 = mlp
        k1w, k1b, k2w, k2b, kxw, kxb = jax.random.split(key, 6)
        # PyTorch parameter layouts: Conv2d (Cout, Cin, KH, KW); Linear (out, in).
        self.w1 = jax.random.normal(k1w, (self.c1, self.c_in, KH, KW), jnp.float32) * 0.05
        self.b1 = jax.random.normal(k1b, (self.c1,), jnp.float32) * 0.01
        self.w2 = jax.random.normal(k2w, (self.c2, self.c1, KH, KW), jnp.float32) * 0.05
        self.b2 = jax.random.normal(k2b, (self.c2,), jnp.float32) * 0.01
        self.w_lin = jax.random.normal(kxw, (self.C_XYZ, self.c2), jnp.float32) * 0.05
        self.b_lin = jax.random.normal(kxb, (self.C_XYZ,), jnp.float32) * 0.01

        # ---- host-side composition: conv2 ∘ conv1 -> one (21,17)/(9,9) conv ---- #
        # W_eff[c2, cin, SH*ki2+ki1, SW*kj2+kj1] += W2[c2,c1,ki2,kj2] * W1[c1,cin,ki1,kj1]
        w_eff = jnp.zeros((self.c2, self.c_in, KHE, KWE), jnp.float32)
        for ki2 in range(KH):
            for kj2 in range(KW):
                blk = jnp.einsum('ab,bikl->aikl', self.w2[:, :, ki2, kj2], self.w1)
                w_eff = w_eff.at[:, :, SH * ki2:SH * ki2 + KH,
                                 SW * kj2:SW * kj2 + KW].add(blk)
        b_eff = self.b2 + jnp.einsum('abij,b->a', self.w2, self.b1)

        # Block-grouped (stride-9 space-to-depth) weight layout, zero-padded to 27x18.
        self.kd = SHE * SWE * self.c_in                       # 81*Cin
        self.kd_pad = ((self.kd + 127) // 128) * 128          # lane-aligned K
        self.c_out = self.c2 + self.XYZ_PAD                   # 384
        w_hwio = jnp.transpose(w_eff, (2, 3, 1, 0))           # (21,17,Cin,C2)
        w_pad = jnp.zeros((NQH * SHE, NQW * SWE, self.c_in, self.c2), jnp.float32)
        w_pad = w_pad.at[:KHE, :KWE].set(w_hwio)
        wq = (w_pad.reshape(NQH, SHE, NQW, SWE, self.c_in, self.c2)
              .transpose(0, 2, 1, 3, 4, 5)
              .reshape(NQ, self.kd, self.c2))                 # (6, 81*Cin, 256)

        # xyz head folded in as 4 extra output columns (no nonlinearity before it).
        wq_xyz = jnp.einsum('qkc,xc->qkx', wq, self.w_lin)    # (6, 81*Cin, 4)
        w_comb = jnp.zeros((NQ, self.kd_pad, self.c_out), jnp.float32)
        w_comb = w_comb.at[:, :self.kd, :self.c2].set(wq)
        w_comb = w_comb.at[:, :self.kd, self.c2:self.c2 + self.C_XYZ].set(wq_xyz)
        self.w_comb = w_comb.astype(jnp.bfloat16)

        b_comb = jnp.zeros((1, self.c_out), jnp.float32)
        b_comb = b_comb.at[0, :self.c2].set(b_eff)
        b_comb = b_comb.at[0, self.c2:self.c2 + self.C_XYZ].set(
            b_eff @ self.w_lin.T + self.b_lin)
        self.b_comb = b_comb

    def __call__(self, xyz, features, inds):
        B, H, W, c_in = features.shape
        assert c_in == self.c_in
        oh1, ow1 = _conv_out(H, KH, SH), _conv_out(W, KW, SW)
        oh2, ow2 = _conv_out(oh1, KH, SH), _conv_out(ow1, KW, SW)
        assert oh1 >= KH and ow1 >= KW and oh2 >= 1 and ow2 >= 1
        # Last valid output's receptive field stays inside the real image -> any padded
        # rows/cols below only ever meet zero-padded weight rows/cols (KHE<=NQH*SHE, ...).
        assert SHE * (oh2 - 1) + KHE <= H and SWE * (ow2 - 1) + KWE <= W
        hb, wb = oh2 + NQH - 1, ow2 + NQW - 1
        hc, wc = hb * SHE, wb * SWE
        p2 = oh2 * ow2

        # stride-9 space-to-depth: pure layout transform (crop/zero-pad to the block grid).
        x = features[:, :min(H, hc), :min(W, wc), :]
        ph, pw = hc - x.shape[1], wc - x.shape[2]
        if ph or pw:
            x = jnp.pad(x, ((0, 0), (0, ph), (0, pw), (0, 0)))
        y = (x.reshape(B, hb, SHE, wb, SWE, c_in)
             .transpose(0, 1, 3, 2, 4, 5)
             .reshape(B, hb, wb, self.kd))
        if self.kd_pad != self.kd:
            y = jnp.pad(y, ((0, 0), (0, 0), (0, 0), (0, self.kd_pad - self.kd)))
        y = y.astype(jnp.bfloat16)

        # Batch tiling: <=2 grid steps so v7x's two TensorCores both get work while
        # single-TC v5e/v6e keep per-step overhead and matmul M amortized over Bt images.
        grid_n = 1 if B == 1 else 2
        bt = -(-B // grid_n)
        bp = bt * grid_n
        if bp != B:
            y = jnp.pad(y, ((0, bp - B), (0, 0), (0, 0), (0, 0)))

        kernel = functools.partial(_preencoder_kernel, oh2, ow2)
        flops = 2 * bp * p2 * NQ * self.kd_pad * self.c_out
        bytes_accessed = (y.size * 2 + self.w_comb.size * 2 + self.b_comb.size * 4
                          + bp * p2 * self.c_out * 4)

        out = pl.pallas_call(
            kernel,
            out_shape=jax.ShapeDtypeStruct((bp, p2, self.c_out), jnp.float32),
            grid=(grid_n,),
            in_specs=[
                pl.BlockSpec((bt, hb, wb, self.kd_pad), lambda g: (g, 0, 0, 0)),   # s2d input
                pl.BlockSpec((NQ, self.kd_pad, self.c_out), lambda g: (0, 0, 0)),  # weights
                pl.BlockSpec((1, self.c_out), lambda g: (0, 0)),                   # bias
            ],
            out_specs=pl.BlockSpec((bt, p2, self.c_out), lambda g: (g, 0, 0)),
            compiler_params=pltpu.CompilerParams(dimension_semantics=("parallel",)),
            cost_estimate=pl.CostEstimate(flops=flops, transcendentals=0,
                                          bytes_accessed=bytes_accessed),
        )(y, self.w_comb, self.b_comb)

        out = out[:B]
        new_feats = out[:, :, :self.c2]                              # (B, p2, 256)
        new_xyz = out[:, :, self.c2:self.c2 + self.C_XYZ]            # (B, p2, 4)
        return new_xyz, new_feats, inds


# ----------------------------- pure-JAX reference --------------------------- #
def _reference_forward(model, features):
    """Layer-by-layer f32 reference matching the PyTorch forward semantics."""
    def conv(x, w, b):
        return lax.conv_general_dilated(
            x, jnp.transpose(w, (2, 3, 1, 0)), window_strides=(SH, SW), padding="VALID",
            dimension_numbers=("NHWC", "HWIO", "NHWC")) + b
    h = conv(features, model.w1, model.b1)
    h = conv(h, model.w2, model.b2)
    B, OH, OW, C = h.shape
    feats = h.reshape(B, OH * OW, C)          # == torch reshape(B,C,-1).permute(0,2,1)
    new_xyz = feats @ model.w_lin.T + model.b_lin
    return new_xyz, feats


if __name__ == "__main__":
    key = jax.random.PRNGKey(0)
    k_feat, k_xyz, k_params = jax.random.split(key, 3)

    B, H, W, C_in = 2, 33, 33, 4
    mlp = [C_in, 32, 256]

    features = jax.random.normal(k_feat, (B, H, W, C_in), jnp.float32)
    xyz = jax.random.normal(k_xyz, (B, 16, 3), jnp.float32)     # passed through, unused here
    inds = jnp.arange(B * 4, dtype=jnp.int32).reshape(B, 4)     # passed through untouched

    model = PreEncoderPallas(mlp, k_params)
    fwd = jax.jit(model.__call__)

    new_xyz, new_feats, out_inds = fwd(xyz, features, inds)
    jax.block_until_ready((new_xyz, new_feats, out_inds))

    # sanity check against an f32 layer-by-layer reference (kernel uses bf16 MXU feeds)
    ref_xyz, ref_feats = _reference_forward(model, features)
    assert new_feats.shape == (B, 4, 256) and new_xyz.shape == (B, 4, 4)
    assert jnp.allclose(new_feats, ref_feats, rtol=2e-2, atol=2e-2), \
        float(jnp.max(jnp.abs(new_feats - ref_feats)))
    assert jnp.allclose(new_xyz, ref_xyz, rtol=2e-2, atol=2e-2), \
        float(jnp.max(jnp.abs(new_xyz - ref_xyz)))
    assert jnp.array_equal(out_inds, inds)

    print("KERNEL_OK")
</pallas_src>

<mosaic_0001>
module attributes {stable_mosaic.version = 11 : i64} {
  func.func @_preencoder_kernel(%arg0: i32, %arg1: memref<1x4x3x384xbf16, #tpu.memory_space<vmem>>, %arg2: memref<6x384x384xbf16, #tpu.memory_space<vmem>>, %arg3: memref<1x384xf32, #tpu.memory_space<vmem>>, %arg4: memref<1x4x384xf32, #tpu.memory_space<vmem>>) attributes {dimension_semantics = [#tpu.dimension_semantics<parallel>], iteration_bounds = array<i64: 2>, scalar_prefetch = 0 : i64, scratch_operands = 0 : i64, tpu.core_type = #tpu.core_type<tc>, window_params = [{transform_indices = @transform_0, window_bounds = array<i64: 1, 4, 3, 384>}, {pipeline_mode = #tpu.pipeline_mode<synchronous>, transform_indices = @transform_1, window_bounds = array<i64: 6, 384, 384>}, {pipeline_mode = #tpu.pipeline_mode<synchronous>, transform_indices = @transform_2, window_bounds = array<i64: 1, 384>}, {transform_indices = @transform_3, window_bounds = array<i64: 1, 4, 384>}]} {
    %cst = arith.constant 0.000000e+00 : f32
    %0 = vector.broadcast %cst : f32 to vector<4x384xf32>
    %c0 = arith.constant 0 : index
    %c0_0 = arith.constant 0 : index
    %c0_1 = arith.constant 0 : index
    %c0_2 = arith.constant 0 : index
    %1 = vector.load %arg1[%c0, %c0_0, %c0_1, %c0_2] : memref<1x4x3x384xbf16, #tpu.memory_space<vmem>>, vector<1x2x2x384xbf16>
    %2 = vector.shape_cast %1 : vector<1x2x2x384xbf16> to vector<4x384xbf16>
    %c0_3 = arith.constant 0 : index
    %c0_4 = arith.constant 0 : index
    %c0_5 = arith.constant 0 : index
    %3 = vector.load %arg2[%c0_3, %c0_4, %c0_5] : memref<6x384x384xbf16, #tpu.memory_space<vmem>>, vector<1x384x384xbf16>
    %4 = vector.shape_cast %3 : vector<1x384x384xbf16> to vector<384x384xbf16>
    %cst_6 = arith.constant dense<0.000000e+00> : vector<4x384xf32>
    %5 = tpu.matmul %2, %4, %cst_6 {dimension_numbers = #tpu.dot_dimension_numbers<[1], [0], [0], [1], [0, 0, 1, 1], [], []>} : vector<4x384xbf16>, vector<384x384xbf16>, vector<4x384xf32> -> vector<4x384xf32>
    %6 = arith.addf %0, %5 : vector<4x384xf32>
    %c0_7 = arith.constant 0 : index
    %c0_8 = arith.constant 0 : index
    %c1 = arith.constant 1 : index
    %c0_9 = arith.constant 0 : index
    %7 = vector.load %arg1[%c0_7, %c0_8, %c1, %c0_9] : memref<1x4x3x384xbf16, #tpu.memory_space<vmem>>, vector<1x2x2x384xbf16>
    %8 = vector.shape_cast %7 : vector<1x2x2x384xbf16> to vector<4x384xbf16>
    %c1_10 = arith.constant 1 : index
    %c0_11 = arith.constant 0 : index
    %c0_12 = arith.constant 0 : index
    %9 = vector.load %arg2[%c1_10, %c0_11, %c0_12] : memref<6x384x384xbf16, #tpu.memory_space<vmem>>, vector<1x384x384xbf16>
    %10 = vector.shape_cast %9 : vector<1x384x384xbf16> to vector<384x384xbf16>
    %cst_13 = arith.constant dense<0.000000e+00> : vector<4x384xf32>
    %11 = tpu.matmul %8, %10, %cst_13 {dimension_numbers = #tpu.dot_dimension_numbers<[1], [0], [0], [1], [0, 0, 1, 1], [], []>} : vector<4x384xbf16>, vector<384x384xbf16>, vector<4x384xf32> -> vector<4x384xf32>
    %12 = arith.addf %6, %11 : vector<4x384xf32>
    %c0_14 = arith.constant 0 : index
    %c1_15 = arith.constant 1 : index
    %c0_16 = arith.constant 0 : index
    %c0_17 = arith.constant 0 : index
    %13 = vector.load %arg1[%c0_14, %c1_15, %c0_16, %c0_17] : memref<1x4x3x384xbf16, #tpu.memory_space<vmem>>, vector<1x2x2x384xbf16>
    %14 = vector.shape_cast %13 : vector<1x2x2x384xbf16> to vector<4x384xbf16>
    %c2 = arith.constant 2 : index
    %c0_18 = arith.constant 0 : index
    %c0_19 = arith.constant 0 : index
    %15 = vector.load %arg2[%c2, %c0_18, %c0_19] : memref<6x384x384xbf16, #tpu.memory_space<vmem>>, vector<1x384x384xbf16>
    %16 = vector.shape_cast %15 : vector<1x384x384xbf16> to vector<384x384xbf16>
    %cst_20 = arith.constant dense<0.000000e+00> : vector<4x384xf32>
    %17 = tpu.matmul %14, %16, %cst_20 {dimension_numbers = #tpu.dot_dimension_numbers<[1], [0], [0], [1], [0, 0, 1, 1], [], []>} : vector<4x384xbf16>, vector<384x384xbf16>, vector<4x384xf32> -> vector<4x384xf32>
    %18 = arith.addf %12, %17 : vector<4x384xf32>
    %c0_21 = arith.constant 0 : index
    %c1_22 = arith.constant 1 : index
    %c1_23 = arith.constant 1 : index
    %c0_24 = arith.constant 0 : index
    %19 = vector.load %arg1[%c0_21, %c1_22, %c1_23, %c0_24] : memref<1x4x3x384xbf16, #tpu.memory_space<vmem>>, vector<1x2x2x384xbf16>
    %20 = vector.shape_cast %19 : vector<1x2x2x384xbf16> to vector<4x384xbf16>
    %c3 = arith.constant 3 : index
    %c0_25 = arith.constant 0 : index
    %c0_26 = arith.constant 0 : index
    %21 = vector.load %arg2[%c3, %c0_25, %c0_26] : memref<6x384x384xbf16, #tpu.memory_space<vmem>>, vector<1x384x384xbf16>
    %22 = vector.shape_cast %21 : vector<1x384x384xbf16> to vector<384x384xbf16>
    %cst_27 = arith.constant dense<0.000000e+00> : vector<4x384xf32>
    %23 = tpu.matmul %20, %22, %cst_27 {dimension_numbers = #tpu.dot_dimension_numbers<[1], [0], [0], [1], [0, 0, 1, 1], [], []>} : vector<4x384xbf16>, vector<384x384xbf16>, vector<4x384xf32> -> vector<4x384xf32>
    %24 = arith.addf %18, %23 : vector<4x384xf32>
    %c0_28 = arith.constant 0 : index
    %c2_29 = arith.constant 2 : index
    %c0_30 = arith.constant 0 : index
    %c0_31 = arith.constant 0 : index
    %25 = vector.load %arg1[%c0_28, %c2_29, %c0_30, %c0_31] : memref<1x4x3x384xbf16, #tpu.memory_space<vmem>>, vector<1x2x2x384xbf16>
    %26 = vector.shape_cast %25 : vector<1x2x2x384xbf16> to vector<4x384xbf16>
    %c4 = arith.constant 4 : index
    %c0_32 = arith.constant 0 : index
    %c0_33 = arith.constant 0 : index
    %27 = vector.load %arg2[%c4, %c0_32, %c0_33] : memref<6x384x384xbf16, #tpu.memory_space<vmem>>, vector<1x384x384xbf16>
    %28 = vector.shape_cast %27 : vector<1x384x384xbf16> to vector<384x384xbf16>
    %cst_34 = arith.constant dense<0.000000e+00> : vector<4x384xf32>
    %29 = tpu.matmul %26, %28, %cst_34 {dimension_numbers = #tpu.dot_dimension_numbers<[1], [0], [0], [1], [0, 0, 1, 1], [], []>} : vector<4x384xbf16>, vector<384x384xbf16>, vector<4x384xf32> -> vector<4x384xf32>
    %30 = arith.addf %24, %29 : vector<4x384xf32>
    %c0_35 = arith.constant 0 : index
    %c2_36 = arith.constant 2 : index
    %c1_37 = arith.constant 1 : index
    %c0_38 = arith.constant 0 : index
    %31 = vector.load %arg1[%c0_35, %c2_36, %c1_37, %c0_38] : memref<1x4x3x384xbf16, #tpu.memory_space<vmem>>, vector<1x2x2x384xbf16>
    %32 = vector.shape_cast %31 : vector<1x2x2x384xbf16> to vector<4x384xbf16>
    %c5 = arith.constant 5 : index
    %c0_39 = arith.constant 0 : index
    %c0_40 = arith.constant 0 : index
    %33 = vector.load %arg2[%c5, %c0_39, %c0_40] : memref<6x384x384xbf16, #tpu.memory_space<vmem>>, vector<1x384x384xbf16>
    %34 = vector.shape_cast %33 : vector<1x384x384xbf16> to vector<384x384xbf16>
    %cst_41 = arith.constant dense<0.000000e+00> : vector<4x384xf32>
    %35 = tpu.matmul %32, %34, %cst_41 {dimension_numbers = #tpu.dot_dimension_numbers<[1], [0], [0], [1], [0, 0, 1, 1], [], []>} : vector<4x384xbf16>, vector<384x384xbf16>, vector<4x384xf32> -> vector<4x384xf32>
    %36 = arith.addf %30, %35 : vector<4x384xf32>
    %c0_42 = arith.constant 0 : index
    %c0_43 = arith.constant 0 : index
    %37 = vector.load %arg3[%c0_42, %c0_43] : memref<1x384xf32, #tpu.memory_space<vmem>>, vector<1x384xf32>
    %38 = vector.broadcast %37 : vector<1x384xf32> to vector<4x384xf32>
    %39 = arith.addf %36, %38 : vector<4x384xf32>
    %40 = vector.shape_cast %39 : vector<4x384xf32> to vector<1x4x384xf32>
    %c0_44 = arith.constant 0 : index
    %c0_45 = arith.constant 0 : index
    %c0_46 = arith.constant 0 : index
    %41 = vector.load %arg4[%c0_44, %c0_45, %c0_46] : memref<1x4x384xf32, #tpu.memory_space<vmem>>, vector<1x4x384xf32>
    tpu.vector_store %arg4[%c0_44, %c0_45, %c0_46], %40 {strides = array<i32>} : memref<1x4x384xf32, #tpu.memory_space<vmem>>, vector<1x4x384xf32>,
    return
  }
  func.func @transform_0(%arg0: i32) -> (i32, i32, i32, i32) {
    %c0_i32 = arith.constant 0 : i32
    %c0_i32_0 = arith.constant 0 : i32
    %c0_i32_1 = arith.constant 0 : i32
    %c0_i32_2 = arith.constant 0 : i32
    return %arg0, %c0_i32, %c0_i32_0, %c0_i32_1 : i32, i32, i32, i32
  }
  func.func @transform_1(%arg0: i32) -> (i32, i32, i32) {
    %c0_i32 = arith.constant 0 : i32
    %c0_i32_0 = arith.constant 0 : i32
    %c0_i32_1 = arith.constant 0 : i32
    %c0_i32_2 = arith.constant 0 : i32
    return %c0_i32, %c0_i32_0, %c0_i32_1 : i32, i32, i32
  }
  func.func @transform_2(%arg0: i32) -> (i32, i32) {
    %c0_i32 = arith.constant 0 : i32
    %c0_i32_0 = arith.constant 0 : i32
    %c0_i32_1 = arith.constant 0 : i32
    return %c0_i32, %c0_i32_0 : i32, i32
  }
  func.func @transform_3(%arg0: i32) -> (i32, i32, i32) {
    %c0_i32 = arith.constant 0 : i32
    %c0_i32_0 = arith.constant 0 : i32
    %c0_i32_1 = arith.constant 0 : i32
    return %arg0, %c0_i32, %c0_i32_0 : i32, i32, i32
  }
}

</mosaic_0001>

<llo_original>
// kernel: a_call__.1
$region0: #{a_call__.1}
  #allocation0 [shape = 'u32[]', space=smem, size = 0x4, offset = 0x4, fixed_abs, tag = 'smem constant byte address 0x4 - core index']
  #allocation1 [shape = 'u32[144,128]{1,0:T(1,128)}', space=vmem, size = 0x12000, scoped, tag = 'internal scratch']
  %s0 = inlined_call_operand.vmem [shape: bf16[2,4,3,384], index: 0, kind: input, shape index: {}]
  %s1 = inlined_call_operand.vmem [shape: bf16[6,384,384], index: 1, kind: input, shape index: {}]
  %s2 = inlined_call_operand.vmem [shape: f32[1,384], index: 2, kind: input, shape index: {}]
  %s3 = inlined_call_operand.vmem [shape: f32[2,4,384], index: 3, kind: output, shape index: {}]
  %s4 = sld [smem:[#allocation0]]
  $region45: #{a_call__.1} parent=0
    _
  %s6 = ssub.s32 1, %s4
  %s7 = scalar_select 0, %s6, %s4
  loop: start=0, step=1, limit=4
  $region2: #{a_call__.1} parent=0 // loop_pre_header
    _
  $region3: #{a_call__.1} parent=0 // loop_header
    %s9 = sphi 0, %s13
    %p10 = scmp.ge.s32.totalorder %s9, 4
    %s19 = sphi 0, %s21
    %s22 = sphi 0, %s19
    %s23 = sphi 0, %s22
    %s39 = sphi 0, %s23
    %s43 = sphi 0, %s43
    %s45 = sphi 0, %s43
    %s46 = sphi 0, %s45
    %s60 = sphi 0, %s46
    %s64 = sphi 0, %s64
    %s66 = sphi 0, %s64
    %s67 = sphi 0, %s66
    %s81 = sphi 0, %s67
    %s87 = sphi 0, %s89
    %s90 = sphi 0, %s87
    %s91 = sphi 0, %s90
    %s107 = sphi 0, %s91
  $region4: #{a_call__.1} parent=0 // loop_header_branch
    %12 = sbr.rel (%p10) target = $region8
  $region5: #{a_call__.1} parent=0 // loop_body
    %s14 = ssub.s32 %s9, 1
    %s15 = ssub.s32 %s9, 2
    %s16 = sadd.s32 %s9, 1
    %s17 = ssub.s32 %s9, %s16
    %p18 = scmp.eq.s32.totalorder %s17, 0
    %s20 = sadd.s32 %s19, 1
    %s21 = scalar_select %p18, %s19, %s20
    %p24 = pneg %p18
    %p25 = scmp.eq.s32.totalorder %s9, 1
    %p26 = por %p24, %p25
    %p27 = scmp.ne.s32.totalorder %s19, %s22
    %p28 = scmp.eq.s32.totalorder %s9, 0
    %p29 = por %p27, %p28
    %p30 = scmp.ne.s32.totalorder %s19, %s22
    %p31 = scmp.eq.s32.totalorder %s14, 1
    %p32 = por %p30, %p31
    %p33 = scmp.ne.s32.totalorder %s22, %s23
    %p34 = scmp.eq.s32.totalorder %s14, 0
    %p35 = por %p33, %p34
    %p36 = scmp.ne.s32.totalorder %s22, %s23
    %p37 = scmp.eq.s32.totalorder %s15, 1
    %p38 = por %p36, %p37
    %p40 = scmp.ne.s32.totalorder %s23, %s39
    %p41 = scmp.eq.s32.totalorder %s15, 0
    %p42 = por %p40, %p41
    %s44 = sadd.s32 %s43, 1
    %p47 = scmp.eq.s32.totalorder %s9, 1
    %p48 = scmp.ne.s32.totalorder %s43, %s45
    %p49 = scmp.eq.s32.totalorder %s9, 0
    %p50 = por %p48, %p49
    %p51 = scmp.ne.s32.totalorder %s43, %s45
    %p52 = scmp.eq.s32.totalorder %s14, 1
    %p53 = por %p51, %p52
    %p54 = scmp.ne.s32.totalorder %s45, %s46
    %p55 = scmp.eq.s32.totalorder %s14, 0
    %p56 = por %p54, %p55
    %p57 = scmp.ne.s32.totalorder %s45, %s46
    %p58 = scmp.eq.s32.totalorder %s15, 1
    %p59 = por %p57, %p58
    %p61 = scmp.ne.s32.totalorder %s46, %s60
    %p62 = scmp.eq.s32.totalorder %s15, 0
    %p63 = por %p61, %p62
    %s65 = sadd.s32 %s64, 1
    %p68 = scmp.eq.s32.totalorder %s9, 1
    %p69 = scmp.ne.s32.totalorder %s64, %s66
    %p70 = scmp.eq.s32.totalorder %s9, 0
    %p71 = por %p69, %p70
    %p72 = scmp.ne.s32.totalorder %s64, %s66
    %p73 = scmp.eq.s32.totalorder %s14, 1
    %p74 = por %p72, %p73
    %p75 = scmp.ne.s32.totalorder %s66, %s67
    %p76 = scmp.eq.s32.totalorder %s14, 0
    %p77 = por %p75, %p76
    %p78 = scmp.ne.s32.totalorder %s66, %s67
    %p79 = scmp.eq.s32.totalorder %s15, 1
    %p80 = por %p78, %p79
    %p82 = scmp.ne.s32.totalorder %s67, %s81
    %p83 = scmp.eq.s32.totalorder %s15, 0
    %p84 = por %p82, %p83
    %s85 = ssub.s32 %s9, %s16
    %p86 = scmp.eq.s32.totalorder %s85, 0
    %s88 = sadd.s32 %s87, 1
    %s89 = scalar_select %p86, %s87, %s88
    %p92 = pneg %p86
    %p93 = scmp.eq.s32.totalorder %s9, 1
    %p94 = por %p92, %p93
    %p95 = scmp.ne.s32.totalorder %s87, %s90
    %p96 = scmp.eq.s32.totalorder %s9, 0
    %p97 = por %p95, %p96
    %p98 = scmp.ne.s32.totalorder %s87, %s90
    %p99 = scmp.eq.s32.totalorder %s14, 1
    %p100 = por %p98, %p99
    %p101 = scmp.ne.s32.totalorder %s90, %s91
    %p102 = scmp.eq.s32.totalorder %s14, 0
    %p103 = por %p101, %p102
    %p104 = scmp.ne.s32.totalorder %s90, %s91
    %p105 = scmp.eq.s32.totalorder %s15, 1
    %p106 = por %p104, %p105
    %p108 = scmp.ne.s32.totalorder %s91, %s107
    %p109 = scmp.eq.s32.totalorder %s15, 0
    %p110 = por %p108, %p109
    %p111 = scmp.le.s32.totalorder 1, %s9
    %p112 = scmp.lt.s32.totalorder %s9, 3
    %p113 = pnand %p111, %p112
    %p114 = pneg %p113
    // Predicated region
    $region9: #{a_call__.1} parent=5 // pred_check
      _
    $region10: #{a_call__.1} parent=5 // pred_check_branch
      %116 = sbr.rel (%p113) target = $region12
    $region11: #{a_call__.1} parent=5 // pred_region
      %s117 = ssub.s32 %s9, 1
      // Predicated region
      $region13: #{a_call__.1} parent=11 // pred_check
        %p118 = pneg %p56
      $region14: #{a_call__.1} parent=11 // pred_check_branch
        %120 = sbr.rel (%p118) target = $region16
      $region15: #{a_call__.1} parent=11 // pred_region
        _
      $region16: #{a_call__.1} parent=11 // pred_fallthru
        _
      // Predicated region
      $region17: #{a_call__.1} parent=11 // pred_check
        %p121 = pneg %p77
      $region18: #{a_call__.1} parent=11 // pred_check_branch
        %123 = sbr.rel (%p121) target = $region20
      $region19: #{a_call__.1} parent=11 // pred_region
        _
      $region20: #{a_call__.1} parent=11 // pred_fallthru
        _
    $region12: #{a_call__.1} parent=5 // pred_fallthru
      _
    %p124 = scmp.lt.s32.totalorder %s9, 2
    // Predicated region
    $region21: #{a_call__.1} parent=5 // pred_check
      %p125 = pneg %p124
    $region22: #{a_call__.1} parent=5 // pred_check_branch
      %127 = sbr.rel (%p125) target = $region24
    $region23: #{a_call__.1} parent=5 // pred_region
      // Predicated region
      $region25: #{a_call__.1} parent=23 // pred_check
        %p128 = pneg %p29
      $region26: #{a_call__.1} parent=23 // pred_check_branch
        %130 = sbr.rel (%p128) target = $region28
      $region27: #{a_call__.1} parent=23 // pred_region
        %p131 = scmp.lt.s32.totalorder %s9, 1
        %s132 = scalar_select %p131, %s9, 1
        %s133 = smul.addr %s132, 12
        %s134 = smul.addr %s133, 2
        %s135 = scalar_lea.vmem %s0, %s134
      $region28: #{a_call__.1} parent=23 // pred_fallthru
        _
    $region24: #{a_call__.1} parent=5 // pred_fallthru
      _
    %p136 = scmp.le.s32.totalorder 1, %s9
    %p137 = scmp.lt.s32.totalorder %s9, 3
    %p138 = pnand %p136, %p137
    %p139 = pneg %p138
    // Predicated region
    $region29: #{a_call__.1} parent=5 // pred_check
      _
    $region30: #{a_call__.1} parent=5 // pred_check_branch
      %141 = sbr.rel (%p138) target = $region32
    $region31: #{a_call__.1} parent=5 // pred_region
      %s142 = ssub.s32 %s9, 1
      %p143 = scmp.lt.s32.totalorder %s14, 1
      %s144 = scalar_select %p143, %s14, 1
      %s145 = smul.addr %s144, 12
      %s146 = smul.addr %s145, 2
      %s147 = scalar_lea.vmem %s0, %s146
      %p148 = pneg %p35
      %p149 = pneg %p32
      %p150 = pneg %p56
      %p151 = pneg %p53
      %p152 = pneg %p77
      %p153 = pneg %p74
      %p154 = pneg %p103
      %p155 = pneg %p100
      %p156 = scmp.lt.s32.totalorder %s14, 1
      %s157 = scalar_select %p156, %s14, 1
      %s158 = smul.addr %s157, 3
      %s159 = smul.addr %s158, 4
      %s160 = scalar_lea.vmem %s3, %s159
      %p161 = scmp.lt.s32.totalorder %s14, 1
      %s162 = scalar_select %p161, %s14, 1
      %s163 = smul.addr %s162, 12
      %s164 = smul.addr %s163, 2
      %s165 = scalar_lea.vmem %s0, %s164
      %p166 = scmp.lt.s32.totalorder %s14, 1
      %s167 = scalar_select %p166, %s14, 1
      %s168 = smul.addr %s167, 3
      %s169 = smul.addr %s168, 4
      %s170 = scalar_lea.vmem %s3, %s169
      %v172 = vld [vmem:[%s165] sm:$0x15]
      %v173 = vld [vmem:[%s165 + $0x6] sm:$0x15]
      %v177 = vunpack.c.l.s4 1966171168
      %v178 = vunpack.c.0.s8 %v177
      %v179 = vlaneseq
      %v180 = vshrl.u32 %v179, 7
      %v181 = vsub.s32 %v178, %v180
      %v182 = vrot.slane %v172, %v181
      %v184 = vunpack.c.l.s4 1966171168
      %v185 = vunpack.c.0.s8 %v184
      %v186 = vlaneseq
      %v187 = vshrl.u32 %v186, 7
      %v188 = vsub.s32 %v185, %v187
      %v189 = vrot.slane %v173, %v188
      %v190 = vld [vmem:[%s1] sm:$0xff]
      %v191 = vld [vmem:[%s1 + $0x8] sm:$0xf]
      %v192 = vld [vmem:[%s1 + $0xc] sm:$0xff]
      %v193 = vld [vmem:[%s1 + $0x14] sm:$0xf]
      %v194 = vld [vmem:[%s1 + $0x18] sm:$0xff]
      %v195 = vld [vmem:[%s1 + $0x20] sm:$0xf]
      %v196 = vld [vmem:[%s1 + $0x24] sm:$0xff]
      %v197 = vld [vmem:[%s1 + $0x2c] sm:$0xf]
      %v198 = vld [vmem:[%s1 + $0x30] sm:$0xff]
      %v199 = vld [vmem:[%s1 + $0x38] sm:$0xf]
      %v200 = vld [vmem:[%s1 + $0x3c] sm:$0xff]
      %v201 = vld [vmem:[%s1 + $0x44] sm:$0xf]
      %v202 = vld [vmem:[%s1 + $0x48] sm:$0xff]
      %v203 = vld [vmem:[%s1 + $0x50] sm:$0xf]
      %v204 = vld [vmem:[%s1 + $0x54] sm:$0xff]
      %v205 = vld [vmem:[%s1 + $0x5c] sm:$0xf]
      %v206 = vld [vmem:[%s1 + $0x60] sm:$0xff]
      %v207 = vld [vmem:[%s1 + $0x68] sm:$0xf]
      %v208 = vld [vmem:[%s1 + $0x6c] sm:$0xff]
      %v209 = vld [vmem:[%s1 + $0x74] sm:$0xf]
      %v210 = vld [vmem:[%s1 + $0x78] sm:$0xff]
      %v211 = vld [vmem:[%s1 + $0x80] sm:$0xf]
      %v212 = vld [vmem:[%s1 + $0x84] sm:$0xff]
      %v213 = vld [vmem:[%s1 + $0x8c] sm:$0xf]
      %v214 = vld [vmem:[%s1 + $0x90] sm:$0xff]
      %v215 = vld [vmem:[%s1 + $0x98] sm:$0xf]
      %v216 = vld [vmem:[%s1 + $0x9c] sm:$0xff]
      %v217 = vld [vmem:[%s1 + $0xa4] sm:$0xf]
      %v218 = vld [vmem:[%s1 + $0xa8] sm:$0xff]
      %v219 = vld [vmem:[%s1 + $0xb0] sm:$0xf]
      %v220 = vld [vmem:[%s1 + $0xb4] sm:$0xff]
      %v221 = vld [vmem:[%s1 + $0xbc] sm:$0xf]
      %v222 = vld [vmem:[%s1 + $0xc0] sm:$0xff]
      %v223 = vld [vmem:[%s1 + $0xc8] sm:$0xf]
      %v224 = vld [vmem:[%s1 + $0xcc] sm:$0xff]
      %v225 = vld [vmem:[%s1 + $0xd4] sm:$0xf]
      %v226 = vld [vmem:[%s1 + $0xd8] sm:$0xff]
      %v227 = vld [vmem:[%s1 + $0xe0] sm:$0xf]
      %v228 = vld [vmem:[%s1 + $0xe4] sm:$0xff]
      %v229 = vld [vmem:[%s1 + $0xec] sm:$0xf]
      %v230 = vld [vmem:[%s1 + $0xf0] sm:$0xff]
      %v231 = vld [vmem:[%s1 + $0xf8] sm:$0xf]
      %v232 = vld [vmem:[%s1 + $0xfc] sm:$0xff]
      %v233 = vld [vmem:[%s1 + $0x104] sm:$0xf]
      %v234 = vld [vmem:[%s1 + $0x108] sm:$0xff]
      %v235 = vld [vmem:[%s1 + $0x110] sm:$0xf]
      %v236 = vld [vmem:[%s1 + $0x114] sm:$0xff]
      %v237 = vld [vmem:[%s1 + $0x11c] sm:$0xf]
      %v238 = vld [vmem:[%s1 + $0x120] sm:$0xff]
      %v239 = vld [vmem:[%s1 + $0x128] sm:$0xf]
      %v240 = vld [vmem:[%s1 + $0x12c] sm:$0xff]
      %v241 = vld [vmem:[%s1 + $0x134] sm:$0xf]
      %v242 = vld [vmem:[%s1 + $0x138] sm:$0xff]
      %v243 = vld [vmem:[%s1 + $0x140] sm:$0xf]
      %v244 = vld [vmem:[%s1 + $0x144] sm:$0xff]
      %v245 = vld [vmem:[%s1 + $0x14c] sm:$0xf]
      %v246 = vld [vmem:[%s1 + $0x150] sm:$0xff]
      %v247 = vld [vmem:[%s1 + $0x158] sm:$0xf]
      %v248 = vld [vmem:[%s1 + $0x15c] sm:$0xff]
      %v249 = vld [vmem:[%s1 + $0x164] sm:$0xf]
      %v250 = vld [vmem:[%s1 + $0x168] sm:$0xff]
      %v251 = vld [vmem:[%s1 + $0x170] sm:$0xf]
      %v252 = vld [vmem:[%s1 + $0x174] sm:$0xff]
      %v253 = vld [vmem:[%s1 + $0x17c] sm:$0xf]
      %v254 = vld [vmem:[%s1 + $0x180] sm:$0xff]
      %v255 = vld [vmem:[%s1 + $0x188] sm:$0xf]
      %v256 = vld [vmem:[%s1 + $0x18c] sm:$0xff]
      %v257 = vld [vmem:[%s1 + $0x194] sm:$0xf]
      %v258 = vld [vmem:[%s1 + $0x198] sm:$0xff]
      %v259 = vld [vmem:[%s1 + $0x1a0] sm:$0xf]
      %v260 = vld [vmem:[%s1 + $0x1a4] sm:$0xff]
      %v261 = vld [vmem:[%s1 + $0x1ac] sm:$0xf]
      %v262 = vld [vmem:[%s1 + $0x1b0] sm:$0xff]
      %v263 = vld [vmem:[%s1 + $0x1b8] sm:$0xf]
      %v264 = vld [vmem:[%s1 + $0x1bc] sm:$0xff]
      %v265 = vld [vmem:[%s1 + $0x1c4] sm:$0xf]
      %v266 = vld [vmem:[%s1 + $0x1c8] sm:$0xff]
      %v267 = vld [vmem:[%s1 + $0x1d0] sm:$0xf]
      %v268 = vld [vmem:[%s1 + $0x1d4] sm:$0xff]
      %v269 = vld [vmem:[%s1 + $0x1dc] sm:$0xf]
      %v270 = vld [vmem:[%s1 + $0x1e0] sm:$0xff]
      %v271 = vld [vmem:[%s1 + $0x1e8] sm:$0xf]
      %v272 = vld [vmem:[%s1 + $0x1ec] sm:$0xff]
      %v273 = vld [vmem:[%s1 + $0x1f4] sm:$0xf]
      %v274 = vld [vmem:[%s1 + $0x1f8] sm:$0xff]
      %v275 = vld [vmem:[%s1 + $0x200] sm:$0xf]
      %v276 = vld [vmem:[%s1 + $0x204] sm:$0xff]
      %v277 = vld [vmem:[%s1 + $0x20c] sm:$0xf]
      %v278 = vld [vmem:[%s1 + $0x210] sm:$0xff]
      %v279 = vld [vmem:[%s1 + $0x218] sm:$0xf]
      %v280 = vld [vmem:[%s1 + $0x21c] sm:$0xff]
      %v281 = vld [vmem:[%s1 + $0x224] sm:$0xf]
      %v282 = vld [vmem:[%s1 + $0x228] sm:$0xff]
      %v283 = vld [vmem:[%s1 + $0x230] sm:$0xf]
      %v284 = vld [vmem:[%s1 + $0x234] sm:$0xff]
      %v285 = vld [vmem:[%s1 + $0x23c] sm:$0xf]
      %v286 = vld [vmem:[%s165] sm:$0x3f]
      %v287 = vld [vmem:[%s165 + $0x6] sm:$0x3f]
      %v291 = vunpack.c.l.s4 1966171168
      %v292 = vunpack.c.0.s8 %v291
      %v293 = vlaneseq
      %v294 = vshrl.u32 %v293, 7
      %v295 = vsub.s32 %v292, %v294
      %v296 = vrot.slane %v286, %v295
      %v297 = vcombine.high %v296, %v296
      %v299 = vunpack.c.l.s4 1966171168
      %v300 = vunpack.c.0.s8 %v299
      %v301 = vlaneseq
      %v302 = vshrl.u32 %v301, 7
      %v303 = vsub.s32 %v300, %v302
      %v304 = vrot.slane %v287, %v303
      %v305 = vcombine.high %v304, %v304
      %vm306 = vsmask.f32 256
      %vm307 = vsmask.f32 1284
      %vm308 = vmor %vm306, %vm307
      %vm309 = vsmask.f32 2312
      %vm310 = vmor %vm308, %vm309
      %vm311 = vsmask.f32 3340
      %vm312 = vmor %vm310, %vm311
      %vm313 = vsmask.f32 4368
      %vm314 = vmor %vm312, %vm313
      %vm315 = vsmask.f32 5396
      %vm316 = vmor %vm314, %vm315
      %vm317 = vsmask.f32 6424
      %vm318 = vmor %vm316, %vm317
      %vm319 = vsmask.f32 7452
      %vm320 = vmor %vm318, %vm319
      %v322 = vshrl.u32 %v296, 16
      %v324 = vrot.slane %v322, 7
      %v325 = vrot.slane %v324, 1
      %v327 = vshll.u32 %v297, 16
      %v329 = vsel %vm320, %v325, %v327
      %v331 = vshrl.u32 %v304, 16
      %v333 = vrot.slane %v331, 7
      %v334 = vrot.slane %v333, 1
      %v336 = vshll.u32 %v305, 16
      %v338 = vsel %vm320, %v334, %v336
      %s339 = scalar_lea.vmem %s1, 576
      %v340 = vld [vmem:[%s339] sm:$0xff]
      %v341 = vld [vmem:[%s339 + $0x8] sm:$0xf]
      %v342 = vld [vmem:[%s339 + $0xc] sm:$0xff]
      %v343 = vld [vmem:[%s339 + $0x14] sm:$0xf]
      %v344 = vld [vmem:[%s339 + $0x18] sm:$0xff]
      %v345 = vld [vmem:[%s339 + $0x20] sm:$0xf]
      %v346 = vld [vmem:[%s339 + $0x24] sm:$0xff]
      %v347 = vld [vmem:[%s339 + $0x2c] sm:$0xf]
      %v348 = vld [vmem:[%s339 + $0x30] sm:$0xff]
      %v349 = vld [vmem:[%s339 + $0x38] sm:$0xf]
      %v350 = vld [vmem:[%s339 + $0x3c] sm:$0xff]
      %v351 = vld [vmem:[%s339 + $0x44] sm:$0xf]
      %v352 = vld [vmem:[%s339 + $0x48] sm:$0xff]
      %v353 = vld [vmem:[%s339 + $0x50] sm:$0xf]
      %v354 = vld [vmem:[%s339 + $0x54] sm:$0xff]
      %v355 = vld [vmem:[%s339 + $0x5c] sm:$0xf]
      %v356 = vld [vmem:[%s339 + $0x60] sm:$0xff]
      %v357 = vld [vmem:[%s339 + $0x68] sm:$0xf]
      %v358 = vld [vmem:[%s339 + $0x6c] sm:$0xff]
      %v359 = vld [vmem:[%s339 + $0x74] sm:$0xf]
      %v360 = vld [vmem:[%s339 + $0x78] sm:$0xff]
      %v361 = vld [vmem:[%s339 + $0x80] sm:$0xf]
      %v362 = vld [vmem:[%s339 + $0x84] sm:$0xff]
      %v363 = vld [vmem:[%s339 + $0x8c] sm:$0xf]
      %v364 = vld [vmem:[%s339 + $0x90] sm:$0xff]
      %v365 = vld [vmem:[%s339 + $0x98] sm:$0xf]
      %v366 = vld [vmem:[%s339 + $0x9c] sm:$0xff]
      %v367 = vld [vmem:[%s339 + $0xa4] sm:$0xf]
      %v368 = vld [vmem:[%s339 + $0xa8] sm:$0xff]
      %v369 = vld [vmem:[%s339 + $0xb0] sm:$0xf]
      %v370 = vld [vmem:[%s339 + $0xb4] sm:$0xff]
      %v371 = vld [vmem:[%s339 + $0xbc] sm:$0xf]
      %v372 = vld [vmem:[%s339 + $0xc0] sm:$0xff]
      %v373 = vld [vmem:[%s339 + $0xc8] sm:$0xf]
      %v374 = vld [vmem:[%s339 + $0xcc] sm:$0xff]
      %v375 = vld [vmem:[%s339 + $0xd4] sm:$0xf]
      %v376 = vld [vmem:[%s339 + $0xd8] sm:$0xff]
      %v377 = vld [vmem:[%s339 + $0xe0] sm:$0xf]
      %v378 = vld [vmem:[%s339 + $0xe4] sm:$0xff]
      %v379 = vld [vmem:[%s339 + $0xec] sm:$0xf]
      %v380 = vld [vmem:[%s339 + $0xf0] sm:$0xff]
      %v381 = vld [vmem:[%s339 + $0xf8] sm:$0xf]
      %v382 = vld [vmem:[%s339 + $0xfc] sm:$0xff]
      %v383 = vld [vmem:[%s339 + $0x104] sm:$0xf]
      %v384 = vld [vmem:[%s339 + $0x108] sm:$0xff]
      %v385 = vld [vmem:[%s339 + $0x110] sm:$0xf]
      %v386 = vld [vmem:[%s339 + $0x114] sm:$0xff]
      %v387 = vld [vmem:[%s339 + $0x11c] sm:$0xf]
      %v388 = vld [vmem:[%s339 + $0x120] sm:$0xff]
      %v389 = vld [vmem:[%s339 + $0x128] sm:$0xf]
      %v390 = vld [vmem:[%s339 + $0x12c] sm:$0xff]
      %v391 = vld [vmem:[%s339 + $0x134] sm:$0xf]
      %v392 = vld [vmem:[%s339 + $0x138] sm:$0xff]
      %v393 = vld [vmem:[%s339 + $0x140] sm:$0xf]
      %v394 = vld [vmem:[%s339 + $0x144] sm:$0xff]
      %v395 = vld [vmem:[%s339 + $0x14c] sm:$0xf]
      %v396 = vld [vmem:[%s339 + $0x150] sm:$0xff]
      %v397 = vld [vmem:[%s339 + $0x158] sm:$0xf]
      %v398 = vld [vmem:[%s339 + $0x15c] sm:$0xff]
      %v399 = vld [vmem:[%s339 + $0x164] sm:$0xf]
      %v400 = vld [vmem:[%s339 + $0x168] sm:$0xff]
      %v401 = vld [vmem:[%s339 + $0x170] sm:$0xf]
      %v402 = vld [vmem:[%s339 + $0x174] sm:$0xff]
      %v403 = vld [vmem:[%s339 + $0x17c] sm:$0xf]
      %v404 = vld [vmem:[%s339 + $0x180] sm:$0xff]
      %v405 = vld [vmem:[%s339 + $0x188] sm:$0xf]
      %v406 = vld [vmem:[%s339 + $0x18c] sm:$0xff]
      %v407 = vld [vmem:[%s339 + $0x194] sm:$0xf]
      %v408 = vld [vmem:[%s339 + $0x198] sm:$0xff]
      %v409 = vld [vmem:[%s339 + $0x1a0] sm:$0xf]
      %v410 = vld [vmem:[%s339 + $0x1a4] sm:$0xff]
      %v411 = vld [vmem:[%s339 + $0x1ac] sm:$0xf]
      %v412 = vld [vmem:[%s339 + $0x1b0] sm:$0xff]
      %v413 = vld [vmem:[%s339 + $0x1b8] sm:$0xf]
      %v414 = vld [vmem:[%s339 + $0x1bc] sm:$0xff]
      %v415 = vld [vmem:[%s339 + $0x1c4] sm:$0xf]
      %v416 = vld [vmem:[%s339 + $0x1c8] sm:$0xff]
      %v417 = vld [vmem:[%s339 + $0x1d0] sm:$0xf]
      %v418 = vld [vmem:[%s339 + $0x1d4] sm:$0xff]
      %v419 = vld [vmem:[%s339 + $0x1dc] sm:$0xf]
      %v420 = vld [vmem:[%s339 + $0x1e0] sm:$0xff]
      %v421 = vld [vmem:[%s339 + $0x1e8] sm:$0xf]
      %v422 = vld [vmem:[%s339 + $0x1ec] sm:$0xff]
      %v423 = vld [vmem:[%s339 + $0x1f4] sm:$0xf]
      %v424 = vld [vmem:[%s339 + $0x1f8] sm:$0xff]
      %v425 = vld [vmem:[%s339 + $0x200] sm:$0xf]
      %v426 = vld [vmem:[%s339 + $0x204] sm:$0xff]
      %v427 = vld [vmem:[%s339 + $0x20c] sm:$0xf]
      %v428 = vld [vmem:[%s339 + $0x210] sm:$0xff]
      %v429 = vld [vmem:[%s339 + $0x218] sm:$0xf]
      %v430 = vld [vmem:[%s339 + $0x21c] sm:$0xff]
      %v431 = vld [vmem:[%s339 + $0x224] sm:$0xf]
      %v432 = vld [vmem:[%s339 + $0x228] sm:$0xff]
      %v433 = vld [vmem:[%s339 + $0x230] sm:$0xf]
      %v434 = vld [vmem:[%s339 + $0x234] sm:$0xff]
      %v435 = vld [vmem:[%s339 + $0x23c] sm:$0xf]
      %v436 = vcombine.low %v329, %v338
      %v438 = vunpack.c.l.s4 1966171168
      %v439 = vunpack.c.0.s8 %v438
      %v440 = vlaneseq
      %v441 = vshrl.u32 %v440, 7
      %v442 = vsub.s32 %v439, %v441
      %v443 = vrot.slane %v436, %v442
      %v444 = vcombine.high %v443, %v443
      %v446 = vunpack.c.l.s4 1966171168
      %v447 = vunpack.c.0.s8 %v446
      %v448 = vlaneseq
      %v449 = vshrl.u32 %v448, 7
      %v450 = vsub.s32 %v447, %v449
      %v451 = vrot.slane %v443, %v450
      %v453 = vunpack.c.l.s4 1966171168
      %v454 = vunpack.c.0.s8 %v453
      %v455 = vlaneseq
      %v456 = vshrl.u32 %v455, 7
      %v457 = vsub.s32 %v454, %v456
      %v458 = vrot.slane %v444, %v457
      %v459 = vcombine.high %v451, %v451
      %v559 = vunpack.c.l.b16 %v340
      %v560 = vunpack.c.h.b16 %v340
      %v561 = vunpack.c.l.b16 %v341
      %v562 = vunpack.c.l.b16 %v342
      %v563 = vunpack.c.h.b16 %v342
      %v564 = vunpack.c.l.b16 %v343
      %v565 = vunpack.c.l.b16 %v344
      %v566 = vunpack.c.h.b16 %v344
      %v567 = vunpack.c.l.b16 %v345
      %v568 = vunpack.c.l.b16 %v346
      %v569 = vunpack.c.h.b16 %v346
      %v570 = vunpack.c.l.b16 %v347
      %v571 = vunpack.c.l.b16 %v348
      %v572 = vunpack.c.h.b16 %v348
      %v573 = vunpack.c.l.b16 %v349
      %v574 = vunpack.c.l.b16 %v350
      %v575 = vunpack.c.h.b16 %v350
      %v576 = vunpack.c.l.b16 %v351
      %v577 = vunpack.c.l.b16 %v352
      %v578 = vunpack.c.h.b16 %v352
      %v579 = vunpack.c.l.b16 %v353
      %v580 = vunpack.c.l.b16 %v354
      %v581 = vunpack.c.h.b16 %v354
      %v582 = vunpack.c.l.b16 %v355
      %v583 = vunpack.c.l.b16 %v356
      %v584 = vunpack.c.h.b16 %v356
      %v585 = vunpack.c.l.b16 %v357
      %v586 = vunpack.c.l.b16 %v358
      %v587 = vunpack.c.h.b16 %v358
      %v588 = vunpack.c.l.b16 %v359
      %v589 = vunpack.c.l.b16 %v360
      %v590 = vunpack.c.h.b16 %v360
      %v591 = vunpack.c.l.b16 %v361
      %v592 = vunpack.c.l.b16 %v362
      %v593 = vunpack.c.h.b16 %v362
      %v594 = vunpack.c.l.b16 %v363
      %v595 = vunpack.c.l.b16 %v364
      %v596 = vunpack.c.h.b16 %v364
      %v597 = vunpack.c.l.b16 %v365
      %v598 = vunpack.c.l.b16 %v366
      %v599 = vunpack.c.h.b16 %v366
      %v600 = vunpack.c.l.b16 %v367
      %v601 = vunpack.c.l.b16 %v368
      %v602 = vunpack.c.h.b16 %v368
      %v603 = vunpack.c.l.b16 %v369
      %v604 = vunpack.c.l.b16 %v370
      %v605 = vunpack.c.h.b16 %v370
      %v606 = vunpack.c.l.b16 %v371
      %v607 = vunpack.c.l.b16 %v372
      %v608 = vunpack.c.h.b16 %v372
      %v609 = vunpack.c.l.b16 %v373
      %v610 = vunpack.c.l.b16 %v374
      %v611 = vunpack.c.h.b16 %v374
      %v612 = vunpack.c.l.b16 %v375
      %v613 = vunpack.c.l.b16 %v376
      %v614 = vunpack.c.h.b16 %v376
      %v615 = vunpack.c.l.b16 %v377
      %v616 = vunpack.c.l.b16 %v378
      %v617 = vunpack.c.h.b16 %v378
      %v618 = vunpack.c.l.b16 %v379
      %v619 = vunpack.c.l.b16 %v380
      %v620 = vunpack.c.h.b16 %v380
      %v621 = vunpack.c.l.b16 %v381
      %v622 = vunpack.c.l.b16 %v382
      %v623 = vunpack.c.h.b16 %v382
      %v624 = vunpack.c.l.b16 %v383
      %v625 = vunpack.c.l.b16 %v384
      %v626 = vunpack.c.h.b16 %v384
      %v627 = vunpack.c.l.b16 %v385
      %v628 = vunpack.c.l.b16 %v386
      %v629 = vunpack.c.h.b16 %v386
      %v630 = vunpack.c.l.b16 %v387
      %v631 = vunpack.c.l.b16 %v388
      %v632 = vunpack.c.h.b16 %v388
      %v633 = vunpack.c.l.b16 %v389
      %v634 = vunpack.c.l.b16 %v390
      %v635 = vunpack.c.h.b16 %v390
      %v636 = vunpack.c.l.b16 %v391
      %v637 = vunpack.c.l.b16 %v392
      %v638 = vunpack.c.h.b16 %v392
      %v639 = vunpack.c.l.b16 %v393
      %v640 = vunpack.c.l.b16 %v394
      %v641 = vunpack.c.h.b16 %v394
      %v642 = vunpack.c.l.b16 %v395
      %v643 = vunpack.c.l.b16 %v396
      %v644 = vunpack.c.h.b16 %v396
      %v645 = vunpack.c.l.b16 %v397
      %v646 = vunpack.c.l.b16 %v398
      %v647 = vunpack.c.h.b16 %v398
      %v648 = vunpack.c.l.b16 %v399
      %v649 = vunpack.c.l.b16 %v400
      %v650 = vunpack.c.h.b16 %v400
      %v651 = vunpack.c.l.b16 %v401
      %v652 = vunpack.c.l.b16 %v402
      %v653 = vunpack.c.h.b16 %v402
      %v654 = vunpack.c.l.b16 %v403
      %v655 = vunpack.c.l.b16 %v404
      %v656 = vunpack.c.h.b16 %v404
      %v657 = vunpack.c.l.b16 %v405
      %v658 = vunpack.c.l.b16 %v406
      %v659 = vunpack.c.h.b16 %v406
      %v660 = vunpack.c.l.b16 %v407
      %v661 = vunpack.c.l.b16 %v408
      %v662 = vunpack.c.h.b16 %v408
      %v663 = vunpack.c.l.b16 %v409
      %v664 = vunpack.c.l.b16 %v410
      %v665 = vunpack.c.h.b16 %v410
      %v666 = vunpack.c.l.b16 %v411
      %v667 = vunpack.c.l.b16 %v412
      %v668 = vunpack.c.h.b16 %v412
      %v669 = vunpack.c.l.b16 %v413
      %v670 = vunpack.c.l.b16 %v414
      %v671 = vunpack.c.h.b16 %v414
      %v672 = vunpack.c.l.b16 %v415
      %v673 = vunpack.c.l.b16 %v416
      %v674 = vunpack.c.h.b16 %v416
      %v675 = vunpack.c.l.b16 %v417
      %v676 = vunpack.c.l.b16 %v418
      %v677 = vunpack.c.h.b16 %v418
      %v678 = vunpack.c.l.b16 %v419
      %v679 = vunpack.c.l.b16 %v420
      %v680 = vunpack.c.h.b16 %v420
      %v681 = vunpack.c.l.b16 %v421
      %v682 = vunpack.c.l.b16 %v422
      %v683 = vunpack.c.h.b16 %v422
      %v684 = vunpack.c.l.b16 %v423
      %v685 = vunpack.c.l.b16 %v424
      %v686 = vunpack.c.h.b16 %v424
      %v687 = vunpack.c.l.b16 %v425
      %v688 = vunpack.c.l.b16 %v426
      %v689 = vunpack.c.h.b16 %v426
      %v690 = vunpack.c.l.b16 %v427
      %v691 = vunpack.c.l.b16 %v428
      %v692 = vunpack.c.h.b16 %v428
      %v693 = vunpack.c.l.b16 %v429
      %v694 = vunpack.c.l.b16 %v430
      %v695 = vunpack.c.h.b16 %v430
      %v696 = vunpack.c.l.b16 %v431
      %v697 = vunpack.c.l.b16 %v432
      %v698 = vunpack.c.h.b16 %v432
      %v699 = vunpack.c.l.b16 %v433
      %v700 = vunpack.c.l.b16 %v434
      %v701 = vunpack.c.h.b16 %v434
      %v702 = vunpack.c.l.b16 %v435
      %v703 = vpack.c.b16 %v562, %v559
      %v704 = vpack.c.b16 %v563, %v560
      %v705 = vpack.c.b16 %v564, %v561
      %v706 = vpack.c.b16 %v568, %v565
      %v707 = vpack.c.b16 %v569, %v566
      %v708 = vpack.c.b16 %v570, %v567
      %v709 = vpack.c.b16 %v574, %v571
      %v710 = vpack.c.b16 %v575, %v572
      %v711 = vpack.c.b16 %v576, %v573
      %v712 = vpack.c.b16 %v580, %v577
      %v713 = vpack.c.b16 %v581, %v578
      %v714 = vpack.c.b16 %v582, %v579
      %v715 = vpack.c.b16 %v586, %v583
      %v716 = vpack.c.b16 %v587, %v584
      %v717 = vpack.c.b16 %v588, %v585
      %v718 = vpack.c.b16 %v592, %v589
      %v719 = vpack.c.b16 %v593, %v590
      %v720 = vpack.c.b16 %v594, %v591
      %v721 = vpack.c.b16 %v598, %v595
      %v722 = vpack.c.b16 %v599, %v596
      %v723 = vpack.c.b16 %v600, %v597
      %v724 = vpack.c.b16 %v604, %v601
      %v725 = vpack.c.b16 %v605, %v602
      %v726 = vpack.c.b16 %v606, %v603
      %v727 = vpack.c.b16 %v610, %v607
      %v728 = vpack.c.b16 %v611, %v608
      %v729 = vpack.c.b16 %v612, %v609
      %v730 = vpack.c.b16 %v616, %v613
      %v731 = vpack.c.b16 %v617, %v614
      %v732 = vpack.c.b16 %v618, %v615
      %v733 = vpack.c.b16 %v622, %v619
      %v734 = vpack.c.b16 %v623, %v620
      %v735 = vpack.c.b16 %v624, %v621
      %v736 = vpack.c.b16 %v628, %v625
      %v737 = vpack.c.b16 %v629, %v626
      %v738 = vpack.c.b16 %v630, %v627
      %v739 = vpack.c.b16 %v634, %v631
      %v740 = vpack.c.b16 %v635, %v632
      %v741 = vpack.c.b16 %v636, %v633
      %v742 = vpack.c.b16 %v640, %v637
      %v743 = vpack.c.b16 %v641, %v638
      %v744 = vpack.c.b16 %v642, %v639
      %v745 = vpack.c.b16 %v646, %v643
      %v746 = vpack.c.b16 %v647, %v644
      %v747 = vpack.c.b16 %v648, %v645
      %v748 = vpack.c.b16 %v652, %v649
      %v749 = vpack.c.b16 %v653, %v650
      %v750 = vpack.c.b16 %v654, %v651
      %v751 = vpack.c.b16 %v658, %v655
      %v752 = vpack.c.b16 %v659, %v656
      %v753 = vpack.c.b16 %v660, %v657
      %v754 = vpack.c.b16 %v664, %v661
      %v755 = vpack.c.b16 %v665, %v662
      %v756 = vpack.c.b16 %v666, %v663
      %v757 = vpack.c.b16 %v670, %v667
      %v758 = vpack.c.b16 %v671, %v668
      %v759 = vpack.c.b16 %v672, %v669
      %v760 = vpack.c.b16 %v676, %v673
      %v761 = vpack.c.b16 %v677, %v674
      %v762 = vpack.c.b16 %v678, %v675
      %v763 = vpack.c.b16 %v682, %v679
      %v764 = vpack.c.b16 %v683, %v680
      %v765 = vpack.c.b16 %v684, %v681
      %v766 = vpack.c.b16 %v688, %v685
      %v767 = vpack.c.b16 %v689, %v686
      %v768 = vpack.c.b16 %v690, %v687
      %v769 = vpack.c.b16 %v694, %v691
      %v770 = vpack.c.b16 %v695, %v692
      %v771 = vpack.c.b16 %v696, %v693
      %v772 = vpack.c.b16 %v700, %v697
      %v773 = vpack.c.b16 %v701, %v698
      %v774 = vpack.c.b16 %v702, %v699
      %847 = vmatprep.subr.bf16.mxu0 %v704
      %848 = vmatpush1.bf16.msra.mxu0 %v703
      %849 = vmatprep.subr.bf16.mxu0 %v707
      %850 = vmatpush1.bf16.msra.mxu0 %v706
      %851 = vmatprep.subr.bf16.mxu0 %v710
      %852 = vmatpush1.bf16.msra.mxu0 %v709
      %853 = vmatprep.subr.bf16.mxu0 %v713
      %854 = vmatpush1.bf16.msra.mxu0 %v712
      %855 = vmatprep.subr.bf16.mxu0 %v716
      %856 = vmatpush1.bf16.msra.mxu0 %v715
      %857 = vmatprep.subr.bf16.mxu0 %v719
      %858 = vmatpush1.bf16.msra.mxu0 %v718
      %859 = vmatprep.subr.bf16.mxu0 %v722
      %860 = vmatpush1.bf16.msra.mxu0 %v721
      %861 = vmatprep.subr.bf16.mxu0 %v725
      %862 = vmatpush1.bf16.msra.mxu0 %v724
      %863 = vmatprep.subr.bf16.mxu0 %v728
      %864 = vmatpush1.bf16.msra.mxu0 %v727
      %865 = vmatprep.subr.bf16.mxu0 %v731
      %866 = vmatpush1.bf16.msra.mxu0 %v730
      %867 = vmatprep.subr.bf16.mxu0 %v734
      %868 = vmatpush1.bf16.msra.mxu0 %v733
      %869 = vmatprep.subr.bf16.mxu0 %v737
      %870 = vmatpush1.bf16.msra.mxu0 %v736
      %871 = vmatprep.subr.bf16.mxu0 %v740
      %872 = vmatpush1.bf16.msra.mxu0 %v739
      %873 = vmatprep.subr.bf16.mxu0 %v743
      %874 = vmatpush1.bf16.msra.mxu0 %v742
      %875 = vmatprep.subr.bf16.mxu0 %v746
      %876 = vmatpush1.bf16.msra.mxu0 %v745
      %877 = vmatprep.subr.bf16.mxu0 %v749
      %878 = vmatpush1.bf16.msra.mxu0 %v748
      %879 = vmatprep.mubr.bf16.mxu0 %v458
      %880 = vmatmul.mubr.bf16.gmra.mrb[0].mxu0 %v451
      %v881 = vpop.f32.mrb[0].mxu0
      %v882 = vadd.f32 0.0, %v881
      %v883 = vpop.f32.mrb[0].mxu0
      %v884 = vadd.f32 0.0, %v883
      %v885 = vpop.f32.mrb[0].mxu0
      %v886 = vpop.f32.mrb[0].mxu0
      %887 = vdwg.mxu0
      %888 = vmatprep.subr.bf16.mxu0 %v752
      %889 = vmatpush1.bf16.msra.mxu0 %v751
      %890 = vmatprep.subr.bf16.mxu0 %v755
      %891 = vmatpush1.bf16.msra.mxu0 %v754
      %892 = vmatprep.subr.bf16.mxu0 %v758
      %893 = vmatpush1.bf16.msra.mxu0 %v757
      %894 = vmatprep.subr.bf16.mxu0 %v761
      %895 = vmatpush1.bf16.msra.mxu0 %v760
      %896 = vmatprep.subr.bf16.mxu0 %v764
      %897 = vmatpush1.bf16.msra.mxu0 %v763
      %898 = vmatprep.subr.bf16.mxu0 %v767
      %899 = vmatpush1.bf16.msra.mxu0 %v766
      %900 = vmatprep.subr.bf16.mxu0 %v770
      %901 = vmatpush1.bf16.msra.mxu0 %v769
      %902 = vmatprep.subr.bf16.mxu0 %v773
      %903 = vmatpush1.bf16.msra.mxu0 %v772
      %904 = vmatprep.subr.bf16.mxu0 0
      %905 = vmatpush1.bf16.msra.mxu0 0
      %906 = vmatprep.subr.bf16.mxu0 0
      %907 = vmatpush1.bf16.msra.mxu0 0
      %908 = vmatprep.subr.bf16.mxu0 0
      %909 = vmatpush1.bf16.msra.mxu0 0
      %910 = vmatprep.subr.bf16.mxu0 0
      %911 = vmatpush1.bf16.msra.mxu0 0
      %912 = vmatprep.subr.bf16.mxu0 0
      %913 = vmatpush1.bf16.msra.mxu0 0
      %914 = vmatprep.subr.bf16.mxu0 0
      %915 = vmatpush1.bf16.msra.mxu0 0
      %916 = vmatprep.subr.bf16.mxu0 0
      %917 = vmatpush1.bf16.msra.mxu0 0
      %918 = vmatprep.subr.bf16.mxu0 0
      %919 = vmatpush1.bf16.msra.mxu0 0
      %920 = vmatprep.mubr.bf16.mxu0 0
      %921 = vmatmul.mubr.bf16.gmra.mrb[0].mxu0 %v459
      %v922 = vpop.f32.mrb[0].mxu0
      %v923 = vadd.f32 %v882, %v922
      %v924 = vpop.f32.mrb[0].mxu0
      %v925 = vadd.f32 %v884, %v924
      %v926 = vpop.f32.mrb[0].mxu0
      %v927 = vpop.f32.mrb[0].mxu0
      %928 = vdwg.mxu0
      %929 = vmatprep.subr.bf16.mxu0 0
      %930 = vmatpush1.bf16.msra.mxu0 %v705
      %931 = vmatprep.subr.bf16.mxu0 0
      %932 = vmatpush1.bf16.msra.mxu0 %v708
      %933 = vmatprep.subr.bf16.mxu0 0
      %934 = vmatpush1.bf16.msra.mxu0 %v711
      %935 = vmatprep.subr.bf16.mxu0 0
      %936 = vmatpush1.bf16.msra.mxu0 %v714
      %937 = vmatprep.subr.bf16.mxu0 0
      %938 = vmatpush1.bf16.msra.mxu0 %v717
      %939 = vmatprep.subr.bf16.mxu0 0
      %940 = vmatpush1.bf16.msra.mxu0 %v720
      %941 = vmatprep.subr.bf16.mxu0 0
      %942 = vmatpush1.bf16.msra.mxu0 %v723
      %943 = vmatprep.subr.bf16.mxu0 0
      %944 = vmatpush1.bf16.msra.mxu0 %v726
      %945 = vmatprep.subr.bf16.mxu0 0
      %946 = vmatpush1.bf16.msra.mxu0 %v729
      %947 = vmatprep.subr.bf16.mxu0 0
      %948 = vmatpush1.bf16.msra.mxu0 %v732
      %949 = vmatprep.subr.bf16.mxu0 0
      %950 = vmatpush1.bf16.msra.mxu0 %v735
      %951 = vmatprep.subr.bf16.mxu0 0
      %952 = vmatpush1.bf16.msra.mxu0 %v738
      %953 = vmatprep.subr.bf16.mxu0 0
      %954 = vmatpush1.bf16.msra.mxu0 %v741
      %955 = vmatprep.subr.bf16.mxu0 0
      %956 = vmatpush1.bf16.msra.mxu0 %v744
      %957 = vmatprep.subr.bf16.mxu0 0
      %958 = vmatpush1.bf16.msra.mxu0 %v747
      %959 = vmatprep.subr.bf16.mxu0 0
      %960 = vmatpush1.bf16.msra.mxu0 %v750
      %961 = vmatprep.mubr.bf16.mxu0 %v458
      %962 = vmatmul.mubr.bf16.gmra.mrb[0].mxu0 %v451
      %v963 = vpop.f32.mrb[0].mxu0
      %v964 = vadd.f32 0.0, %v963
      %v965 = vpop.f32.mrb[0].mxu0
      %v966 = vpop.f32.mrb[0].mxu0
      %v967 = vpop.f32.mrb[0].mxu0
      %968 = vdwg.mxu0
      %969 = vmatprep.subr.bf16.mxu0 0
      %970 = vmatpush1.bf16.msra.mxu0 %v753
      %971 = vmatprep.subr.bf16.mxu0 0
      %972 = vmatpush1.bf16.msra.mxu0 %v756
      %973 = vmatprep.subr.bf16.mxu0 0
      %974 = vmatpush1.bf16.msra.mxu0 %v759
      %975 = vmatprep.subr.bf16.mxu0 0
      %976 = vmatpush1.bf16.msra.mxu0 %v762
      %977 = vmatprep.subr.bf16.mxu0 0
      %978 = vmatpush1.bf16.msra.mxu0 %v765
      %979 = vmatprep.subr.bf16.mxu0 0
      %980 = vmatpush1.bf16.msra.mxu0 %v768
      %981 = vmatprep.subr.bf16.mxu0 0
      %982 = vmatpush1.bf16.msra.mxu0 %v771
      %983 = vmatprep.subr.bf16.mxu0 0
      %984 = vmatpush1.bf16.msra.mxu0 %v774
      %985 = vmatprep.subr.bf16.mxu0 0
      %986 = vmatpush1.bf16.msra.mxu0 0
      %987 = vmatprep.subr.bf16.mxu0 0
      %988 = vmatpush1.bf16.msra.mxu0 0
      %989 = vmatprep.subr.bf16.mxu0 0
      %990 = vmatpush1.bf16.msra.mxu0 0
      %991 = vmatprep.subr.bf16.mxu0 0
      %992 = vmatpush1.bf16.msra.mxu0 0
      %993 = vmatprep.subr.bf16.mxu0 0
      %994 = vmatpush1.bf16.msra.mxu0 0
      %995 = vmatprep.subr.bf16.mxu0 0
      %996 = vmatpush1.bf16.msra.mxu0 0
      %997 = vmatprep.subr.bf16.mxu0 0
      %998 = vmatpush1.bf16.msra.mxu0 0
      %999 = vmatprep.subr.bf16.mxu0 0
      %1000 = vmatpush1.bf16.msra.mxu0 0
      %1001 = vmatprep.mubr.bf16.mxu0 0
      %1002 = vmatmul.mubr.bf16.gmra.mrb[0].mxu0 %v459
      %v1003 = vpop.f32.mrb[0].mxu0
      %v1004 = vadd.f32 %v964, %v1003
      %v1005 = vpop.f32.mrb[0].mxu0
      %v1006 = vpop.f32.mrb[0].mxu0
      %v1007 = vpop.f32.mrb[0].mxu0
      %1008 = vdwg.mxu0
      %v1009 = vcombine.low %v182, %v189
      %v1011 = vunpack.c.l.s4 1966171168
      %v1012 = vunpack.c.0.s8 %v1011
      %v1013 = vlaneseq
      %v1014 = vshrl.u32 %v1013, 7
      %v1015 = vsub.s32 %v1012, %v1014
      %v1016 = vrot.slane %v1009, %v1015
      %v1017 = vcombine.high %v1016, %v1016
      %v1019 = vunpack.c.l.s4 1966171168
      %v1020 = vunpack.c.0.s8 %v1019
      %v1021 = vlaneseq
      %v1022 = vshrl.u32 %v1021, 7
      %v1023 = vsub.s32 %v1020, %v1022
      %v1024 = vrot.slane %v1016, %v1023
      %v1026 = vunpack.c.l.s4 1966171168
      %v1027 = vunpack.c.0.s8 %v1026
      %v1028 = vlaneseq
      %v1029 = vshrl.u32 %v1028, 7
      %v1030 = vsub.s32 %v1027, %v1029
      %v1031 = vrot.slane %v1017, %v1030
      %v1032 = vcombine.high %v1024, %v1024
      %v1132 = vunpack.c.l.b16 %v190
      %v1133 = vunpack.c.h.b16 %v190
      %v1134 = vunpack.c.l.b16 %v191
      %v1135 = vunpack.c.l.b16 %v192
      %v1136 = vunpack.c.h.b16 %v192
      %v1137 = vunpack.c.l.b16 %v193
      %v1138 = vunpack.c.l.b16 %v194
      %v1139 = vunpack.c.h.b16 %v194
      %v1140 = vunpack.c.l.b16 %v195
      %v1141 = vunpack.c.l.b16 %v196
      %v1142 = vunpack.c.h.b16 %v196
      %v1143 = vunpack.c.l.b16 %v197
      %v1144 = vunpack.c.l.b16 %v198
      %v1145 = vunpack.c.h.b16 %v198
      %v1146 = vunpack.c.l.b16 %v199
      %v1147 = vunpack.c.l.b16 %v200
      %v1148 = vunpack.c.h.b16 %v200
      %v1149 = vunpack.c.l.b16 %v201
      %v1150 = vunpack.c.l.b16 %v202
      %v1151 = vunpack.c.h.b16 %v202
      %v1152 = vunpack.c.l.b16 %v203
      %v1153 = vunpack.c.l.b16 %v204
      %v1154 = vunpack.c.h.b16 %v204
      %v1155 = vunpack.c.l.b16 %v205
      %v1156 = vunpack.c.l.b16 %v206
      %v1157 = vunpack.c.h.b16 %v206
      %v1158 = vunpack.c.l.b16 %v207
      %v1159 = vunpack.c.l.b16 %v208
      %v1160 = vunpack.c.h.b16 %v208
      %v1161 = vunpack.c.l.b16 %v209
      %v1162 = vunpack.c.l.b16 %v210
      %v1163 = vunpack.c.h.b16 %v210
      %v1164 = vunpack.c.l.b16 %v211
      %v1165 = vunpack.c.l.b16 %v212
      %v1166 = vunpack.c.h.b16 %v212
      %v1167 = vunpack.c.l.b16 %v213
      %v1168 = vunpack.c.l.b16 %v214
      %v1169 = vunpack.c.h.b16 %v214
      %v1170 = vunpack.c.l.b16 %v215
      %v1171 = vunpack.c.l.b16 %v216
      %v1172 = vunpack.c.h.b16 %v216
      %v1173 = vunpack.c.l.b16 %v217
      %v1174 = vunpack.c.l.b16 %v218
      %v1175 = vunpack.c.h.b16 %v218
      %v1176 = vunpack.c.l.b16 %v219
      %v1177 = vunpack.c.l.b16 %v220
      %v1178 = vunpack.c.h.b16 %v220
      %v1179 = vunpack.c.l.b16 %v221
      %v1180 = vunpack.c.l.b16 %v222
      %v1181 = vunpack.c.h.b16 %v222
      %v1182 = vunpack.c.l.b16 %v223
      %v1183 = vunpack.c.l.b16 %v224
      %v1184 = vunpack.c.h.b16 %v224
      %v1185 = vunpack.c.l.b16 %v225
      %v1186 = vunpack.c.l.b16 %v226
      %v1187 = vunpack.c.h.b16 %v226
      %v1188 = vunpack.c.l.b16 %v227
      %v1189 = vunpack.c.l.b16 %v228
      %v1190 = vunpack.c.h.b16 %v228
      %v1191 = vunpack.c.l.b16 %v229
      %v1192 = vunpack.c.l.b16 %v230
      %v1193 = vunpack.c.h.b16 %v230
      %v1194 = vunpack.c.l.b16 %v231
      %v1195 = vunpack.c.l.b16 %v232
      %v1196 = vunpack.c.h.b16 %v232
      %v1197 = vunpack.c.l.b16 %v233
      %v1198 = vunpack.c.l.b16 %v234
      %v1199 = vunpack.c.h.b16 %v234
      %v1200 = vunpack.c.l.b16 %v235
      %v1201 = vunpack.c.l.b16 %v236
      %v1202 = vunpack.c.h.b16 %v236
      %v1203 = vunpack.c.l.b16 %v237
      %v1204 = vunpack.c.l.b16 %v238
      %v1205 = vunpack.c.h.b16 %v238
      %v1206 = vunpack.c.l.b16 %v239
      %v1207 = vunpack.c.l.b16 %v240
      %v1208 = vunpack.c.h.b16 %v240
      %v1209 = vunpack.c.l.b16 %v241
      %v1210 = vunpack.c.l.b16 %v242
      %v1211 = vunpack.c.h.b16 %v242
      %v1212 = vunpack.c.l.b16 %v243
      %v1213 = vunpack.c.l.b16 %v244
      %v1214 = vunpack.c.h.b16 %v244
      %v1215 = vunpack.c.l.b16 %v245
      %v1216 = vunpack.c.l.b16 %v246
      %v1217 = vunpack.c.h.b16 %v246
      %v1218 = vunpack.c.l.b16 %v247
      %v1219 = vunpack.c.l.b16 %v248
      %v1220 = vunpack.c.h.b16 %v248
      %v1221 = vunpack.c.l.b16 %v249
      %v1222 = vunpack.c.l.b16 %v250
      %v1223 = vunpack.c.h.b16 %v250
      %v1224 = vunpack.c.l.b16 %v251
      %v1225 = vunpack.c.l.b16 %v252
      %v1226 = vunpack.c.h.b16 %v252
      %v1227 = vunpack.c.l.b16 %v253
      %v1228 = vunpack.c.l.b16 %v254
      %v1229 = vunpack.c.h.b16 %v254
      %v1230 = vunpack.c.l.b16 %v255
      %v1231 = vunpack.c.l.b16 %v256
      %v1232 = vunpack.c.h.b16 %v256
      %v1233 = vunpack.c.l.b16 %v257
      %v1234 = vunpack.c.l.b16 %v258
      %v1235 = vunpack.c.h.b16 %v258
      %v1236 = vunpack.c.l.b16 %v259
      %v1237 = vunpack.c.l.b16 %v260
      %v1238 = vunpack.c.h.b16 %v260
      %v1239 = vunpack.c.l.b16 %v261
      %v1240 = vunpack.c.l.b16 %v262
      %v1241 = vunpack.c.h.b16 %v262
      %v1242 = vunpack.c.l.b16 %v263
      %v1243 = vunpack.c.l.b16 %v264
      %v1244 = vunpack.c.h.b16 %v264
      %v1245 = vunpack.c.l.b16 %v265
      %v1246 = vunpack.c.l.b16 %v266
      %v1247 = vunpack.c.h.b16 %v266
      %v1248 = vunpack.c.l.b16 %v267
      %v1249 = vunpack.c.l.b16 %v268
      %v1250 = vunpack.c.h.b16 %v268
      %v1251 = vunpack.c.l.b16 %v269
      %v1252 = vunpack.c.l.b16 %v270
      %v1253 = vunpack.c.h.b16 %v270
      %v1254 = vunpack.c.l.b16 %v271
      %v1255 = vunpack.c.l.b16 %v272
      %v1256 = vunpack.c.h.b16 %v272
      %v1257 = vunpack.c.l.b16 %v273
      %v1258 = vunpack.c.l.b16 %v274
      %v1259 = vunpack.c.h.b16 %v274
      %v1260 = vunpack.c.l.b16 %v275
      %v1261 = vunpack.c.l.b16 %v276
      %v1262 = vunpack.c.h.b16 %v276
      %v1263 = vunpack.c.l.b16 %v277
      %v1264 = vunpack.c.l.b16 %v278
      %v1265 = vunpack.c.h.b16 %v278
      %v1266 = vunpack.c.l.b16 %v279
      %v1267 = vunpack.c.l.b16 %v280
      %v1268 = vunpack.c.h.b16 %v280
      %v1269 = vunpack.c.l.b16 %v281
      %v1270 = vunpack.c.l.b16 %v282
      %v1271 = vunpack.c.h.b16 %v282
      %v1272 = vunpack.c.l.b16 %v283
      %v1273 = vunpack.c.l.b16 %v284
      %v1274 = vunpack.c.h.b16 %v284
      %v1275 = vunpack.c.l.b16 %v285
      %v1276 = vpack.c.b16 %v1135, %v1132
      %v1277 = vpack.c.b16 %v1136, %v1133
      %v1278 = vpack.c.b16 %v1137, %v1134
      %v1279 = vpack.c.b16 %v1141, %v1138
      %v1280 = vpack.c.b16 %v1142, %v1139
      %v1281 = vpack.c.b16 %v1143, %v1140
      %v1282 = vpack.c.b16 %v1147, %v1144
      %v1283 = vpack.c.b16 %v1148, %v1145
      %v1284 = vpack.c.b16 %v1149, %v1146
      %v1285 = vpack.c.b16 %v1153, %v1150
      %v1286 = vpack.c.b16 %v1154, %v1151
      %v1287 = vpack.c.b16 %v1155, %v1152
      %v1288 = vpack.c.b16 %v1159, %v1156
      %v1289 = vpack.c.b16 %v1160, %v1157
      %v1290 = vpack.c.b16 %v1161, %v1158
      %v1291 = vpack.c.b16 %v1165, %v1162
      %v1292 = vpack.c.b16 %v1166, %v1163
      %v1293 = vpack.c.b16 %v1167, %v1164
      %v1294 = vpack.c.b16 %v1171, %v1168
      %v1295 = vpack.c.b16 %v1172, %v1169
      %v1296 = vpack.c.b16 %v1173, %v1170
      %v1297 = vpack.c.b16 %v1177, %v1174
      %v1298 = vpack.c.b16 %v1178, %v1175
      %v1299 = vpack.c.b16 %v1179, %v1176
      %v1300 = vpack.c.b16 %v1183, %v1180
      %v1301 = vpack.c.b16 %v1184, %v1181
      %v1302 = vpack.c.b16 %v1185, %v1182
      %v1303 = vpack.c.b16 %v1189, %v1186
      %v1304 = vpack.c.b16 %v1190, %v1187
      %v1305 = vpack.c.b16 %v1191, %v1188
      %v1306 = vpack.c.b16 %v1195, %v1192
      %v1307 = vpack.c.b16 %v1196, %v1193
      %v1308 = vpack.c.b16 %v1197, %v1194
      %v1309 = vpack.c.b16 %v1201, %v1198
      %v1310 = vpack.c.b16 %v1202, %v1199
      %v1311 = vpack.c.b16 %v1203, %v1200
      %v1312 = vpack.c.b16 %v1207, %v1204
      %v1313 = vpack.c.b16 %v1208, %v1205
      %v1314 = vpack.c.b16 %v1209, %v1206
      %v1315 = vpack.c.b16 %v1213, %v1210
      %v1316 = vpack.c.b16 %v1214, %v1211
      %v1317 = vpack.c.b16 %v1215, %v1212
      %v1318 = vpack.c.b16 %v1219, %v1216
      %v1319 = vpack.c.b16 %v1220, %v1217
      %v1320 = vpack.c.b16 %v1221, %v1218
      %v1321 = vpack.c.b16 %v1225, %v1222
      %v1322 = vpack.c.b16 %v1226, %v1223
      %v1323 = vpack.c.b16 %v1227, %v1224
      %v1324 = vpack.c.b16 %v1231, %v1228
      %v1325 = vpack.c.b16 %v1232, %v1229
      %v1326 = vpack.c.b16 %v1233, %v1230
      %v1327 = vpack.c.b16 %v1237, %v1234
      %v1328 = vpack.c.b16 %v1238, %v1235
      %v1329 = vpack.c.b16 %v1239, %v1236
      %v1330 = vpack.c.b16 %v1243, %v1240
      %v1331 = vpack.c.b16 %v1244, %v1241
      %v1332 = vpack.c.b16 %v1245, %v1242
      %v1333 = vpack.c.b16 %v1249, %v1246
      %v1334 = vpack.c.b16 %v1250, %v1247
      %v1335 = vpack.c.b16 %v1251, %v1248
      %v1336 = vpack.c.b16 %v1255, %v1252
      %v1337 = vpack.c.b16 %v1256, %v1253
      %v1338 = vpack.c.b16 %v1257, %v1254
      %v1339 = vpack.c.b16 %v1261, %v1258
      %v1340 = vpack.c.b16 %v1262, %v1259
      %v1341 = vpack.c.b16 %v1263, %v1260
      %v1342 = vpack.c.b16 %v1267, %v1264
      %v1343 = vpack.c.b16 %v1268, %v1265
      %v1344 = vpack.c.b16 %v1269, %v1266
      %v1345 = vpack.c.b16 %v1273, %v1270
      %v1346 = vpack.c.b16 %v1274, %v1271
      %v1347 = vpack.c.b16 %v1275, %v1272
      %1420 = vmatprep.subr.bf16.mxu0 %v1277
      %1421 = vmatpush1.bf16.msra.mxu0 %v1276
      %1422 = vmatprep.subr.bf16.mxu0 %v1280
      %1423 = vmatpush1.bf16.msra.mxu0 %v1279
      %1424 = vmatprep.subr.bf16.mxu0 %v1283
      %1425 = vmatpush1.bf16.msra.mxu0 %v1282
      %1426 = vmatprep.subr.bf16.mxu0 %v1286
      %1427 = vmatpush1.bf16.msra.mxu0 %v1285
      %1428 = vmatprep.subr.bf16.mxu0 %v1289
      %1429 = vmatpush1.bf16.msra.mxu0 %v1288
      %1430 = vmatprep.subr.bf16.mxu0 %v1292
      %1431 = vmatpush1.bf16.msra.mxu0 %v1291
      %1432 = vmatprep.subr.bf16.mxu0 %v1295
      %1433 = vmatpush1.bf16.msra.mxu0 %v1294
      %1434 = vmatprep.subr.bf16.mxu0 %v1298
      %1435 = vmatpush1.bf16.msra.mxu0 %v1297
      %1436 = vmatprep.subr.bf16.mxu0 %v1301
      %1437 = vmatpush1.bf16.msra.mxu0 %v1300
      %1438 = vmatprep.subr.bf16.mxu0 %v1304
      %1439 = vmatpush1.bf16.msra.mxu0 %v1303
      %1440 = vmatprep.subr.bf16.mxu0 %v1307
      %1441 = vmatpush1.bf16.msra.mxu0 %v1306
      %1442 = vmatprep.subr.bf16.mxu0 %v1310
      %1443 = vmatpush1.bf16.msra.mxu0 %v1309
      %1444 = vmatprep.subr.bf16.mxu0 %v1313
      %1445 = vmatpush1.bf16.msra.mxu0 %v1312
      %1446 = vmatprep.subr.bf16.mxu0 %v1316
      %1447 = vmatpush1.bf16.msra.mxu0 %v1315
      %1448 = vmatprep.subr.bf16.mxu0 %v1319
      %1449 = vmatpush1.bf16.msra.mxu0 %v1318
      %1450 = vmatprep.subr.bf16.mxu0 %v1322
      %1451 = vmatpush1.bf16.msra.mxu0 %v1321
      %1452 = vmatprep.mubr.bf16.mxu0 %v1031
      %1453 = vmatmul.mubr.bf16.gmra.mrb[0].mxu0 %v1024
      %v1454 = vpop.f32.mrb[0].mxu0
      %v1455 = vadd.f32 %v923, %v1454
      %v1456 = vpop.f32.mrb[0].mxu0
      %v1457 = vadd.f32 %v925, %v1456
      %v1458 = vpop.f32.mrb[0].mxu0
      %v1459 = vpop.f32.mrb[0].mxu0
      %1460 = vdwg.mxu0
      %1461 = vmatprep.subr.bf16.mxu0 %v1325
      %1462 = vmatpush1.bf16.msra.mxu0 %v1324
      %1463 = vmatprep.subr.bf16.mxu0 %v1328
      %1464 = vmatpush1.bf16.msra.mxu0 %v1327
      %1465 = vmatprep.subr.bf16.mxu0 %v1331
      %1466 = vmatpush1.bf16.msra.mxu0 %v1330
      %1467 = vmatprep.subr.bf16.mxu0 %v1334
      %1468 = vmatpush1.bf16.msra.mxu0 %v1333
      %1469 = vmatprep.subr.bf16.mxu0 %v1337
      %1470 = vmatpush1.bf16.msra.mxu0 %v1336
      %1471 = vmatprep.subr.bf16.mxu0 %v1340
      %1472 = vmatpush1.bf16.msra.mxu0 %v1339
      %1473 = vmatprep.subr.bf16.mxu0 %v1343
      %1474 = vmatpush1.bf16.msra.mxu0 %v1342
      %1475 = vmatprep.subr.bf16.mxu0 %v1346
      %1476 = vmatpush1.bf16.msra.mxu0 %v1345
      %1477 = vmatprep.subr.bf16.mxu0 0
      %1478 = vmatpush1.bf16.msra.mxu0 0
      %1479 = vmatprep.subr.bf16.mxu0 0
      %1480 = vmatpush1.bf16.msra.mxu0 0
      %1481 = vmatprep.subr.bf16.mxu0 0
      %1482 = vmatpush1.bf16.msra.mxu0 0
      %1483 = vmatprep.subr.bf16.mxu0 0
      %1484 = vmatpush1.bf16.msra.mxu0 0
      %1485 = vmatprep.subr.bf16.mxu0 0
      %1486 = vmatpush1.bf16.msra.mxu0 0
      %1487 = vmatprep.subr.bf16.mxu0 0
      %1488 = vmatpush1.bf16.msra.mxu0 0
      %1489 = vmatprep.subr.bf16.mxu0 0
      %1490 = vmatpush1.bf16.msra.mxu0 0
      %1491 = vmatprep.subr.bf16.mxu0 0
      %1492 = vmatpush1.bf16.msra.mxu0 0
      %1493 = vmatprep.mubr.bf16.mxu0 0
      %1494 = vmatmul.mubr.bf16.gmra.mrb[0].mxu0 %v1032
      %v1495 = vpop.f32.mrb[0].mxu0
      %v1496 = vadd.f32 %v1455, %v1495
      %v1497 = vpop.f32.mrb[0].mxu0
      %v1498 = vadd.f32 %v1457, %v1497
      %v1499 = vpop.f32.mrb[0].mxu0
      %v1500 = vpop.f32.mrb[0].mxu0
      %1501 = vdwg.mxu0
      %1502 = vmatprep.subr.bf16.mxu0 0
      %1503 = vmatpush1.bf16.msra.mxu0 %v1278
      %1504 = vmatprep.subr.bf16.mxu0 0
      %1505 = vmatpush1.bf16.msra.mxu0 %v1281
      %1506 = vmatprep.subr.bf16.mxu0 0
      %1507 = vmatpush1.bf16.msra.mxu0 %v1284
      %1508 = vmatprep.subr.bf16.mxu0 0
      %1509 = vmatpush1.bf16.msra.mxu0 %v1287
      %1510 = vmatprep.subr.bf16.mxu0 0
      %1511 = vmatpush1.bf16.msra.mxu0 %v1290
      %1512 = vmatprep.subr.bf16.mxu0 0
      %1513 = vmatpush1.bf16.msra.mxu0 %v1293
      %1514 = vmatprep.subr.bf16.mxu0 0
      %1515 = vmatpush1.bf16.msra.mxu0 %v1296
      %1516 = vmatprep.subr.bf16.mxu0 0
      %1517 = vmatpush1.bf16.msra.mxu0 %v1299
      %1518 = vmatprep.subr.bf16.mxu0 0
      %1519 = vmatpush1.bf16.msra.mxu0 %v1302
      %1520 = vmatprep.subr.bf16.mxu0 0
      %1521 = vmatpush1.bf16.msra.mxu0 %v1305
      %1522 = vmatprep.subr.bf16.mxu0 0
      %1523 = vmatpush1.bf16.msra.mxu0 %v1308
      %1524 = vmatprep.subr.bf16.mxu0 0
      %1525 = vmatpush1.bf16.msra.mxu0 %v1311
      %1526 = vmatprep.subr.bf16.mxu0 0
      %1527 = vmatpush1.bf16.msra.mxu0 %v1314
      %1528 = vmatprep.subr.bf16.mxu0 0
      %1529 = vmatpush1.bf16.msra.mxu0 %v1317
      %1530 = vmatprep.subr.bf16.mxu0 0
      %1531 = vmatpush1.bf16.msra.mxu0 %v1320
      %1532 = vmatprep.subr.bf16.mxu0 0
      %1533 = vmatpush1.bf16.msra.mxu0 %v1323
      %1534 = vmatprep.mubr.bf16.mxu0 %v1031
      %1535 = vmatmul.mubr.bf16.gmra.mrb[0].mxu0 %v1024
      %v1536 = vpop.f32.mrb[0].mxu0
      %v1537 = vadd.f32 %v1004, %v1536
      %v1538 = vpop.f32.mrb[0].mxu0
      %v1539 = vpop.f32.mrb[0].mxu0
      %v1540 = vpop.f32.mrb[0].mxu0
      %1541 = vdwg.mxu0
      %1542 = vmatprep.subr.bf16.mxu0 0
      %1543 = vmatpush1.bf16.msra.mxu0 %v1326
      %1544 = vmatprep.subr.bf16.mxu0 0
      %1545 = vmatpush1.bf16.msra.mxu0 %v1329
      %1546 = vmatprep.subr.bf16.mxu0 0
      %1547 = vmatpush1.bf16.msra.mxu0 %v1332
      %1548 = vmatprep.subr.bf16.mxu0 0
      %1549 = vmatpush1.bf16.msra.mxu0 %v1335
      %1550 = vmatprep.subr.bf16.mxu0 0
      %1551 = vmatpush1.bf16.msra.mxu0 %v1338
      %1552 = vmatprep.subr.bf16.mxu0 0
      %1553 = vmatpush1.bf16.msra.mxu0 %v1341
      %1554 = vmatprep.subr.bf16.mxu0 0
      %1555 = vmatpush1.bf16.msra.mxu0 %v1344
      %1556 = vmatprep.subr.bf16.mxu0 0
      %1557 = vmatpush1.bf16.msra.mxu0 %v1347
      %1558 = vmatprep.subr.bf16.mxu0 0
      %1559 = vmatpush1.bf16.msra.mxu0 0
      %1560 = vmatprep.subr.bf16.mxu0 0
      %1561 = vmatpush1.bf16.msra.mxu0 0
      %1562 = vmatprep.subr.bf16.mxu0 0
      %1563 = vmatpush1.bf16.msra.mxu0 0
      %1564 = vmatprep.subr.bf16.mxu0 0
      %1565 = vmatpush1.bf16.msra.mxu0 0
      %1566 = vmatprep.subr.bf16.mxu0 0
      %1567 = vmatpush1.bf16.msra.mxu0 0
      %1568 = vmatprep.subr.bf16.mxu0 0
      %1569 = vmatpush1.bf16.msra.mxu0 0
      %1570 = vmatprep.subr.bf16.mxu0 0
      %1571 = vmatpush1.bf16.msra.mxu0 0
      %1572 = vmatprep.subr.bf16.mxu0 0
      %1573 = vmatpush1.bf16.msra.mxu0 0
      %1574 = vmatprep.mubr.bf16.mxu0 0
      %1575 = vmatmul.mubr.bf16.gmra.mrb[0].mxu0 %v1032
      %v1576 = vpop.f32.mrb[0].mxu0
      %v1577 = vadd.f32 %v1537, %v1576
      %v1578 = vpop.f32.mrb[0].mxu0
      %v1579 = vpop.f32.mrb[0].mxu0
      %v1580 = vpop.f32.mrb[0].mxu0
      %1581 = vdwg.mxu0
      %s1582 = scalar_lea.vmem %s165, 6
      %v1583 = vld [vmem:[%s1582] sm:$0x15]
      %v1584 = vld [vmem:[%s1582 + $0x6] sm:$0x15]
      %v1588 = vunpack.c.l.s4 1966171168
      %v1589 = vunpack.c.0.s8 %v1588
      %v1590 = vlaneseq
      %v1591 = vshrl.u32 %v1590, 7
      %v1592 = vsub.s32 %v1589, %v1591
      %v1593 = vrot.slane %v1583, %v1592
      %v1595 = vunpack.c.l.s4 1966171168
      %v1596 = vunpack.c.0.s8 %v1595
      %v1597 = vlaneseq
      %v1598 = vshrl.u32 %v1597, 7
      %v1599 = vsub.s32 %v1596, %v1598
      %v1600 = vrot.slane %v1584, %v1599
      %s1601 = scalar_lea.vmem %s1, 1152
      %v1602 = vld [vmem:[%s1601] sm:$0xff]
      %v1603 = vld [vmem:[%s1601 + $0x8] sm:$0xf]
      %v1604 = vld [vmem:[%s1601 + $0xc] sm:$0xff]
      %v1605 = vld [vmem:[%s1601 + $0x14] sm:$0xf]
      %v1606 = vld [vmem:[%s1601 + $0x18] sm:$0xff]
      %v1607 = vld [vmem:[%s1601 + $0x20] sm:$0xf]
      %v1608 = vld [vmem:[%s1601 + $0x24] sm:$0xff]
      %v1609 = vld [vmem:[%s1601 + $0x2c] sm:$0xf]
      %v1610 = vld [vmem:[%s1601 + $0x30] sm:$0xff]
      %v1611 = vld [vmem:[%s1601 + $0x38] sm:$0xf]
      %v1612 = vld [vmem:[%s1601 + $0x3c] sm:$0xff]
      %v1613 = vld [vmem:[%s1601 + $0x44] sm:$0xf]
      %v1614 = vld [vmem:[%s1601 + $0x48] sm:$0xff]
      %v1615 = vld [vmem:[%s1601 + $0x50] sm:$0xf]
      %v1616 = vld [vmem:[%s1601 + $0x54] sm:$0xff]
      %v1617 = vld [vmem:[%s1601 + $0x5c] sm:$0xf]
      %v1618 = vld [vmem:[%s1601 + $0x60] sm:$0xff]
      %v1619 = vld [vmem:[%s1601 + $0x68] sm:$0xf]
      %v1620 = vld [vmem:[%s1601 + $0x6c] sm:$0xff]
      %v1621 = vld [vmem:[%s1601 + $0x74] sm:$0xf]
      %v1622 = vld [vmem:[%s1601 + $0x78] sm:$0xff]
      %v1623 = vld [vmem:[%s1601 + $0x80] sm:$0xf]
      %v1624 = vld [vmem:[%s1601 + $0x84] sm:$0xff]
      %v1625 = vld [vmem:[%s1601 + $0x8c] sm:$0xf]
      %v1626 = vld [vmem:[%s1601 + $0x90] sm:$0xff]
      %v1627 = vld [vmem:[%s1601 + $0x98] sm:$0xf]
      %v1628 = vld [vmem:[%s1601 + $0x9c] sm:$0xff]
      %v1629 = vld [vmem:[%s1601 + $0xa4] sm:$0xf]
      %v1630 = vld [vmem:[%s1601 + $0xa8] sm:$0xff]
      %v1631 = vld [vmem:[%s1601 + $0xb0] sm:$0xf]
      %v1632 = vld [vmem:[%s1601 + $0xb4] sm:$0xff]
      %v1633 = vld [vmem:[%s1601 + $0xbc] sm:$0xf]
      %v1634 = vld [vmem:[%s1601 + $0xc0] sm:$0xff]
      %v1635 = vld [vmem:[%s1601 + $0xc8] sm:$0xf]
      %v1636 = vld [vmem:[%s1601 + $0xcc] sm:$0xff]
      %v1637 = vld [vmem:[%s1601 + $0xd4] sm:$0xf]
      %v1638 = vld [vmem:[%s1601 + $0xd8] sm:$0xff]
      %v1639 = vld [vmem:[%s1601 + $0xe0] sm:$0xf]
      %v1640 = vld [vmem:[%s1601 + $0xe4] sm:$0xff]
      %v1641 = vld [vmem:[%s1601 + $0xec] sm:$0xf]
      %v1642 = vld [vmem:[%s1601 + $0xf0] sm:$0xff]
      %v1643 = vld [vmem:[%s1601 + $0xf8] sm:$0xf]
      %v1644 = vld [vmem:[%s1601 + $0xfc] sm:$0xff]
      %v1645 = vld [vmem:[%s1601 + $0x104] sm:$0xf]
      %v1646 = vld [vmem:[%s1601 + $0x108] sm:$0xff]
      %v1647 = vld [vmem:[%s1601 + $0x110] sm:$0xf]
      %v1648 = vld [vmem:[%s1601 + $0x114] sm:$0xff]
      %v1649 = vld [vmem:[%s1601 + $0x11c] sm:$0xf]
      %v1650 = vld [vmem:[%s1601 + $0x120] sm:$0xff]
      %v1651 = vld [vmem:[%s1601 + $0x128] sm:$0xf]
      %v1652 = vld [vmem:[%s1601 + $0x12c] sm:$0xff]
      %v1653 = vld [vmem:[%s1601 + $0x134] sm:$0xf]
      %v1654 = vld [vmem:[%s1601 + $0x138] sm:$0xff]
      %v1655 = vld [vmem:[%s1601 + $0x140] sm:$0xf]
      %v1656 = vld [vmem:[%s1601 + $0x144] sm:$0xff]
      %v1657 = vld [vmem:[%s1601 + $0x14c] sm:$0xf]
      %v1658 = vld [vmem:[%s1601 + $0x150] sm:$0xff]
      %v1659 = vld [vmem:[%s1601 + $0x158] sm:$0xf]
      %v1660 = vld [vmem:[%s1601 + $0x15c] sm:$0xff]
      %v1661 = vld [vmem:[%s1601 + $0x164] sm:$0xf]
      %v1662 = vld [vmem:[%s1601 + $0x168] sm:$0xff]
      %v1663 = vld [vmem:[%s1601 + $0x170] sm:$0xf]
      %v1664 = vld [vmem:[%s1601 + $0x174] sm:$0xff]
      %v1665 = vld [vmem:[%s1601 + $0x17c] sm:$0xf]
      %v1666 = vld [vmem:[%s1601 + $0x180] sm:$0xff]
      %v1667 = vld [vmem:[%s1601 + $0x188] sm:$0xf]
      %v1668 = vld [vmem:[%s1601 + $0x18c] sm:$0xff]
      %v1669 = vld [vmem:[%s1601 + $0x194] sm:$0xf]
      %v1670 = vld [vmem:[%s1601 + $0x198] sm:$0xff]
      %v1671 = vld [vmem:[%s1601 + $0x1a0] sm:$0xf]
      %v1672 = vld [vmem:[%s1601 + $0x1a4] sm:$0xff]
      %v1673 = vld [vmem:[%s1601 + $0x1ac] sm:$0xf]
      %v1674 = vld [vmem:[%s1601 + $0x1b0] sm:$0xff]
      %v1675 = vld [vmem:[%s1601 + $0x1b8] sm:$0xf]
      %v1676 = vld [vmem:[%s1601 + $0x1bc] sm:$0xff]
      %v1677 = vld [vmem:[%s1601 + $0x1c4] sm:$0xf]
      %v1678 = vld [vmem:[%s1601 + $0x1c8] sm:$0xff]
      %v1679 = vld [vmem:[%s1601 + $0x1d0] sm:$0xf]
      %v1680 = vld [vmem:[%s1601 + $0x1d4] sm:$0xff]
      %v1681 = vld [vmem:[%s1601 + $0x1dc] sm:$0xf]
      %v1682 = vld [vmem:[%s1601 + $0x1e0] sm:$0xff]
      %v1683 = vld [vmem:[%s1601 + $0x1e8] sm:$0xf]
      %v1684 = vld [vmem:[%s1601 + $0x1ec] sm:$0xff]
      %v1685 = vld [vmem:[%s1601 + $0x1f4] sm:$0xf]
      %v1686 = vld [vmem:[%s1601 + $0x1f8] sm:$0xff]
      %v1687 = vld [vmem:[%s1601 + $0x200] sm:$0xf]
      %v1688 = vld [vmem:[%s1601 + $0x204] sm:$0xff]
      %v1689 = vld [vmem:[%s1601 + $0x20c] sm:$0xf]
      %v1690 = vld [vmem:[%s1601 + $0x210] sm:$0xff]
      %v1691 = vld [vmem:[%s1601 + $0x218] sm:$0xf]
      %v1692 = vld [vmem:[%s1601 + $0x21c] sm:$0xff]
      %v1693 = vld [vmem:[%s1601 + $0x224] sm:$0xf]
      %v1694 = vld [vmem:[%s1601 + $0x228] sm:$0xff]
      %v1695 = vld [vmem:[%s1601 + $0x230] sm:$0xf]
      %v1696 = vld [vmem:[%s1601 + $0x234] sm:$0xff]
      %v1697 = vld [vmem:[%s1601 + $0x23c] sm:$0xf]
      %v1698 = vcombine.low %v1593, %v1600
      %v1700 = vunpack.c.l.s4 1966171168
      %v1701 = vunpack.c.0.s8 %v1700
      %v1702 = vlaneseq
      %v1703 = vshrl.u32 %v1702, 7
      %v1704 = vsub.s32 %v1701, %v1703
      %v1705 = vrot.slane %v1698, %v1704
      %v1706 = vcombine.high %v1705, %v1705
      %v1708 = vunpack.c.l.s4 1966171168
      %v1709 = vunpack.c.0.s8 %v1708
      %v1710 = vlaneseq
      %v1711 = vshrl.u32 %v1710, 7
      %v1712 = vsub.s32 %v1709, %v1711
      %v1713 = vrot.slane %v1705, %v1712
      %v1715 = vunpack.c.l.s4 1966171168
      %v1716 = vunpack.c.0.s8 %v1715
      %v1717 = vlaneseq
      %v1718 = vshrl.u32 %v1717, 7
      %v1719 = vsub.s32 %v1716, %v1718
      %v1720 = vrot.slane %v1706, %v1719
      %v1721 = vcombine.high %v1713, %v1713
      %v1821 = vunpack.c.l.b16 %v1602
      %v1822 = vunpack.c.h.b16 %v1602
      %v1823 = vunpack.c.l.b16 %v1603
      %v1824 = vunpack.c.l.b16 %v1604
      %v1825 = vunpack.c.h.b16 %v1604
      %v1826 = vunpack.c.l.b16 %v1605
      %v1827 = vunpack.c.l.b16 %v1606
      %v1828 = vunpack.c.h.b16 %v1606
      %v1829 = vunpack.c.l.b16 %v1607
      %v1830 = vunpack.c.l.b16 %v1608
      %v1831 = vunpack.c.h.b16 %v1608
      %v1832 = vunpack.c.l.b16 %v1609
      %v1833 = vunpack.c.l.b16 %v1610
      %v1834 = vunpack.c.h.b16 %v1610
      %v1835 = vunpack.c.l.b16 %v1611
      %v1836 = vunpack.c.l.b16 %v1612
      %v1837 = vunpack.c.h.b16 %v1612
      %v1838 = vunpack.c.l.b16 %v1613
      %v1839 = vunpack.c.l.b16 %v1614
      %v1840 = vunpack.c.h.b16 %v1614
      %v1841 = vunpack.c.l.b16 %v1615
      %v1842 = vunpack.c.l.b16 %v1616
      %v1843 = vunpack.c.h.b16 %v1616
      %v1844 = vunpack.c.l.b16 %v1617
      %v1845 = vunpack.c.l.b16 %v1618
      %v1846 = vunpack.c.h.b16 %v1618
      %v1847 = vunpack.c.l.b16 %v1619
      %v1848 = vunpack.c.l.b16 %v1620
      %v1849 = vunpack.c.h.b16 %v1620
      %v1850 = vunpack.c.l.b16 %v1621
      %v1851 = vunpack.c.l.b16 %v1622
      %v1852 = vunpack.c.h.b16 %v1622
      %v1853 = vunpack.c.l.b16 %v1623
      %v1854 = vunpack.c.l.b16 %v1624
      %v1855 = vunpack.c.h.b16 %v1624
      %v1856 = vunpack.c.l.b16 %v1625
      %v1857 = vunpack.c.l.b16 %v1626
      %v1858 = vunpack.c.h.b16 %v1626
      %v1859 = vunpack.c.l.b16 %v1627
      %v1860 = vunpack.c.l.b16 %v1628
      %v1861 = vunpack.c.h.b16 %v1628
      %v1862 = vunpack.c.l.b16 %v1629
      %v1863 = vunpack.c.l.b16 %v1630
      %v1864 = vunpack.c.h.b16 %v1630
      %v1865 = vunpack.c.l.b16 %v1631
      %v1866 = vunpack.c.l.b16 %v1632
      %v1867 = vunpack.c.h.b16 %v1632
      %v1868 = vunpack.c.l.b16 %v1633
      %v1869 = vunpack.c.l.b16 %v1634
      %v1870 = vunpack.c.h.b16 %v1634
      %v1871 = vunpack.c.l.b16 %v1635
      %v1872 = vunpack.c.l.b16 %v1636
      %v1873 = vunpack.c.h.b16 %v1636
      %v1874 = vunpack.c.l.b16 %v1637
      %v1875 = vunpack.c.l.b16 %v1638
      %v1876 = vunpack.c.h.b16 %v1638
      %v1877 = vunpack.c.l.b16 %v1639
      %v1878 = vunpack.c.l.b16 %v1640
      %v1879 = vunpack.c.h.b16 %v1640
      %v1880 = vunpack.c.l.b16 %v1641
      %v1881 = vunpack.c.l.b16 %v1642
      %v1882 = vunpack.c.h.b16 %v1642
      %v1883 = vunpack.c.l.b16 %v1643
      %v1884 = vunpack.c.l.b16 %v1644
      %v1885 = vunpack.c.h.b16 %v1644
      %v1886 = vunpack.c.l.b16 %v1645
      %v1887 = vunpack.c.l.b16 %v1646
      %v1888 = vunpack.c.h.b16 %v1646
      %v1889 = vunpack.c.l.b16 %v1647
      %v1890 = vunpack.c.l.b16 %v1648
      %v1891 = vunpack.c.h.b16 %v1648
      %v1892 = vunpack.c.l.b16 %v1649
      %v1893 = vunpack.c.l.b16 %v1650
      %v1894 = vunpack.c.h.b16 %v1650
      %v1895 = vunpack.c.l.b16 %v1651
      %v1896 = vunpack.c.l.b16 %v1652
      %v1897 = vunpack.c.h.b16 %v1652
      %v1898 = vunpack.c.l.b16 %v1653
      %v1899 = vunpack.c.l.b16 %v1654
      %v1900 = vunpack.c.h.b16 %v1654
      %v1901 = vunpack.c.l.b16 %v1655
      %v1902 = vunpack.c.l.b16 %v1656
      %v1903 = vunpack.c.h.b16 %v1656
      %v1904 = vunpack.c.l.b16 %v1657
      %v1905 = vunpack.c.l.b16 %v1658
      %v1906 = vunpack.c.h.b16 %v1658
      %v1907 = vunpack.c.l.b16 %v1659
      %v1908 = vunpack.c.l.b16 %v1660
      %v1909 = vunpack.c.h.b16 %v1660
      %v1910 = vunpack.c.l.b16 %v1661
      %v1911 = vunpack.c.l.b16 %v1662
      %v1912 = vunpack.c.h.b16 %v1662
      %v1913 = vunpack.c.l.b16 %v1663
      %v1914 = vunpack.c.l.b16 %v1664
      %v1915 = vunpack.c.h.b16 %v1664
      %v1916 = vunpack.c.l.b16 %v1665
      %v1917 = vunpack.c.l.b16 %v1666
      %v1918 = vunpack.c.h.b16 %v1666
      %v1919 = vunpack.c.l.b16 %v1667
      %v1920 = vunpack.c.l.b16 %v1668
      %v1921 = vunpack.c.h.b16 %v1668
      %v1922 = vunpack.c.l.b16 %v1669
      %v1923 = vunpack.c.l.b16 %v1670
      %v1924 = vunpack.c.h.b16 %v1670
      %v1925 = vunpack.c.l.b16 %v1671
      %v1926 = vunpack.c.l.b16 %v1672
      %v1927 = vunpack.c.h.b16 %v1672
      %v1928 = vunpack.c.l.b16 %v1673
      %v1929 = vunpack.c.l.b16 %v1674
      %v1930 = vunpack.c.h.b16 %v1674
      %v1931 = vunpack.c.l.b16 %v1675
      %v1932 = vunpack.c.l.b16 %v1676
      %v1933 = vunpack.c.h.b16 %v1676
      %v1934 = vunpack.c.l.b16 %v1677
      %v1935 = vunpack.c.l.b16 %v1678
      %v1936 = vunpack.c.h.b16 %v1678
      %v1937 = vunpack.c.l.b16 %v1679
      %v1938 = vunpack.c.l.b16 %v1680
      %v1939 = vunpack.c.h.b16 %v1680
      %v1940 = vunpack.c.l.b16 %v1681
      %v1941 = vunpack.c.l.b16 %v1682
      %v1942 = vunpack.c.h.b16 %v1682
      %v1943 = vunpack.c.l.b16 %v1683
      %v1944 = vunpack.c.l.b16 %v1684
      %v1945 = vunpack.c.h.b16 %v1684
      %v1946 = vunpack.c.l.b16 %v1685
      %v1947 = vunpack.c.l.b16 %v1686
      %v1948 = vunpack.c.h.b16 %v1686
      %v1949 = vunpack.c.l.b16 %v1687
      %v1950 = vunpack.c.l.b16 %v1688
      %v1951 = vunpack.c.h.b16 %v1688
      %v1952 = vunpack.c.l.b16 %v1689
      %v1953 = vunpack.c.l.b16 %v1690
      %v1954 = vunpack.c.h.b16 %v1690
      %v1955 = vunpack.c.l.b16 %v1691
      %v1956 = vunpack.c.l.b16 %v1692
      %v1957 = vunpack.c.h.b16 %v1692
      %v1958 = vunpack.c.l.b16 %v1693
      %v1959 = vunpack.c.l.b16 %v1694
      %v1960 = vunpack.c.h.b16 %v1694
      %v1961 = vunpack.c.l.b16 %v1695
      %v1962 = vunpack.c.l.b16 %v1696
      %v1963 = vunpack.c.h.b16 %v1696
      %v1964 = vunpack.c.l.b16 %v1697
      %v1965 = vpack.c.b16 %v1824, %v1821
      %v1966 = vpack.c.b16 %v1825, %v1822
      %v1967 = vpack.c.b16 %v1826, %v1823
      %v1968 = vpack.c.b16 %v1830, %v1827
      %v1969 = vpack.c.b16 %v1831, %v1828
      %v1970 = vpack.c.b16 %v1832, %v1829
      %v1971 = vpack.c.b16 %v1836, %v1833
      %v1972 = vpack.c.b16 %v1837, %v1834
      %v1973 = vpack.c.b16 %v1838, %v1835
      %v1974 = vpack.c.b16 %v1842, %v1839
      %v1975 = vpack.c.b16 %v1843, %v1840
      %v1976 = vpack.c.b16 %v1844, %v1841
      %v1977 = vpack.c.b16 %v1848, %v1845
      %v1978 = vpack.c.b16 %v1849, %v1846
      %v1979 = vpack.c.b16 %v1850, %v1847
      %v1980 = vpack.c.b16 %v1854, %v1851
      %v1981 = vpack.c.b16 %v1855, %v1852
      %v1982 = vpack.c.b16 %v1856, %v1853
      %v1983 = vpack.c.b16 %v1860, %v1857
      %v1984 = vpack.c.b16 %v1861, %v1858
      %v1985 = vpack.c.b16 %v1862, %v1859
      %v1986 = vpack.c.b16 %v1866, %v1863
      %v1987 = vpack.c.b16 %v1867, %v1864
      %v1988 = vpack.c.b16 %v1868, %v1865
      %v1989 = vpack.c.b16 %v1872, %v1869
      %v1990 = vpack.c.b16 %v1873, %v1870
      %v1991 = vpack.c.b16 %v1874, %v1871
      %v1992 = vpack.c.b16 %v1878, %v1875
      %v1993 = vpack.c.b16 %v1879, %v1876
      %v1994 = vpack.c.b16 %v1880, %v1877
      %v1995 = vpack.c.b16 %v1884, %v1881
      %v1996 = vpack.c.b16 %v1885, %v1882
      %v1997 = vpack.c.b16 %v1886, %v1883
      %v1998 = vpack.c.b16 %v1890, %v1887
      %v1999 = vpack.c.b16 %v1891, %v1888
      %v2000 = vpack.c.b16 %v1892, %v1889
      %v2001 = vpack.c.b16 %v1896, %v1893
      %v2002 = vpack.c.b16 %v1897, %v1894
      %v2003 = vpack.c.b16 %v1898, %v1895
      %v2004 = vpack.c.b16 %v1902, %v1899
      %v2005 = vpack.c.b16 %v1903, %v1900
      %v2006 = vpack.c.b16 %v1904, %v1901
      %v2007 = vpack.c.b16 %v1908, %v1905
      %v2008 = vpack.c.b16 %v1909, %v1906
      %v2009 = vpack.c.b16 %v1910, %v1907
      %v2010 = vpack.c.b16 %v1914, %v1911
      %v2011 = vpack.c.b16 %v1915, %v1912
      %v2012 = vpack.c.b16 %v1916, %v1913
      %v2013 = vpack.c.b16 %v1920, %v1917
      %v2014 = vpack.c.b16 %v1921, %v1918
      %v2015 = vpack.c.b16 %v1922, %v1919
      %v2016 = vpack.c.b16 %v1926, %v1923
      %v2017 = vpack.c.b16 %v1927, %v1924
      %v2018 = vpack.c.b16 %v1928, %v1925
      %v2019 = vpack.c.b16 %v1932, %v1929
      %v2020 = vpack.c.b16 %v1933, %v1930
      %v2021 = vpack.c.b16 %v1934, %v1931
      %v2022 = vpack.c.b16 %v1938, %v1935
      %v2023 = vpack.c.b16 %v1939, %v1936
      %v2024 = vpack.c.b16 %v1940, %v1937
      %v2025 = vpack.c.b16 %v1944, %v1941
      %v2026 = vpack.c.b16 %v1945, %v1942
      %v2027 = vpack.c.b16 %v1946, %v1943
      %v2028 = vpack.c.b16 %v1950, %v1947
      %v2029 = vpack.c.b16 %v1951, %v1948
      %v2030 = vpack.c.b16 %v1952, %v1949
      %v2031 = vpack.c.b16 %v1956, %v1953
      %v2032 = vpack.c.b16 %v1957, %v1954
      %v2033 = vpack.c.b16 %v1958, %v1955
      %v2034 = vpack.c.b16 %v1962, %v1959
      %v2035 = vpack.c.b16 %v1963, %v1960
      %v2036 = vpack.c.b16 %v1964, %v1961
      %2109 = vmatprep.subr.bf16.mxu0 %v1966
      %2110 = vmatpush1.bf16.msra.mxu0 %v1965
      %2111 = vmatprep.subr.bf16.mxu0 %v1969
      %2112 = vmatpush1.bf16.msra.mxu0 %v1968
      %2113 = vmatprep.subr.bf16.mxu0 %v1972
      %2114 = vmatpush1.bf16.msra.mxu0 %v1971
      %2115 = vmatprep.subr.bf16.mxu0 %v1975
      %2116 = vmatpush1.bf16.msra.mxu0 %v1974
      %2117 = vmatprep.subr.bf16.mxu0 %v1978
      %2118 = vmatpush1.bf16.msra.mxu0 %v1977
      %2119 = vmatprep.subr.bf16.mxu0 %v1981
      %2120 = vmatpush1.bf16.msra.mxu0 %v1980
      %2121 = vmatprep.subr.bf16.mxu0 %v1984
      %2122 = vmatpush1.bf16.msra.mxu0 %v1983
      %2123 = vmatprep.subr.bf16.mxu0 %v1987
      %2124 = vmatpush1.bf16.msra.mxu0 %v1986
      %2125 = vmatprep.subr.bf16.mxu0 %v1990
      %2126 = vmatpush1.bf16.msra.mxu0 %v1989
      %2127 = vmatprep.subr.bf16.mxu0 %v1993
      %2128 = vmatpush1.bf16.msra.mxu0 %v1992
      %2129 = vmatprep.subr.bf16.mxu0 %v1996
      %2130 = vmatpush1.bf16.msra.mxu0 %v1995
      %2131 = vmatprep.subr.bf16.mxu0 %v1999
      %2132 = vmatpush1.bf16.msra.mxu0 %v1998
      %2133 = vmatprep.subr.bf16.mxu0 %v2002
      %2134 = vmatpush1.bf16.msra.mxu0 %v2001
      %2135 = vmatprep.subr.bf16.mxu0 %v2005
      %2136 = vmatpush1.bf16.msra.mxu0 %v2004
      %2137 = vmatprep.subr.bf16.mxu0 %v2008
      %2138 = vmatpush1.bf16.msra.mxu0 %v2007
      %2139 = vmatprep.subr.bf16.mxu0 %v2011
      %2140 = vmatpush1.bf16.msra.mxu0 %v2010
      %2141 = vmatprep.mubr.bf16.mxu0 %v1720
      %2142 = vmatmul.mubr.bf16.gmra.mrb[0].mxu0 %v1713
      %v2143 = vpop.f32.mrb[0].mxu0
      %v2144 = vadd.f32 0.0, %v2143
      %v2145 = vpop.f32.mrb[0].mxu0
      %v2146 = vadd.f32 0.0, %v2145
      %v2147 = vpop.f32.mrb[0].mxu0
      %v2148 = vpop.f32.mrb[0].mxu0
      %2149 = vdwg.mxu0
      %2150 = vmatprep.subr.bf16.mxu0 %v2014
      %2151 = vmatpush1.bf16.msra.mxu0 %v2013
      %2152 = vmatprep.subr.bf16.mxu0 %v2017
      %2153 = vmatpush1.bf16.msra.mxu0 %v2016
      %2154 = vmatprep.subr.bf16.mxu0 %v2020
      %2155 = vmatpush1.bf16.msra.mxu0 %v2019
      %2156 = vmatprep.subr.bf16.mxu0 %v2023
      %2157 = vmatpush1.bf16.msra.mxu0 %v2022
      %2158 = vmatprep.subr.bf16.mxu0 %v2026
      %2159 = vmatpush1.bf16.msra.mxu0 %v2025
      %2160 = vmatprep.subr.bf16.mxu0 %v2029
      %2161 = vmatpush1.bf16.msra.mxu0 %v2028
      %2162 = vmatprep.subr.bf16.mxu0 %v2032
      %2163 = vmatpush1.bf16.msra.mxu0 %v2031
      %2164 = vmatprep.subr.bf16.mxu0 %v2035
      %2165 = vmatpush1.bf16.msra.mxu0 %v2034
      %2166 = vmatprep.subr.bf16.mxu0 0
      %2167 = vmatpush1.bf16.msra.mxu0 0
      %2168 = vmatprep.subr.bf16.mxu0 0
      %2169 = vmatpush1.bf16.msra.mxu0 0
      %2170 = vmatprep.subr.bf16.mxu0 0
      %2171 = vmatpush1.bf16.msra.mxu0 0
      %2172 = vmatprep.subr.bf16.mxu0 0
      %2173 = vmatpush1.bf16.msra.mxu0 0
      %2174 = vmatprep.subr.bf16.mxu0 0
      %2175 = vmatpush1.bf16.msra.mxu0 0
      %2176 = vmatprep.subr.bf16.mxu0 0
      %2177 = vmatpush1.bf16.msra.mxu0 0
      %2178 = vmatprep.subr.bf16.mxu0 0
      %2179 = vmatpush1.bf16.msra.mxu0 0
      %2180 = vmatprep.subr.bf16.mxu0 0
      %2181 = vmatpush1.bf16.msra.mxu0 0
      %2182 = vmatprep.mubr.bf16.mxu0 0
      %2183 = vmatmul.mubr.bf16.gmra.mrb[0].mxu0 %v1721
      %v2184 = vpop.f32.mrb[0].mxu0
      %v2185 = vadd.f32 %v2144, %v2184
      %v2186 = vpop.f32.mrb[0].mxu0
      %v2187 = vadd.f32 %v2146, %v2186
      %v2188 = vpop.f32.mrb[0].mxu0
      %v2189 = vpop.f32.mrb[0].mxu0
      %2190 = vdwg.mxu0
      %2191 = vmatprep.subr.bf16.mxu0 0
      %2192 = vmatpush1.bf16.msra.mxu0 %v1967
      %2193 = vmatprep.subr.bf16.mxu0 0
      %2194 = vmatpush1.bf16.msra.mxu0 %v1970
      %2195 = vmatprep.subr.bf16.mxu0 0
      %2196 = vmatpush1.bf16.msra.mxu0 %v1973
      %2197 = vmatprep.subr.bf16.mxu0 0
      %2198 = vmatpush1.bf16.msra.mxu0 %v1976
      %2199 = vmatprep.subr.bf16.mxu0 0
      %2200 = vmatpush1.bf16.msra.mxu0 %v1979
      %2201 = vmatprep.subr.bf16.mxu0 0
      %2202 = vmatpush1.bf16.msra.mxu0 %v1982
      %2203 = vmatprep.subr.bf16.mxu0 0
      %2204 = vmatpush1.bf16.msra.mxu0 %v1985
      %2205 = vmatprep.subr.bf16.mxu0 0
      %2206 = vmatpush1.bf16.msra.mxu0 %v1988
      %2207 = vmatprep.subr.bf16.mxu0 0
      %2208 = vmatpush1.bf16.msra.mxu0 %v1991
      %2209 = vmatprep.subr.bf16.mxu0 0
      %2210 = vmatpush1.bf16.msra.mxu0 %v1994
      %2211 = vmatprep.subr.bf16.mxu0 0
      %2212 = vmatpush1.bf16.msra.mxu0 %v1997
      %2213 = vmatprep.subr.bf16.mxu0 0
      %2214 = vmatpush1.bf16.msra.mxu0 %v2000
      %2215 = vmatprep.subr.bf16.mxu0 0
      %2216 = vmatpush1.bf16.msra.mxu0 %v2003
      %2217 = vmatprep.subr.bf16.mxu0 0
      %2218 = vmatpush1.bf16.msra.mxu0 %v2006
      %2219 = vmatprep.subr.bf16.mxu0 0
      %2220 = vmatpush1.bf16.msra.mxu0 %v2009
      %2221 = vmatprep.subr.bf16.mxu0 0
      %2222 = vmatpush1.bf16.msra.mxu0 %v2012
      %2223 = vmatprep.mubr.bf16.mxu0 %v1720
      %2224 = vmatmul.mubr.bf16.gmra.mrb[0].mxu0 %v1713
      %v2225 = vpop.f32.mrb[0].mxu0
      %v2226 = vadd.f32 0.0, %v2225
      %v2227 = vpop.f32.mrb[0].mxu0
      %v2228 = vpop.f32.mrb[0].mxu0
      %v2229 = vpop.f32.mrb[0].mxu0
      %2230 = vdwg.mxu0
      %2231 = vmatprep.subr.bf16.mxu0 0
      %2232 = vmatpush1.bf16.msra.mxu0 %v2015
      %2233 = vmatprep.subr.bf16.mxu0 0
      %2234 = vmatpush1.bf16.msra.mxu0 %v2018
      %2235 = vmatprep.subr.bf16.mxu0 0
      %2236 = vmatpush1.bf16.msra.mxu0 %v2021
      %2237 = vmatprep.subr.bf16.mxu0 0
      %2238 = vmatpush1.bf16.msra.mxu0 %v2024
      %2239 = vmatprep.subr.bf16.mxu0 0
      %2240 = vmatpush1.bf16.msra.mxu0 %v2027
      %2241 = vmatprep.subr.bf16.mxu0 0
      %2242 = vmatpush1.bf16.msra.mxu0 %v2030
      %2243 = vmatprep.subr.bf16.mxu0 0
      %2244 = vmatpush1.bf16.msra.mxu0 %v2033
      %2245 = vmatprep.subr.bf16.mxu0 0
      %2246 = vmatpush1.bf16.msra.mxu0 %v2036
      %2247 = vmatprep.subr.bf16.mxu0 0
      %2248 = vmatpush1.bf16.msra.mxu0 0
      %2249 = vmatprep.subr.bf16.mxu0 0
      %2250 = vmatpush1.bf16.msra.mxu0 0
      %2251 = vmatprep.subr.bf16.mxu0 0
      %2252 = vmatpush1.bf16.msra.mxu0 0
      %2253 = vmatprep.subr.bf16.mxu0 0
      %2254 = vmatpush1.bf16.msra.mxu0 0
      %2255 = vmatprep.subr.bf16.mxu0 0
      %2256 = vmatpush1.bf16.msra.mxu0 0
      %2257 = vmatprep.subr.bf16.mxu0 0
      %2258 = vmatpush1.bf16.msra.mxu0 0
      %2259 = vmatprep.subr.bf16.mxu0 0
      %2260 = vmatpush1.bf16.msra.mxu0 0
      %2261 = vmatprep.subr.bf16.mxu0 0
      %2262 = vmatpush1.bf16.msra.mxu0 0
      %2263 = vmatprep.mubr.bf16.mxu0 0
      %2264 = vmatmul.mubr.bf16.gmra.mrb[0].mxu0 %v1721
      %v2265 = vpop.f32.mrb[0].mxu0
      %v2266 = vadd.f32 %v2226, %v2265
      %v2267 = vpop.f32.mrb[0].mxu0
      %v2268 = vpop.f32.mrb[0].mxu0
      %v2269 = vpop.f32.mrb[0].mxu0
      %2270 = vdwg.mxu0
      %v2271 = vadd.f32 %v1496, %v2185
      %v2272 = vadd.f32 %v1498, %v2187
      %v2273 = vadd.f32 %v1577, %v2266
      %v2274 = vld [vmem:[%s1582] sm:$0x3f]
      %v2275 = vld [vmem:[%s1582 + $0x6] sm:$0x3f]
      %v2279 = vunpack.c.l.s4 1966171168
      %v2280 = vunpack.c.0.s8 %v2279
      %v2281 = vlaneseq
      %v2282 = vshrl.u32 %v2281, 7
      %v2283 = vsub.s32 %v2280, %v2282
      %v2284 = vrot.slane %v2274, %v2283
      %v2285 = vcombine.high %v2284, %v2284
      %v2287 = vunpack.c.l.s4 1966171168
      %v2288 = vunpack.c.0.s8 %v2287
      %v2289 = vlaneseq
      %v2290 = vshrl.u32 %v2289, 7
      %v2291 = vsub.s32 %v2288, %v2290
      %v2292 = vrot.slane %v2275, %v2291
      %v2293 = vcombine.high %v2292, %v2292
      %v2295 = vshrl.u32 %v2284, 16
      %v2297 = vrot.slane %v2295, 7
      %v2298 = vrot.slane %v2297, 1
      %v2300 = vshll.u32 %v2285, 16
      %v2302 = vsel %vm320, %v2298, %v2300
      %v2304 = vshrl.u32 %v2292, 16
      %v2306 = vrot.slane %v2304, 7
      %v2307 = vrot.slane %v2306, 1
      %v2309 = vshll.u32 %v2293, 16
      %v2311 = vsel %vm320, %v2307, %v2309
      %s2312 = scalar_lea.vmem %s1, 1728
      %v2313 = vld [vmem:[%s2312] sm:$0xff]
      %v2314 = vld [vmem:[%s2312 + $0x8] sm:$0xf]
      %v2315 = vld [vmem:[%s2312 + $0xc] sm:$0xff]
      %v2316 = vld [vmem:[%s2312 + $0x14] sm:$0xf]
      %v2317 = vld [vmem:[%s2312 + $0x18] sm:$0xff]
      %v2318 = vld [vmem:[%s2312 + $0x20] sm:$0xf]
      %v2319 = vld [vmem:[%s2312 + $0x24] sm:$0xff]
      %v2320 = vld [vmem:[%s2312 + $0x2c] sm:$0xf]
      %v2321 = vld [vmem:[%s2312 + $0x30] sm:$0xff]
      %v2322 = vld [vmem:[%s2312 + $0x38] sm:$0xf]
      %v2323 = vld [vmem:[%s2312 + $0x3c] sm:$0xff]
      %v2324 = vld [vmem:[%s2312 + $0x44] sm:$0xf]
      %v2325 = vld [vmem:[%s2312 + $0x48] sm:$0xff]
      %v2326 = vld [vmem:[%s2312 + $0x50] sm:$0xf]
      %v2327 = vld [vmem:[%s2312 + $0x54] sm:$0xff]
      %v2328 = vld [vmem:[%s2312 + $0x5c] sm:$0xf]
      %v2329 = vld [vmem:[%s2312 + $0x60] sm:$0xff]
      %v2330 = vld [vmem:[%s2312 + $0x68] sm:$0xf]
      %v2331 = vld [vmem:[%s2312 + $0x6c] sm:$0xff]
      %v2332 = vld [vmem:[%s2312 + $0x74] sm:$0xf]
      %v2333 = vld [vmem:[%s2312 + $0x78] sm:$0xff]
      %v2334 = vld [vmem:[%s2312 + $0x80] sm:$0xf]
      %v2335 = vld [vmem:[%s2312 + $0x84] sm:$0xff]
      %v2336 = vld [vmem:[%s2312 + $0x8c] sm:$0xf]
      %v2337 = vld [vmem:[%s2312 + $0x90] sm:$0xff]
      %v2338 = vld [vmem:[%s2312 + $0x98] sm:$0xf]
      %v2339 = vld [vmem:[%s2312 + $0x9c] sm:$0xff]
      %v2340 = vld [vmem:[%s2312 + $0xa4] sm:$0xf]
      %v2341 = vld [vmem:[%s2312 + $0xa8] sm:$0xff]
      %v2342 = vld [vmem:[%s2312 + $0xb0] sm:$0xf]
      %v2343 = vld [vmem:[%s2312 + $0xb4] sm:$0xff]
      %v2344 = vld [vmem:[%s2312 + $0xbc] sm:$0xf]
      %v2345 = vld [vmem:[%s2312 + $0xc0] sm:$0xff]
      %v2346 = vld [vmem:[%s2312 + $0xc8] sm:$0xf]
      %v2347 = vld [vmem:[%s2312 + $0xcc] sm:$0xff]
      %v2348 = vld [vmem:[%s2312 + $0xd4] sm:$0xf]
      %v2349 = vld [vmem:[%s2312 + $0xd8] sm:$0xff]
      %v2350 = vld [vmem:[%s2312 + $0xe0] sm:$0xf]
      %v2351 = vld [vmem:[%s2312 + $0xe4] sm:$0xff]
      %v2352 = vld [vmem:[%s2312 + $0xec] sm:$0xf]
      %v2353 = vld [vmem:[%s2312 + $0xf0] sm:$0xff]
      %v2354 = vld [vmem:[%s2312 + $0xf8] sm:$0xf]
      %v2355 = vld [vmem:[%s2312 + $0xfc] sm:$0xff]
      %v2356 = vld [vmem:[%s2312 + $0x104] sm:$0xf]
      %v2357 = vld [vmem:[%s2312 + $0x108] sm:$0xff]
      %v2358 = vld [vmem:[%s2312 + $0x110] sm:$0xf]
      %v2359 = vld [vmem:[%s2312 + $0x114] sm:$0xff]
      %v2360 = vld [vmem:[%s2312 + $0x11c] sm:$0xf]
      %v2361 = vld [vmem:[%s2312 + $0x120] sm:$0xff]
      %v2362 = vld [vmem:[%s2312 + $0x128] sm:$0xf]
      %v2363 = vld [vmem:[%s2312 + $0x12c] sm:$0xff]
      %v2364 = vld [vmem:[%s2312 + $0x134] sm:$0xf]
      %v2365 = vld [vmem:[%s2312 + $0x138] sm:$0xff]
      %v2366 = vld [vmem:[%s2312 + $0x140] sm:$0xf]
      %v2367 = vld [vmem:[%s2312 + $0x144] sm:$0xff]
      %v2368 = vld [vmem:[%s2312 + $0x14c] sm:$0xf]
      %v2369 = vld [vmem:[%s2312 + $0x150] sm:$0xff]
      %v2370 = vld [vmem:[%s2312 + $0x158] sm:$0xf]
      %v2371 = vld [vmem:[%s2312 + $0x15c] sm:$0xff]
      %v2372 = vld [vmem:[%s2312 + $0x164] sm:$0xf]
      %v2373 = vld [vmem:[%s2312 + $0x168] sm:$0xff]
      %v2374 = vld [vmem:[%s2312 + $0x170] sm:$0xf]
      %v2375 = vld [vmem:[%s2312 + $0x174] sm:$0xff]
      %v2376 = vld [vmem:[%s2312 + $0x17c] sm:$0xf]
      %v2377 = vld [vmem:[%s2312 + $0x180] sm:$0xff]
      %v2378 = vld [vmem:[%s2312 + $0x188] sm:$0xf]
      %v2379 = vld [vmem:[%s2312 + $0x18c] sm:$0xff]
      %v2380 = vld [vmem:[%s2312 + $0x194] sm:$0xf]
      %v2381 = vld [vmem:[%s2312 + $0x198] sm:$0xff]
      %v2382 = vld [vmem:[%s2312 + $0x1a0] sm:$0xf]
      %v2383 = vld [vmem:[%s2312 + $0x1a4] sm:$0xff]
      %v2384 = vld [vmem:[%s2312 + $0x1ac] sm:$0xf]
      %v2385 = vld [vmem:[%s2312 + $0x1b0] sm:$0xff]
      %v2386 = vld [vmem:[%s2312 + $0x1b8] sm:$0xf]
      %v2387 = vld [vmem:[%s2312 + $0x1bc] sm:$0xff]
      %v2388 = vld [vmem:[%s2312 + $0x1c4] sm:$0xf]
      %v2389 = vld [vmem:[%s2312 + $0x1c8] sm:$0xff]
      %v2390 = vld [vmem:[%s2312 + $0x1d0] sm:$0xf]
      %v2391 = vld [vmem:[%s2312 + $0x1d4] sm:$0xff]
      %v2392 = vld [vmem:[%s2312 + $0x1dc] sm:$0xf]
      %v2393 = vld [vmem:[%s2312 + $0x1e0] sm:$0xff]
      %v2394 = vld [vmem:[%s2312 + $0x1e8] sm:$0xf]
      %v2395 = vld [vmem:[%s2312 + $0x1ec] sm:$0xff]
      %v2396 = vld [vmem:[%s2312 + $0x1f4] sm:$0xf]
      %v2397 = vld [vmem:[%s2312 + $0x1f8] sm:$0xff]
      %v2398 = vld [vmem:[%s2312 + $0x200] sm:$0xf]
      %v2399 = vld [vmem:[%s2312 + $0x204] sm:$0xff]
      %v2400 = vld [vmem:[%s2312 + $0x20c] sm:$0xf]
      %v2401 = vld [vmem:[%s2312 + $0x210] sm:$0xff]
      %v2402 = vld [vmem:[%s2312 + $0x218] sm:$0xf]
      %v2403 = vld [vmem:[%s2312 + $0x21c] sm:$0xff]
      %v2404 = vld [vmem:[%s2312 + $0x224] sm:$0xf]
      %v2405 = vld [vmem:[%s2312 + $0x228] sm:$0xff]
      %v2406 = vld [vmem:[%s2312 + $0x230] sm:$0xf]
      %v2407 = vld [vmem:[%s2312 + $0x234] sm:$0xff]
      %v2408 = vld [vmem:[%s2312 + $0x23c] sm:$0xf]
      %v2409 = vcombine.low %v2302, %v2311
      %v2411 = vunpack.c.l.s4 1966171168
      %v2412 = vunpack.c.0.s8 %v2411
      %v2413 = vlaneseq
      %v2414 = vshrl.u32 %v2413, 7
      %v2415 = vsub.s32 %v2412, %v2414
      %v2416 = vrot.slane %v2409, %v2415
      %v2417 = vcombine.high %v2416, %v2416
      %v2419 = vunpack.c.l.s4 1966171168
      %v2420 = vunpack.c.0.s8 %v2419
      %v2421 = vlaneseq
      %v2422 = vshrl.u32 %v2421, 7
      %v2423 = vsub.s32 %v2420, %v2422
      %v2424 = vrot.slane %v2416, %v2423
      %v2426 = vunpack.c.l.s4 1966171168
      %v2427 = vunpack.c.0.s8 %v2426
      %v2428 = vlaneseq
      %v2429 = vshrl.u32 %v2428, 7
      %v2430 = vsub.s32 %v2427, %v2429
      %v2431 = vrot.slane %v2417, %v2430
      %v2432 = vcombine.high %v2424, %v2424
      %v2532 = vunpack.c.l.b16 %v2313
      %v2533 = vunpack.c.h.b16 %v2313
      %v2534 = vunpack.c.l.b16 %v2314
      %v2535 = vunpack.c.l.b16 %v2315
      %v2536 = vunpack.c.h.b16 %v2315
      %v2537 = vunpack.c.l.b16 %v2316
      %v2538 = vunpack.c.l.b16 %v2317
      %v2539 = vunpack.c.h.b16 %v2317
      %v2540 = vunpack.c.l.b16 %v2318
      %v2541 = vunpack.c.l.b16 %v2319
      %v2542 = vunpack.c.h.b16 %v2319
      %v2543 = vunpack.c.l.b16 %v2320
      %v2544 = vunpack.c.l.b16 %v2321
      %v2545 = vunpack.c.h.b16 %v2321
      %v2546 = vunpack.c.l.b16 %v2322
      %v2547 = vunpack.c.l.b16 %v2323
      %v2548 = vunpack.c.h.b16 %v2323
      %v2549 = vunpack.c.l.b16 %v2324
      %v2550 = vunpack.c.l.b16 %v2325
      %v2551 = vunpack.c.h.b16 %v2325
      %v2552 = vunpack.c.l.b16 %v2326
      %v2553 = vunpack.c.l.b16 %v2327
      %v2554 = vunpack.c.h.b16 %v2327
      %v2555 = vunpack.c.l.b16 %v2328
      %v2556 = vunpack.c.l.b16 %v2329
      %v2557 = vunpack.c.h.b16 %v2329
      %v2558 = vunpack.c.l.b16 %v2330
      %v2559 = vunpack.c.l.b16 %v2331
      %v2560 = vunpack.c.h.b16 %v2331
      %v2561 = vunpack.c.l.b16 %v2332
      %v2562 = vunpack.c.l.b16 %v2333
      %v2563 = vunpack.c.h.b16 %v2333
      %v2564 = vunpack.c.l.b16 %v2334
      %v2565 = vunpack.c.l.b16 %v2335
      %v2566 = vunpack.c.h.b16 %v2335
      %v2567 = vunpack.c.l.b16 %v2336
      %v2568 = vunpack.c.l.b16 %v2337
      %v2569 = vunpack.c.h.b16 %v2337
      %v2570 = vunpack.c.l.b16 %v2338
      %v2571 = vunpack.c.l.b16 %v2339
      %v2572 = vunpack.c.h.b16 %v2339
      %v2573 = vunpack.c.l.b16 %v2340
      %v2574 = vunpack.c.l.b16 %v2341
      %v2575 = vunpack.c.h.b16 %v2341
      %v2576 = vunpack.c.l.b16 %v2342
      %v2577 = vunpack.c.l.b16 %v2343
      %v2578 = vunpack.c.h.b16 %v2343
      %v2579 = vunpack.c.l.b16 %v2344
      %v2580 = vunpack.c.l.b16 %v2345
      %v2581 = vunpack.c.h.b16 %v2345
      %v2582 = vunpack.c.l.b16 %v2346
      %v2583 = vunpack.c.l.b16 %v2347
      %v2584 = vunpack.c.h.b16 %v2347
      %v2585 = vunpack.c.l.b16 %v2348
      %v2586 = vunpack.c.l.b16 %v2349
      %v2587 = vunpack.c.h.b16 %v2349
      %v2588 = vunpack.c.l.b16 %v2350
      %v2589 = vunpack.c.l.b16 %v2351
      %v2590 = vunpack.c.h.b16 %v2351
      %v2591 = vunpack.c.l.b16 %v2352
      %v2592 = vunpack.c.l.b16 %v2353
      %v2593 = vunpack.c.h.b16 %v2353
      %v2594 = vunpack.c.l.b16 %v2354
      %v2595 = vunpack.c.l.b16 %v2355
      %v2596 = vunpack.c.h.b16 %v2355
      %v2597 = vunpack.c.l.b16 %v2356
      %v2598 = vunpack.c.l.b16 %v2357
      %v2599 = vunpack.c.h.b16 %v2357
      %v2600 = vunpack.c.l.b16 %v2358
      %v2601 = vunpack.c.l.b16 %v2359
      %v2602 = vunpack.c.h.b16 %v2359
      %v2603 = vunpack.c.l.b16 %v2360
      %v2604 = vunpack.c.l.b16 %v2361
      %v2605 = vunpack.c.h.b16 %v2361
      %v2606 = vunpack.c.l.b16 %v2362
      %v2607 = vunpack.c.l.b16 %v2363
      %v2608 = vunpack.c.h.b16 %v2363
      %v2609 = vunpack.c.l.b16 %v2364
      %v2610 = vunpack.c.l.b16 %v2365
      %v2611 = vunpack.c.h.b16 %v2365
      %v2612 = vunpack.c.l.b16 %v2366
      %v2613 = vunpack.c.l.b16 %v2367
      %v2614 = vunpack.c.h.b16 %v2367
      %v2615 = vunpack.c.l.b16 %v2368
      %v2616 = vunpack.c.l.b16 %v2369
      %v2617 = vunpack.c.h.b16 %v2369
      %v2618 = vunpack.c.l.b16 %v2370
      %v2619 = vunpack.c.l.b16 %v2371
      %v2620 = vunpack.c.h.b16 %v2371
      %v2621 = vunpack.c.l.b16 %v2372
      %v2622 = vunpack.c.l.b16 %v2373
      %v2623 = vunpack.c.h.b16 %v2373
      %v2624 = vunpack.c.l.b16 %v2374
      %v2625 = vunpack.c.l.b16 %v2375
      %v2626 = vunpack.c.h.b16 %v2375
      %v2627 = vunpack.c.l.b16 %v2376
      %v2628 = vunpack.c.l.b16 %v2377
      %v2629 = vunpack.c.h.b16 %v2377
      %v2630 = vunpack.c.l.b16 %v2378
      %v2631 = vunpack.c.l.b16 %v2379
      %v2632 = vunpack.c.h.b16 %v2379
      %v2633 = vunpack.c.l.b16 %v2380
      %v2634 = vunpack.c.l.b16 %v2381
      %v2635 = vunpack.c.h.b16 %v2381
      %v2636 = vunpack.c.l.b16 %v2382
      %v2637 = vunpack.c.l.b16 %v2383
      %v2638 = vunpack.c.h.b16 %v2383
      %v2639 = vunpack.c.l.b16 %v2384
      %v2640 = vunpack.c.l.b16 %v2385
      %v2641 = vunpack.c.h.b16 %v2385
      %v2642 = vunpack.c.l.b16 %v2386
      %v2643 = vunpack.c.l.b16 %v2387
      %v2644 = vunpack.c.h.b16 %v2387
      %v2645 = vunpack.c.l.b16 %v2388
      %v2646 = vunpack.c.l.b16 %v2389
      %v2647 = vunpack.c.h.b16 %v2389
      %v2648 = vunpack.c.l.b16 %v2390
      %v2649 = vunpack.c.l.b16 %v2391
      %v2650 = vunpack.c.h.b16 %v2391
      %v2651 = vunpack.c.l.b16 %v2392
      %v2652 = vunpack.c.l.b16 %v2393
      %v2653 = vunpack.c.h.b16 %v2393
      %v2654 = vunpack.c.l.b16 %v2394
      %v2655 = vunpack.c.l.b16 %v2395
      %v2656 = vunpack.c.h.b16 %v2395
      %v2657 = vunpack.c.l.b16 %v2396
      %v2658 = vunpack.c.l.b16 %v2397
      %v2659 = vunpack.c.h.b16 %v2397
      %v2660 = vunpack.c.l.b16 %v2398
      %v2661 = vunpack.c.l.b16 %v2399
      %v2662 = vunpack.c.h.b16 %v2399
      %v2663 = vunpack.c.l.b16 %v2400
      %v2664 = vunpack.c.l.b16 %v2401
      %v2665 = vunpack.c.h.b16 %v2401
      %v2666 = vunpack.c.l.b16 %v2402
      %v2667 = vunpack.c.l.b16 %v2403
      %v2668 = vunpack.c.h.b16 %v2403
      %v2669 = vunpack.c.l.b16 %v2404
      %v2670 = vunpack.c.l.b16 %v2405
      %v2671 = vunpack.c.h.b16 %v2405
      %v2672 = vunpack.c.l.b16 %v2406
      %v2673 = vunpack.c.l.b16 %v2407
      %v2674 = vunpack.c.h.b16 %v2407
      %v2675 = vunpack.c.l.b16 %v2408
      %v2676 = vpack.c.b16 %v2535, %v2532
      %v2677 = vpack.c.b16 %v2536, %v2533
      %v2678 = vpack.c.b16 %v2537, %v2534
      %v2679 = vpack.c.b16 %v2541, %v2538
      %v2680 = vpack.c.b16 %v2542, %v2539
      %v2681 = vpack.c.b16 %v2543, %v2540
      %v2682 = vpack.c.b16 %v2547, %v2544
      %v2683 = vpack.c.b16 %v2548, %v2545
      %v2684 = vpack.c.b16 %v2549, %v2546
      %v2685 = vpack.c.b16 %v2553, %v2550
      %v2686 = vpack.c.b16 %v2554, %v2551
      %v2687 = vpack.c.b16 %v2555, %v2552
      %v2688 = vpack.c.b16 %v2559, %v2556
      %v2689 = vpack.c.b16 %v2560, %v2557
      %v2690 = vpack.c.b16 %v2561, %v2558
      %v2691 = vpack.c.b16 %v2565, %v2562
      %v2692 = vpack.c.b16 %v2566, %v2563
      %v2693 = vpack.c.b16 %v2567, %v2564
      %v2694 = vpack.c.b16 %v2571, %v2568
      %v2695 = vpack.c.b16 %v2572, %v2569
      %v2696 = vpack.c.b16 %v2573, %v2570
      %v2697 = vpack.c.b16 %v2577, %v2574
      %v2698 = vpack.c.b16 %v2578, %v2575
      %v2699 = vpack.c.b16 %v2579, %v2576
      %v2700 = vpack.c.b16 %v2583, %v2580
      %v2701 = vpack.c.b16 %v2584, %v2581
      %v2702 = vpack.c.b16 %v2585, %v2582
      %v2703 = vpack.c.b16 %v2589, %v2586
      %v2704 = vpack.c.b16 %v2590, %v2587
      %v2705 = vpack.c.b16 %v2591, %v2588
      %v2706 = vpack.c.b16 %v2595, %v2592
      %v2707 = vpack.c.b16 %v2596, %v2593
      %v2708 = vpack.c.b16 %v2597, %v2594
      %v2709 = vpack.c.b16 %v2601, %v2598
      %v2710 = vpack.c.b16 %v2602, %v2599
      %v2711 = vpack.c.b16 %v2603, %v2600
      %v2712 = vpack.c.b16 %v2607, %v2604
      %v2713 = vpack.c.b16 %v2608, %v2605
      %v2714 = vpack.c.b16 %v2609, %v2606
      %v2715 = vpack.c.b16 %v2613, %v2610
      %v2716 = vpack.c.b16 %v2614, %v2611
      %v2717 = vpack.c.b16 %v2615, %v2612
      %v2718 = vpack.c.b16 %v2619, %v2616
      %v2719 = vpack.c.b16 %v2620, %v2617
      %v2720 = vpack.c.b16 %v2621, %v2618
      %v2721 = vpack.c.b16 %v2625, %v2622
      %v2722 = vpack.c.b16 %v2626, %v2623
      %v2723 = vpack.c.b16 %v2627, %v2624
      %v2724 = vpack.c.b16 %v2631, %v2628
      %v2725 = vpack.c.b16 %v2632, %v2629
      %v2726 = vpack.c.b16 %v2633, %v2630
      %v2727 = vpack.c.b16 %v2637, %v2634
      %v2728 = vpack.c.b16 %v2638, %v2635
      %v2729 = vpack.c.b16 %v2639, %v2636
      %v2730 = vpack.c.b16 %v2643, %v2640
      %v2731 = vpack.c.b16 %v2644, %v2641
      %v2732 = vpack.c.b16 %v2645, %v2642
      %v2733 = vpack.c.b16 %v2649, %v2646
      %v2734 = vpack.c.b16 %v2650, %v2647
      %v2735 = vpack.c.b16 %v2651, %v2648
      %v2736 = vpack.c.b16 %v2655, %v2652
      %v2737 = vpack.c.b16 %v2656, %v2653
      %v2738 = vpack.c.b16 %v2657, %v2654
      %v2739 = vpack.c.b16 %v2661, %v2658
      %v2740 = vpack.c.b16 %v2662, %v2659
      %v2741 = vpack.c.b16 %v2663, %v2660
      %v2742 = vpack.c.b16 %v2667, %v2664
      %v2743 = vpack.c.b16 %v2668, %v2665
      %v2744 = vpack.c.b16 %v2669, %v2666
      %v2745 = vpack.c.b16 %v2673, %v2670
      %v2746 = vpack.c.b16 %v2674, %v2671
      %v2747 = vpack.c.b16 %v2675, %v2672
      %2820 = vmatprep.subr.bf16.mxu0 %v2677
      %2821 = vmatpush1.bf16.msra.mxu0 %v2676
      %2822 = vmatprep.subr.bf16.mxu0 %v2680
      %2823 = vmatpush1.bf16.msra.mxu0 %v2679
      %2824 = vmatprep.subr.bf16.mxu0 %v2683
      %2825 = vmatpush1.bf16.msra.mxu0 %v2682
      %2826 = vmatprep.subr.bf16.mxu0 %v2686
      %2827 = vmatpush1.bf16.msra.mxu0 %v2685
      %2828 = vmatprep.subr.bf16.mxu0 %v2689
      %2829 = vmatpush1.bf16.msra.mxu0 %v2688
      %2830 = vmatprep.subr.bf16.mxu0 %v2692
      %2831 = vmatpush1.bf16.msra.mxu0 %v2691
      %2832 = vmatprep.subr.bf16.mxu0 %v2695
      %2833 = vmatpush1.bf16.msra.mxu0 %v2694
      %2834 = vmatprep.subr.bf16.mxu0 %v2698
      %2835 = vmatpush1.bf16.msra.mxu0 %v2697
      %2836 = vmatprep.subr.bf16.mxu0 %v2701
      %2837 = vmatpush1.bf16.msra.mxu0 %v2700
      %2838 = vmatprep.subr.bf16.mxu0 %v2704
      %2839 = vmatpush1.bf16.msra.mxu0 %v2703
      %2840 = vmatprep.subr.bf16.mxu0 %v2707
      %2841 = vmatpush1.bf16.msra.mxu0 %v2706
      %2842 = vmatprep.subr.bf16.mxu0 %v2710
      %2843 = vmatpush1.bf16.msra.mxu0 %v2709
      %2844 = vmatprep.subr.bf16.mxu0 %v2713
      %2845 = vmatpush1.bf16.msra.mxu0 %v2712
      %2846 = vmatprep.subr.bf16.mxu0 %v2716
      %2847 = vmatpush1.bf16.msra.mxu0 %v2715
      %2848 = vmatprep.subr.bf16.mxu0 %v2719
      %2849 = vmatpush1.bf16.msra.mxu0 %v2718
      %2850 = vmatprep.subr.bf16.mxu0 %v2722
      %2851 = vmatpush1.bf16.msra.mxu0 %v2721
      %2852 = vmatprep.mubr.bf16.mxu0 %v2431
      %2853 = vmatmul.mubr.bf16.gmra.mrb[0].mxu0 %v2424
      %v2854 = vpop.f32.mrb[0].mxu0
      %v2855 = vadd.f32 0.0, %v2854
      %v2856 = vpop.f32.mrb[0].mxu0
      %v2857 = vadd.f32 0.0, %v2856
      %v2858 = vpop.f32.mrb[0].mxu0
      %v2859 = vpop.f32.mrb[0].mxu0
      %2860 = vdwg.mxu0
      %2861 = vmatprep.subr.bf16.mxu0 %v2725
      %2862 = vmatpush1.bf16.msra.mxu0 %v2724
      %2863 = vmatprep.subr.bf16.mxu0 %v2728
      %2864 = vmatpush1.bf16.msra.mxu0 %v2727
      %2865 = vmatprep.subr.bf16.mxu0 %v2731
      %2866 = vmatpush1.bf16.msra.mxu0 %v2730
      %2867 = vmatprep.subr.bf16.mxu0 %v2734
      %2868 = vmatpush1.bf16.msra.mxu0 %v2733
      %2869 = vmatprep.subr.bf16.mxu0 %v2737
      %2870 = vmatpush1.bf16.msra.mxu0 %v2736
      %2871 = vmatprep.subr.bf16.mxu0 %v2740
      %2872 = vmatpush1.bf16.msra.mxu0 %v2739
      %2873 = vmatprep.subr.bf16.mxu0 %v2743
      %2874 = vmatpush1.bf16.msra.mxu0 %v2742
      %2875 = vmatprep.subr.bf16.mxu0 %v2746
      %2876 = vmatpush1.bf16.msra.mxu0 %v2745
      %2877 = vmatprep.subr.bf16.mxu0 0
      %2878 = vmatpush1.bf16.msra.mxu0 0
      %2879 = vmatprep.subr.bf16.mxu0 0
      %2880 = vmatpush1.bf16.msra.mxu0 0
      %2881 = vmatprep.subr.bf16.mxu0 0
      %2882 = vmatpush1.bf16.msra.mxu0 0
      %2883 = vmatprep.subr.bf16.mxu0 0
      %2884 = vmatpush1.bf16.msra.mxu0 0
      %2885 = vmatprep.subr.bf16.mxu0 0
      %2886 = vmatpush1.bf16.msra.mxu0 0
      %2887 = vmatprep.subr.bf16.mxu0 0
      %2888 = vmatpush1.bf16.msra.mxu0 0
      %2889 = vmatprep.subr.bf16.mxu0 0
      %2890 = vmatpush1.bf16.msra.mxu0 0
      %2891 = vmatprep.subr.bf16.mxu0 0
      %2892 = vmatpush1.bf16.msra.mxu0 0
      %2893 = vmatprep.mubr.bf16.mxu0 0
      %2894 = vmatmul.mubr.bf16.gmra.mrb[0].mxu0 %v2432
      %v2895 = vpop.f32.mrb[0].mxu0
      %v2896 = vadd.f32 %v2855, %v2895
      %v2897 = vpop.f32.mrb[0].mxu0
      %v2898 = vadd.f32 %v2857, %v2897
      %v2899 = vpop.f32.mrb[0].mxu0
      %v2900 = vpop.f32.mrb[0].mxu0
      %2901 = vdwg.mxu0
      %2902 = vmatprep.subr.bf16.mxu0 0
      %2903 = vmatpush1.bf16.msra.mxu0 %v2678
      %2904 = vmatprep.subr.bf16.mxu0 0
      %2905 = vmatpush1.bf16.msra.mxu0 %v2681
      %2906 = vmatprep.subr.bf16.mxu0 0
      %2907 = vmatpush1.bf16.msra.mxu0 %v2684
      %2908 = vmatprep.subr.bf16.mxu0 0
      %2909 = vmatpush1.bf16.msra.mxu0 %v2687
      %2910 = vmatprep.subr.bf16.mxu0 0
      %2911 = vmatpush1.bf16.msra.mxu0 %v2690
      %2912 = vmatprep.subr.bf16.mxu0 0
      %2913 = vmatpush1.bf16.msra.mxu0 %v2693
      %2914 = vmatprep.subr.bf16.mxu0 0
      %2915 = vmatpush1.bf16.msra.mxu0 %v2696
      %2916 = vmatprep.subr.bf16.mxu0 0
      %2917 = vmatpush1.bf16.msra.mxu0 %v2699
      %2918 = vmatprep.subr.bf16.mxu0 0
      %2919 = vmatpush1.bf16.msra.mxu0 %v2702
      %2920 = vmatprep.subr.bf16.mxu0 0
      %2921 = vmatpush1.bf16.msra.mxu0 %v2705
      %2922 = vmatprep.subr.bf16.mxu0 0
      %2923 = vmatpush1.bf16.msra.mxu0 %v2708
      %2924 = vmatprep.subr.bf16.mxu0 0
      %2925 = vmatpush1.bf16.msra.mxu0 %v2711
      %2926 = vmatprep.subr.bf16.mxu0 0
      %2927 = vmatpush1.bf16.msra.mxu0 %v2714
      %2928 = vmatprep.subr.bf16.mxu0 0
      %2929 = vmatpush1.bf16.msra.mxu0 %v2717
      %2930 = vmatprep.subr.bf16.mxu0 0
      %2931 = vmatpush1.bf16.msra.mxu0 %v2720
      %2932 = vmatprep.subr.bf16.mxu0 0
      %2933 = vmatpush1.bf16.msra.mxu0 %v2723
      %2934 = vmatprep.mubr.bf16.mxu0 %v2431
      %2935 = vmatmul.mubr.bf16.gmra.mrb[0].mxu0 %v2424
      %v2936 = vpop.f32.mrb[0].mxu0
      %v2937 = vadd.f32 0.0, %v2936
      %v2938 = vpop.f32.mrb[0].mxu0
      %v2939 = vpop.f32.mrb[0].mxu0
      %v2940 = vpop.f32.mrb[0].mxu0
      %2941 = vdwg.mxu0
      %2942 = vmatprep.subr.bf16.mxu0 0
      %2943 = vmatpush1.bf16.msra.mxu0 %v2726
      %2944 = vmatprep.subr.bf16.mxu0 0
      %2945 = vmatpush1.bf16.msra.mxu0 %v2729
      %2946 = vmatprep.subr.bf16.mxu0 0
      %2947 = vmatpush1.bf16.msra.mxu0 %v2732
      %2948 = vmatprep.subr.bf16.mxu0 0
      %2949 = vmatpush1.bf16.msra.mxu0 %v2735
      %2950 = vmatprep.subr.bf16.mxu0 0
      %2951 = vmatpush1.bf16.msra.mxu0 %v2738
      %2952 = vmatprep.subr.bf16.mxu0 0
      %2953 = vmatpush1.bf16.msra.mxu0 %v2741
      %2954 = vmatprep.subr.bf16.mxu0 0
      %2955 = vmatpush1.bf16.msra.mxu0 %v2744
      %2956 = vmatprep.subr.bf16.mxu0 0
      %2957 = vmatpush1.bf16.msra.mxu0 %v2747
      %2958 = vmatprep.subr.bf16.mxu0 0
      %2959 = vmatpush1.bf16.msra.mxu0 0
      %2960 = vmatprep.subr.bf16.mxu0 0
      %2961 = vmatpush1.bf16.msra.mxu0 0
      %2962 = vmatprep.subr.bf16.mxu0 0
      %2963 = vmatpush1.bf16.msra.mxu0 0
      %2964 = vmatprep.subr.bf16.mxu0 0
      %2965 = vmatpush1.bf16.msra.mxu0 0
      %2966 = vmatprep.subr.bf16.mxu0 0
      %2967 = vmatpush1.bf16.msra.mxu0 0
      %2968 = vmatprep.subr.bf16.mxu0 0
      %2969 = vmatpush1.bf16.msra.mxu0 0
      %2970 = vmatprep.subr.bf16.mxu0 0
      %2971 = vmatpush1.bf16.msra.mxu0 0
      %2972 = vmatprep.subr.bf16.mxu0 0
      %2973 = vmatpush1.bf16.msra.mxu0 0
      %2974 = vmatprep.mubr.bf16.mxu0 0
      %2975 = vmatmul.mubr.bf16.gmra.mrb[0].mxu0 %v2432
      %v2976 = vpop.f32.mrb[0].mxu0
      %v2977 = vadd.f32 %v2937, %v2976
      %v2978 = vpop.f32.mrb[0].mxu0
      %v2979 = vpop.f32.mrb[0].mxu0
      %v2980 = vpop.f32.mrb[0].mxu0
      %2981 = vdwg.mxu0
      %v2982 = vadd.f32 %v2271, %v2896
      %v2983 = vadd.f32 %v2272, %v2898
      %v2984 = vadd.f32 %v2273, %v2977
      %s2985 = scalar_lea.vmem %s165, 12
      %v2986 = vld [vmem:[%s2985] sm:$0x15]
      %v2987 = vld [vmem:[%s2985 + $0x6] sm:$0x15]
      %v2991 = vunpack.c.l.s4 1966171168
      %v2992 = vunpack.c.0.s8 %v2991
      %v2993 = vlaneseq
      %v2994 = vshrl.u32 %v2993, 7
      %v2995 = vsub.s32 %v2992, %v2994
      %v2996 = vrot.slane %v2986, %v2995
      %v2998 = vunpack.c.l.s4 1966171168
      %v2999 = vunpack.c.0.s8 %v2998
      %v3000 = vlaneseq
      %v3001 = vshrl.u32 %v3000, 7
      %v3002 = vsub.s32 %v2999, %v3001
      %v3003 = vrot.slane %v2987, %v3002
      %s3004 = scalar_lea.vmem %s1, 2304
      %v3005 = vld [vmem:[%s3004] sm:$0xff]
      %v3006 = vld [vmem:[%s3004 + $0x8] sm:$0xf]
      %v3007 = vld [vmem:[%s3004 + $0xc] sm:$0xff]
      %v3008 = vld [vmem:[%s3004 + $0x14] sm:$0xf]
      %v3009 = vld [vmem:[%s3004 + $0x18] sm:$0xff]
      %v3010 = vld [vmem:[%s3004 + $0x20] sm:$0xf]
      %v3011 = vld [vmem:[%s3004 + $0x24] sm:$0xff]
      %v3012 = vld [vmem:[%s3004 + $0x2c] sm:$0xf]
      %v3013 = vld [vmem:[%s3004 + $0x30] sm:$0xff]
      %v3014 = vld [vmem:[%s3004 + $0x38] sm:$0xf]
      %v3015 = vld [vmem:[%s3004 + $0x3c] sm:$0xff]
      %v3016 = vld [vmem:[%s3004 + $0x44] sm:$0xf]
      %v3017 = vld [vmem:[%s3004 + $0x48] sm:$0xff]
      %v3018 = vld [vmem:[%s3004 + $0x50] sm:$0xf]
      %v3019 = vld [vmem:[%s3004 + $0x54] sm:$0xff]
      %v3020 = vld [vmem:[%s3004 + $0x5c] sm:$0xf]
      %v3021 = vld [vmem:[%s3004 + $0x60] sm:$0xff]
      %v3022 = vld [vmem:[%s3004 + $0x68] sm:$0xf]
      %v3023 = vld [vmem:[%s3004 + $0x6c] sm:$0xff]
      %v3024 = vld [vmem:[%s3004 + $0x74] sm:$0xf]
      %v3025 = vld [vmem:[%s3004 + $0x78] sm:$0xff]
      %v3026 = vld [vmem:[%s3004 + $0x80] sm:$0xf]
      %v3027 = vld [vmem:[%s3004 + $0x84] sm:$0xff]
      %v3028 = vld [vmem:[%s3004 + $0x8c] sm:$0xf]
      %v3029 = vld [vmem:[%s3004 + $0x90] sm:$0xff]
      %v3030 = vld [vmem:[%s3004 + $0x98] sm:$0xf]
      %v3031 = vld [vmem:[%s3004 + $0x9c] sm:$0xff]
      %v3032 = vld [vmem:[%s3004 + $0xa4] sm:$0xf]
      %v3033 = vld [vmem:[%s3004 + $0xa8] sm:$0xff]
      %v3034 = vld [vmem:[%s3004 + $0xb0] sm:$0xf]
      %v3035 = vld [vmem:[%s3004 + $0xb4] sm:$0xff]
      %v3036 = vld [vmem:[%s3004 + $0xbc] sm:$0xf]
      %v3037 = vld [vmem:[%s3004 + $0xc0] sm:$0xff]
      %v3038 = vld [vmem:[%s3004 + $0xc8] sm:$0xf]
      %v3039 = vld [vmem:[%s3004 + $0xcc] sm:$0xff]
      %v3040 = vld [vmem:[%s3004 + $0xd4] sm:$0xf]
      %v3041 = vld [vmem:[%s3004 + $0xd8] sm:$0xff]
      %v3042 = vld [vmem:[%s3004 + $0xe0] sm:$0xf]
      %v3043 = vld [vmem:[%s3004 + $0xe4] sm:$0xff]
      %v3044 = vld [vmem:[%s3004 + $0xec] sm:$0xf]
      %v3045 = vld [vmem:[%s3004 + $0xf0] sm:$0xff]
      %v3046 = vld [vmem:[%s3004 + $0xf8] sm:$0xf]
      %v3047 = vld [vmem:[%s3004 + $0xfc] sm:$0xff]
      %v3048 = vld [vmem:[%s3004 + $0x104] sm:$0xf]
      %v3049 = vld [vmem:[%s3004 + $0x108] sm:$0xff]
      %v3050 = vld [vmem:[%s3004 + $0x110] sm:$0xf]
      %v3051 = vld [vmem:[%s3004 + $0x114] sm:$0xff]
      %v3052 = vld [vmem:[%s3004 + $0x11c] sm:$0xf]
      %v3053 = vld [vmem:[%s3004 + $0x120] sm:$0xff]
      %v3054 = vld [vmem:[%s3004 + $0x128] sm:$0xf]
      %v3055 = vld [vmem:[%s3004 + $0x12c] sm:$0xff]
      %v3056 = vld [vmem:[%s3004 + $0x134] sm:$0xf]
      %v3057 = vld [vmem:[%s3004 + $0x138] sm:$0xff]
      %v3058 = vld [vmem:[%s3004 + $0x140] sm:$0xf]
      %v3059 = vld [vmem:[%s3004 + $0x144] sm:$0xff]
      %v3060 = vld [vmem:[%s3004 + $0x14c] sm:$0xf]
      %v3061 = vld [vmem:[%s3004 + $0x150] sm:$0xff]
      %v3062 = vld [vmem:[%s3004 + $0x158] sm:$0xf]
      %v3063 = vld [vmem:[%s3004 + $0x15c] sm:$0xff]
      %v3064 = vld [vmem:[%s3004 + $0x164] sm:$0xf]
      %v3065 = vld [vmem:[%s3004 + $0x168] sm:$0xff]
      %v3066 = vld [vmem:[%s3004 + $0x170] sm:$0xf]
      %v3067 = vld [vmem:[%s3004 + $0x174] sm:$0xff]
      %v3068 = vld [vmem:[%s3004 + $0x17c] sm:$0xf]
      %v3069 = vld [vmem:[%s3004 + $0x180] sm:$0xff]
      %v3070 = vld [vmem:[%s3004 + $0x188] sm:$0xf]
      %v3071 = vld [vmem:[%s3004 + $0x18c] sm:$0xff]
      %v3072 = vld [vmem:[%s3004 + $0x194] sm:$0xf]
      %v3073 = vld [vmem:[%s3004 + $0x198] sm:$0xff]
      %v3074 = vld [vmem:[%s3004 + $0x1a0] sm:$0xf]
      %v3075 = vld [vmem:[%s3004 + $0x1a4] sm:$0xff]
      %v3076 = vld [vmem:[%s3004 + $0x1ac] sm:$0xf]
      %v3077 = vld [vmem:[%s3004 + $0x1b0] sm:$0xff]
      %v3078 = vld [vmem:[%s3004 + $0x1b8] sm:$0xf]
      %v3079 = vld [vmem:[%s3004 + $0x1bc] sm:$0xff]
      %v3080 = vld [vmem:[%s3004 + $0x1c4] sm:$0xf]
      %v3081 = vld [vmem:[%s3004 + $0x1c8] sm:$0xff]
      %v3082 = vld [vmem:[%s3004 + $0x1d0] sm:$0xf]
      %v3083 = vld [vmem:[%s3004 + $0x1d4] sm:$0xff]
      %v3084 = vld [vmem:[%s3004 + $0x1dc] sm:$0xf]
      %v3085 = vld [vmem:[%s3004 + $0x1e0] sm:$0xff]
      %v3086 = vld [vmem:[%s3004 + $0x1e8] sm:$0xf]
      %v3087 = vld [vmem:[%s3004 + $0x1ec] sm:$0xff]
      %v3088 = vld [vmem:[%s3004 + $0x1f4] sm:$0xf]
      %v3089 = vld [vmem:[%s3004 + $0x1f8] sm:$0xff]
      %v3090 = vld [vmem:[%s3004 + $0x200] sm:$0xf]
      %v3091 = vld [vmem:[%s3004 + $0x204] sm:$0xff]
      %v3092 = vld [vmem:[%s3004 + $0x20c] sm:$0xf]
      %v3093 = vld [vmem:[%s3004 + $0x210] sm:$0xff]
      %v3094 = vld [vmem:[%s3004 + $0x218] sm:$0xf]
      %v3095 = vld [vmem:[%s3004 + $0x21c] sm:$0xff]
      %v3096 = vld [vmem:[%s3004 + $0x224] sm:$0xf]
      %v3097 = vld [vmem:[%s3004 + $0x228] sm:$0xff]
      %v3098 = vld [vmem:[%s3004 + $0x230] sm:$0xf]
      %v3099 = vld [vmem:[%s3004 + $0x234] sm:$0xff]
      %v3100 = vld [vmem:[%s3004 + $0x23c] sm:$0xf]
      %v3101 = vcombine.low %v2996, %v3003
      %v3103 = vunpack.c.l.s4 1966171168
      %v3104 = vunpack.c.0.s8 %v3103
      %v3105 = vlaneseq
      %v3106 = vshrl.u32 %v3105, 7
      %v3107 = vsub.s32 %v3104, %v3106
      %v3108 = vrot.slane %v3101, %v3107
      %v3109 = vcombine.high %v3108, %v3108
      %v3111 = vunpack.c.l.s4 1966171168
      %v3112 = vunpack.c.0.s8 %v3111
      %v3113 = vlaneseq
      %v3114 = vshrl.u32 %v3113, 7
      %v3115 = vsub.s32 %v3112, %v3114
      %v3116 = vrot.slane %v3108, %v3115
      %v3118 = vunpack.c.l.s4 1966171168
      %v3119 = vunpack.c.0.s8 %v3118
      %v3120 = vlaneseq
      %v3121 = vshrl.u32 %v3120, 7
      %v3122 = vsub.s32 %v3119, %v3121
      %v3123 = vrot.slane %v3109, %v3122
      %v3124 = vcombine.high %v3116, %v3116
      %v3224 = vunpack.c.l.b16 %v3005
      %v3225 = vunpack.c.h.b16 %v3005
      %v3226 = vunpack.c.l.b16 %v3006
      %v3227 = vunpack.c.l.b16 %v3007
      %v3228 = vunpack.c.h.b16 %v3007
      %v3229 = vunpack.c.l.b16 %v3008
      %v3230 = vunpack.c.l.b16 %v3009
      %v3231 = vunpack.c.h.b16 %v3009
      %v3232 = vunpack.c.l.b16 %v3010
      %v3233 = vunpack.c.l.b16 %v3011
      %v3234 = vunpack.c.h.b16 %v3011
      %v3235 = vunpack.c.l.b16 %v3012
      %v3236 = vunpack.c.l.b16 %v3013
      %v3237 = vunpack.c.h.b16 %v3013
      %v3238 = vunpack.c.l.b16 %v3014
      %v3239 = vunpack.c.l.b16 %v3015
      %v3240 = vunpack.c.h.b16 %v3015
      %v3241 = vunpack.c.l.b16 %v3016
      %v3242 = vunpack.c.l.b16 %v3017
      %v3243 = vunpack.c.h.b16 %v3017
      %v3244 = vunpack.c.l.b16 %v3018
      %v3245 = vunpack.c.l.b16 %v3019
      %v3246 = vunpack.c.h.b16 %v3019
      %v3247 = vunpack.c.l.b16 %v3020
      %v3248 = vunpack.c.l.b16 %v3021
      %v3249 = vunpack.c.h.b16 %v3021
      %v3250 = vunpack.c.l.b16 %v3022
      %v3251 = vunpack.c.l.b16 %v3023
      %v3252 = vunpack.c.h.b16 %v3023
      %v3253 = vunpack.c.l.b16 %v3024
      %v3254 = vunpack.c.l.b16 %v3025
      %v3255 = vunpack.c.h.b16 %v3025
      %v3256 = vunpack.c.l.b16 %v3026
      %v3257 = vunpack.c.l.b16 %v3027
      %v3258 = vunpack.c.h.b16 %v3027
      %v3259 = vunpack.c.l.b16 %v3028
      %v3260 = vunpack.c.l.b16 %v3029
      %v3261 = vunpack.c.h.b16 %v3029
      %v3262 = vunpack.c.l.b16 %v3030
      %v3263 = vunpack.c.l.b16 %v3031
      %v3264 = vunpack.c.h.b16 %v3031
      %v3265 = vunpack.c.l.b16 %v3032
      %v3266 = vunpack.c.l.b16 %v3033
      %v3267 = vunpack.c.h.b16 %v3033
      %v3268 = vunpack.c.l.b16 %v3034
      %v3269 = vunpack.c.l.b16 %v3035
      %v3270 = vunpack.c.h.b16 %v3035
      %v3271 = vunpack.c.l.b16 %v3036
      %v3272 = vunpack.c.l.b16 %v3037
      %v3273 = vunpack.c.h.b16 %v3037
      %v3274 = vunpack.c.l.b16 %v3038
      %v3275 = vunpack.c.l.b16 %v3039
      %v3276 = vunpack.c.h.b16 %v3039
      %v3277 = vunpack.c.l.b16 %v3040
      %v3278 = vunpack.c.l.b16 %v3041
      %v3279 = vunpack.c.h.b16 %v3041
      %v3280 = vunpack.c.l.b16 %v3042
      %v3281 = vunpack.c.l.b16 %v3043
      %v3282 = vunpack.c.h.b16 %v3043
      %v3283 = vunpack.c.l.b16 %v3044
      %v3284 = vunpack.c.l.b16 %v3045
      %v3285 = vunpack.c.h.b16 %v3045
      %v3286 = vunpack.c.l.b16 %v3046
      %v3287 = vunpack.c.l.b16 %v3047
      %v3288 = vunpack.c.h.b16 %v3047
      %v3289 = vunpack.c.l.b16 %v3048
      %v3290 = vunpack.c.l.b16 %v3049
      %v3291 = vunpack.c.h.b16 %v3049
      %v3292 = vunpack.c.l.b16 %v3050
      %v3293 = vunpack.c.l.b16 %v3051
      %v3294 = vunpack.c.h.b16 %v3051
      %v3295 = vunpack.c.l.b16 %v3052
      %v3296 = vunpack.c.l.b16 %v3053
      %v3297 = vunpack.c.h.b16 %v3053
      %v3298 = vunpack.c.l.b16 %v3054
      %v3299 = vunpack.c.l.b16 %v3055
      %v3300 = vunpack.c.h.b16 %v3055
      %v3301 = vunpack.c.l.b16 %v3056
      %v3302 = vunpack.c.l.b16 %v3057
      %v3303 = vunpack.c.h.b16 %v3057
      %v3304 = vunpack.c.l.b16 %v3058
      %v3305 = vunpack.c.l.b16 %v3059
      %v3306 = vunpack.c.h.b16 %v3059
      %v3307 = vunpack.c.l.b16 %v3060
      %v3308 = vunpack.c.l.b16 %v3061
      %v3309 = vunpack.c.h.b16 %v3061
      %v3310 = vunpack.c.l.b16 %v3062
      %v3311 = vunpack.c.l.b16 %v3063
      %v3312 = vunpack.c.h.b16 %v3063
      %v3313 = vunpack.c.l.b16 %v3064
      %v3314 = vunpack.c.l.b16 %v3065
      %v3315 = vunpack.c.h.b16 %v3065
      %v3316 = vunpack.c.l.b16 %v3066
      %v3317 = vunpack.c.l.b16 %v3067
      %v3318 = vunpack.c.h.b16 %v3067
      %v3319 = vunpack.c.l.b16 %v3068
      %v3320 = vunpack.c.l.b16 %v3069
      %v3321 = vunpack.c.h.b16 %v3069
      %v3322 = vunpack.c.l.b16 %v3070
      %v3323 = vunpack.c.l.b16 %v3071
      %v3324 = vunpack.c.h.b16 %v3071
      %v3325 = vunpack.c.l.b16 %v3072
      %v3326 = vunpack.c.l.b16 %v3073
      %v3327 = vunpack.c.h.b16 %v3073
      %v3328 = vunpack.c.l.b16 %v3074
      %v3329 = vunpack.c.l.b16 %v3075
      %v3330 = vunpack.c.h.b16 %v3075
      %v3331 = vunpack.c.l.b16 %v3076
      %v3332 = vunpack.c.l.b16 %v3077
      %v3333 = vunpack.c.h.b16 %v3077
      %v3334 = vunpack.c.l.b16 %v3078
      %v3335 = vunpack.c.l.b16 %v3079
      %v3336 = vunpack.c.h.b16 %v3079
      %v3337 = vunpack.c.l.b16 %v3080
      %v3338 = vunpack.c.l.b16 %v3081
      %v3339 = vunpack.c.h.b16 %v3081
      %v3340 = vunpack.c.l.b16 %v3082
      %v3341 = vunpack.c.l.b16 %v3083
      %v3342 = vunpack.c.h.b16 %v3083
      %v3343 = vunpack.c.l.b16 %v3084
      %v3344 = vunpack.c.l.b16 %v3085
      %v3345 = vunpack.c.h.b16 %v3085
      %v3346 = vunpack.c.l.b16 %v3086
      %v3347 = vunpack.c.l.b16 %v3087
      %v3348 = vunpack.c.h.b16 %v3087
      %v3349 = vunpack.c.l.b16 %v3088
      %v3350 = vunpack.c.l.b16 %v3089
      %v3351 = vunpack.c.h.b16 %v3089
      %v3352 = vunpack.c.l.b16 %v3090
      %v3353 = vunpack.c.l.b16 %v3091
      %v3354 = vunpack.c.h.b16 %v3091
      %v3355 = vunpack.c.l.b16 %v3092
      %v3356 = vunpack.c.l.b16 %v3093
      %v3357 = vunpack.c.h.b16 %v3093
      %v3358 = vunpack.c.l.b16 %v3094
      %v3359 = vunpack.c.l.b16 %v3095
      %v3360 = vunpack.c.h.b16 %v3095
      %v3361 = vunpack.c.l.b16 %v3096
      %v3362 = vunpack.c.l.b16 %v3097
      %v3363 = vunpack.c.h.b16 %v3097
      %v3364 = vunpack.c.l.b16 %v3098
      %v3365 = vunpack.c.l.b16 %v3099
      %v3366 = vunpack.c.h.b16 %v3099
      %v3367 = vunpack.c.l.b16 %v3100
      %v3368 = vpack.c.b16 %v3227, %v3224
      %v3369 = vpack.c.b16 %v3228, %v3225
      %v3370 = vpack.c.b16 %v3229, %v3226
      %v3371 = vpack.c.b16 %v3233, %v3230
      %v3372 = vpack.c.b16 %v3234, %v3231
      %v3373 = vpack.c.b16 %v3235, %v3232
      %v3374 = vpack.c.b16 %v3239, %v3236
      %v3375 = vpack.c.b16 %v3240, %v3237
      %v3376 = vpack.c.b16 %v3241, %v3238
      %v3377 = vpack.c.b16 %v3245, %v3242
      %v3378 = vpack.c.b16 %v3246, %v3243
      %v3379 = vpack.c.b16 %v3247, %v3244
      %v3380 = vpack.c.b16 %v3251, %v3248
      %v3381 = vpack.c.b16 %v3252, %v3249
      %v3382 = vpack.c.b16 %v3253, %v3250
      %v3383 = vpack.c.b16 %v3257, %v3254
      %v3384 = vpack.c.b16 %v3258, %v3255
      %v3385 = vpack.c.b16 %v3259, %v3256
      %v3386 = vpack.c.b16 %v3263, %v3260
      %v3387 = vpack.c.b16 %v3264, %v3261
      %v3388 = vpack.c.b16 %v3265, %v3262
      %v3389 = vpack.c.b16 %v3269, %v3266
      %v3390 = vpack.c.b16 %v3270, %v3267
      %v3391 = vpack.c.b16 %v3271, %v3268
      %v3392 = vpack.c.b16 %v3275, %v3272
      %v3393 = vpack.c.b16 %v3276, %v3273
      %v3394 = vpack.c.b16 %v3277, %v3274
      %v3395 = vpack.c.b16 %v3281, %v3278
      %v3396 = vpack.c.b16 %v3282, %v3279
      %v3397 = vpack.c.b16 %v3283, %v3280
      %v3398 = vpack.c.b16 %v3287, %v3284
      %v3399 = vpack.c.b16 %v3288, %v3285
      %v3400 = vpack.c.b16 %v3289, %v3286
      %v3401 = vpack.c.b16 %v3293, %v3290
      %v3402 = vpack.c.b16 %v3294, %v3291
      %v3403 = vpack.c.b16 %v3295, %v3292
      %v3404 = vpack.c.b16 %v3299, %v3296
      %v3405 = vpack.c.b16 %v3300, %v3297
      %v3406 = vpack.c.b16 %v3301, %v3298
      %v3407 = vpack.c.b16 %v3305, %v3302
      %v3408 = vpack.c.b16 %v3306, %v3303
      %v3409 = vpack.c.b16 %v3307, %v3304
      %v3410 = vpack.c.b16 %v3311, %v3308
      %v3411 = vpack.c.b16 %v3312, %v3309
      %v3412 = vpack.c.b16 %v3313, %v3310
      %v3413 = vpack.c.b16 %v3317, %v3314
      %v3414 = vpack.c.b16 %v3318, %v3315
      %v3415 = vpack.c.b16 %v3319, %v3316
      %v3416 = vpack.c.b16 %v3323, %v3320
      %v3417 = vpack.c.b16 %v3324, %v3321
      %v3418 = vpack.c.b16 %v3325, %v3322
      %v3419 = vpack.c.b16 %v3329, %v3326
      %v3420 = vpack.c.b16 %v3330, %v3327
      %v3421 = vpack.c.b16 %v3331, %v3328
      %v3422 = vpack.c.b16 %v3335, %v3332
      %v3423 = vpack.c.b16 %v3336, %v3333
      %v3424 = vpack.c.b16 %v3337, %v3334
      %v3425 = vpack.c.b16 %v3341, %v3338
      %v3426 = vpack.c.b16 %v3342, %v3339
      %v3427 = vpack.c.b16 %v3343, %v3340
      %v3428 = vpack.c.b16 %v3347, %v3344
      %v3429 = vpack.c.b16 %v3348, %v3345
      %v3430 = vpack.c.b16 %v3349, %v3346
      %v3431 = vpack.c.b16 %v3353, %v3350
      %v3432 = vpack.c.b16 %v3354, %v3351
      %v3433 = vpack.c.b16 %v3355, %v3352
      %v3434 = vpack.c.b16 %v3359, %v3356
      %v3435 = vpack.c.b16 %v3360, %v3357
      %v3436 = vpack.c.b16 %v3361, %v3358
      %v3437 = vpack.c.b16 %v3365, %v3362
      %v3438 = vpack.c.b16 %v3366, %v3363
      %v3439 = vpack.c.b16 %v3367, %v3364
      %3512 = vmatprep.subr.bf16.mxu0 %v3369
      %3513 = vmatpush1.bf16.msra.mxu0 %v3368
      %3514 = vmatprep.subr.bf16.mxu0 %v3372
      %3515 = vmatpush1.bf16.msra.mxu0 %v3371
      %3516 = vmatprep.subr.bf16.mxu0 %v3375
      %3517 = vmatpush1.bf16.msra.mxu0 %v3374
      %3518 = vmatprep.subr.bf16.mxu0 %v3378
      %3519 = vmatpush1.bf16.msra.mxu0 %v3377
      %3520 = vmatprep.subr.bf16.mxu0 %v3381
      %3521 = vmatpush1.bf16.msra.mxu0 %v3380
      %3522 = vmatprep.subr.bf16.mxu0 %v3384
      %3523 = vmatpush1.bf16.msra.mxu0 %v3383
      %3524 = vmatprep.subr.bf16.mxu0 %v3387
      %3525 = vmatpush1.bf16.msra.mxu0 %v3386
      %3526 = vmatprep.subr.bf16.mxu0 %v3390
      %3527 = vmatpush1.bf16.msra.mxu0 %v3389
      %3528 = vmatprep.subr.bf16.mxu0 %v3393
      %3529 = vmatpush1.bf16.msra.mxu0 %v3392
      %3530 = vmatprep.subr.bf16.mxu0 %v3396
      %3531 = vmatpush1.bf16.msra.mxu0 %v3395
      %3532 = vmatprep.subr.bf16.mxu0 %v3399
      %3533 = vmatpush1.bf16.msra.mxu0 %v3398
      %3534 = vmatprep.subr.bf16.mxu0 %v3402
      %3535 = vmatpush1.bf16.msra.mxu0 %v3401
      %3536 = vmatprep.subr.bf16.mxu0 %v3405
      %3537 = vmatpush1.bf16.msra.mxu0 %v3404
      %3538 = vmatprep.subr.bf16.mxu0 %v3408
      %3539 = vmatpush1.bf16.msra.mxu0 %v3407
      %3540 = vmatprep.subr.bf16.mxu0 %v3411
      %3541 = vmatpush1.bf16.msra.mxu0 %v3410
      %3542 = vmatprep.subr.bf16.mxu0 %v3414
      %3543 = vmatpush1.bf16.msra.mxu0 %v3413
      %3544 = vmatprep.mubr.bf16.mxu0 %v3123
      %3545 = vmatmul.mubr.bf16.gmra.mrb[0].mxu0 %v3116
      %v3546 = vpop.f32.mrb[0].mxu0
      %v3547 = vadd.f32 0.0, %v3546
      %v3548 = vpop.f32.mrb[0].mxu0
      %v3549 = vadd.f32 0.0, %v3548
      %v3550 = vpop.f32.mrb[0].mxu0
      %v3551 = vpop.f32.mrb[0].mxu0
      %3552 = vdwg.mxu0
      %3553 = vmatprep.subr.bf16.mxu0 %v3417
      %3554 = vmatpush1.bf16.msra.mxu0 %v3416
      %3555 = vmatprep.subr.bf16.mxu0 %v3420
      %3556 = vmatpush1.bf16.msra.mxu0 %v3419
      %3557 = vmatprep.subr.bf16.mxu0 %v3423
      %3558 = vmatpush1.bf16.msra.mxu0 %v3422
      %3559 = vmatprep.subr.bf16.mxu0 %v3426
      %3560 = vmatpush1.bf16.msra.mxu0 %v3425
      %3561 = vmatprep.subr.bf16.mxu0 %v3429
      %3562 = vmatpush1.bf16.msra.mxu0 %v3428
      %3563 = vmatprep.subr.bf16.mxu0 %v3432
      %3564 = vmatpush1.bf16.msra.mxu0 %v3431
      %3565 = vmatprep.subr.bf16.mxu0 %v3435
      %3566 = vmatpush1.bf16.msra.mxu0 %v3434
      %3567 = vmatprep.subr.bf16.mxu0 %v3438
      %3568 = vmatpush1.bf16.msra.mxu0 %v3437
      %3569 = vmatprep.subr.bf16.mxu0 0
      %3570 = vmatpush1.bf16.msra.mxu0 0
      %3571 = vmatprep.subr.bf16.mxu0 0
      %3572 = vmatpush1.bf16.msra.mxu0 0
      %3573 = vmatprep.subr.bf16.mxu0 0
      %3574 = vmatpush1.bf16.msra.mxu0 0
      %3575 = vmatprep.subr.bf16.mxu0 0
      %3576 = vmatpush1.bf16.msra.mxu0 0
      %3577 = vmatprep.subr.bf16.mxu0 0
      %3578 = vmatpush1.bf16.msra.mxu0 0
      %3579 = vmatprep.subr.bf16.mxu0 0
      %3580 = vmatpush1.bf16.msra.mxu0 0
      %3581 = vmatprep.subr.bf16.mxu0 0
      %3582 = vmatpush1.bf16.msra.mxu0 0
      %3583 = vmatprep.subr.bf16.mxu0 0
      %3584 = vmatpush1.bf16.msra.mxu0 0
      %3585 = vmatprep.mubr.bf16.mxu0 0
      %3586 = vmatmul.mubr.bf16.gmra.mrb[0].mxu0 %v3124
      %v3587 = vpop.f32.mrb[0].mxu0
      %v3588 = vadd.f32 %v3547, %v3587
      %v3589 = vpop.f32.mrb[0].mxu0
      %v3590 = vadd.f32 %v3549, %v3589
      %v3591 = vpop.f32.mrb[0].mxu0
      %v3592 = vpop.f32.mrb[0].mxu0
      %3593 = vdwg.mxu0
      %3594 = vmatprep.subr.bf16.mxu0 0
      %3595 = vmatpush1.bf16.msra.mxu0 %v3370
      %3596 = vmatprep.subr.bf16.mxu0 0
      %3597 = vmatpush1.bf16.msra.mxu0 %v3373
      %3598 = vmatprep.subr.bf16.mxu0 0
      %3599 = vmatpush1.bf16.msra.mxu0 %v3376
      %3600 = vmatprep.subr.bf16.mxu0 0
      %3601 = vmatpush1.bf16.msra.mxu0 %v3379
      %3602 = vmatprep.subr.bf16.mxu0 0
      %3603 = vmatpush1.bf16.msra.mxu0 %v3382
      %3604 = vmatprep.subr.bf16.mxu0 0
      %3605 = vmatpush1.bf16.msra.mxu0 %v3385
      %3606 = vmatprep.subr.bf16.mxu0 0
      %3607 = vmatpush1.bf16.msra.mxu0 %v3388
      %3608 = vmatprep.subr.bf16.mxu0 0
      %3609 = vmatpush1.bf16.msra.mxu0 %v3391
      %3610 = vmatprep.subr.bf16.mxu0 0
      %3611 = vmatpush1.bf16.msra.mxu0 %v3394
      %3612 = vmatprep.subr.bf16.mxu0 0
      %3613 = vmatpush1.bf16.msra.mxu0 %v3397
      %3614 = vmatprep.subr.bf16.mxu0 0
      %3615 = vmatpush1.bf16.msra.mxu0 %v3400
      %3616 = vmatprep.subr.bf16.mxu0 0
      %3617 = vmatpush1.bf16.msra.mxu0 %v3403
      %3618 = vmatprep.subr.bf16.mxu0 0
      %3619 = vmatpush1.bf16.msra.mxu0 %v3406
      %3620 = vmatprep.subr.bf16.mxu0 0
      %3621 = vmatpush1.bf16.msra.mxu0 %v3409
      %3622 = vmatprep.subr.bf16.mxu0 0
      %3623 = vmatpush1.bf16.msra.mxu0 %v3412
      %3624 = vmatprep.subr.bf16.mxu0 0
      %3625 = vmatpush1.bf16.msra.mxu0 %v3415
      %3626 = vmatprep.mubr.bf16.mxu0 %v3123
      %3627 = vmatmul.mubr.bf16.gmra.mrb[0].mxu0 %v3116
      %v3628 = vpop.f32.mrb[0].mxu0
      %v3629 = vadd.f32 0.0, %v3628
      %v3630 = vpop.f32.mrb[0].mxu0
      %v3631 = vpop.f32.mrb[0].mxu0
      %v3632 = vpop.f32.mrb[0].mxu0
      %3633 = vdwg.mxu0
      %3634 = vmatprep.subr.bf16.mxu0 0
      %3635 = vmatpush1.bf16.msra.mxu0 %v3418
      %3636 = vmatprep.subr.bf16.mxu0 0
      %3637 = vmatpush1.bf16.msra.mxu0 %v3421
      %3638 = vmatprep.subr.bf16.mxu0 0
      %3639 = vmatpush1.bf16.msra.mxu0 %v3424
      %3640 = vmatprep.subr.bf16.mxu0 0
      %3641 = vmatpush1.bf16.msra.mxu0 %v3427
      %3642 = vmatprep.subr.bf16.mxu0 0
      %3643 = vmatpush1.bf16.msra.mxu0 %v3430
      %3644 = vmatprep.subr.bf16.mxu0 0
      %3645 = vmatpush1.bf16.msra.mxu0 %v3433
      %3646 = vmatprep.subr.bf16.mxu0 0
      %3647 = vmatpush1.bf16.msra.mxu0 %v3436
      %3648 = vmatprep.subr.bf16.mxu0 0
      %3649 = vmatpush1.bf16.msra.mxu0 %v3439
      %3650 = vmatprep.subr.bf16.mxu0 0
      %3651 = vmatpush1.bf16.msra.mxu0 0
      %3652 = vmatprep.subr.bf16.mxu0 0
      %3653 = vmatpush1.bf16.msra.mxu0 0
      %3654 = vmatprep.subr.bf16.mxu0 0
      %3655 = vmatpush1.bf16.msra.mxu0 0
      %3656 = vmatprep.subr.bf16.mxu0 0
      %3657 = vmatpush1.bf16.msra.mxu0 0
      %3658 = vmatprep.subr.bf16.mxu0 0
      %3659 = vmatpush1.bf16.msra.mxu0 0
      %3660 = vmatprep.subr.bf16.mxu0 0
      %3661 = vmatpush1.bf16.msra.mxu0 0
      %3662 = vmatprep.subr.bf16.mxu0 0
      %3663 = vmatpush1.bf16.msra.mxu0 0
      %3664 = vmatprep.subr.bf16.mxu0 0
      %3665 = vmatpush1.bf16.msra.mxu0 0
      %3666 = vmatprep.mubr.bf16.mxu0 0
      %3667 = vmatmul.mubr.bf16.gmra.mrb[0].mxu0 %v3124
      %v3668 = vpop.f32.mrb[0].mxu0
      %v3669 = vadd.f32 %v3629, %v3668
      %v3670 = vpop.f32.mrb[0].mxu0
      %v3671 = vpop.f32.mrb[0].mxu0
      %v3672 = vpop.f32.mrb[0].mxu0
      %3673 = vdwg.mxu0
      %v3674 = vadd.f32 %v2982, %v3588
      %v3675 = vadd.f32 %v2983, %v3590
      %v3676 = vadd.f32 %v2984, %v3669
      %v3677 = vld [vmem:[%s2985] sm:$0x3f]
      %v3678 = vld [vmem:[%s2985 + $0x6] sm:$0x3f]
      %v3682 = vunpack.c.l.s4 1966171168
      %v3683 = vunpack.c.0.s8 %v3682
      %v3684 = vlaneseq
      %v3685 = vshrl.u32 %v3684, 7
      %v3686 = vsub.s32 %v3683, %v3685
      %v3687 = vrot.slane %v3677, %v3686
      %v3688 = vcombine.high %v3687, %v3687
      %v3690 = vunpack.c.l.s4 1966171168
      %v3691 = vunpack.c.0.s8 %v3690
      %v3692 = vlaneseq
      %v3693 = vshrl.u32 %v3692, 7
      %v3694 = vsub.s32 %v3691, %v3693
      %v3695 = vrot.slane %v3678, %v3694
      %v3696 = vcombine.high %v3695, %v3695
      %v3698 = vshrl.u32 %v3687, 16
      %v3700 = vrot.slane %v3698, 7
      %v3701 = vrot.slane %v3700, 1
      %v3703 = vshll.u32 %v3688, 16
      %v3705 = vsel %vm320, %v3701, %v3703
      %v3707 = vshrl.u32 %v3695, 16
      %v3709 = vrot.slane %v3707, 7
      %v3710 = vrot.slane %v3709, 1
      %v3712 = vshll.u32 %v3696, 16
      %v3714 = vsel %vm320, %v3710, %v3712
      %s3715 = scalar_lea.vmem %s1, 2880
      %v3716 = vld [vmem:[%s3715] sm:$0xff]
      %v3717 = vld [vmem:[%s3715 + $0x8] sm:$0xf]
      %v3718 = vld [vmem:[%s3715 + $0xc] sm:$0xff]
      %v3719 = vld [vmem:[%s3715 + $0x14] sm:$0xf]
      %v3720 = vld [vmem:[%s3715 + $0x18] sm:$0xff]
      %v3721 = vld [vmem:[%s3715 + $0x20] sm:$0xf]
      %v3722 = vld [vmem:[%s3715 + $0x24] sm:$0xff]
      %v3723 = vld [vmem:[%s3715 + $0x2c] sm:$0xf]
      %v3724 = vld [vmem:[%s3715 + $0x30] sm:$0xff]
      %v3725 = vld [vmem:[%s3715 + $0x38] sm:$0xf]
      %v3726 = vld [vmem:[%s3715 + $0x3c] sm:$0xff]
      %v3727 = vld [vmem:[%s3715 + $0x44] sm:$0xf]
      %v3728 = vld [vmem:[%s3715 + $0x48] sm:$0xff]
      %v3729 = vld [vmem:[%s3715 + $0x50] sm:$0xf]
      %v3730 = vld [vmem:[%s3715 + $0x54] sm:$0xff]
      %v3731 = vld [vmem:[%s3715 + $0x5c] sm:$0xf]
      %v3732 = vld [vmem:[%s3715 + $0x60] sm:$0xff]
      %v3733 = vld [vmem:[%s3715 + $0x68] sm:$0xf]
      %v3734 = vld [vmem:[%s3715 + $0x6c] sm:$0xff]
      %v3735 = vld [vmem:[%s3715 + $0x74] sm:$0xf]
      %v3736 = vld [vmem:[%s3715 + $0x78] sm:$0xff]
      %v3737 = vld [vmem:[%s3715 + $0x80] sm:$0xf]
      %v3738 = vld [vmem:[%s3715 + $0x84] sm:$0xff]
      %v3739 = vld [vmem:[%s3715 + $0x8c] sm:$0xf]
      %v3740 = vld [vmem:[%s3715 + $0x90] sm:$0xff]
      %v3741 = vld [vmem:[%s3715 + $0x98] sm:$0xf]
      %v3742 = vld [vmem:[%s3715 + $0x9c] sm:$0xff]
      %v3743 = vld [vmem:[%s3715 + $0xa4] sm:$0xf]
      %v3744 = vld [vmem:[%s3715 + $0xa8] sm:$0xff]
      %v3745 = vld [vmem:[%s3715 + $0xb0] sm:$0xf]
      %v3746 = vld [vmem:[%s3715 + $0xb4] sm:$0xff]
      %v3747 = vld [vmem:[%s3715 + $0xbc] sm:$0xf]
      %v3748 = vld [vmem:[%s3715 + $0xc0] sm:$0xff]
      %v3749 = vld [vmem:[%s3715 + $0xc8] sm:$0xf]
      %v3750 = vld [vmem:[%s3715 + $0xcc] sm:$0xff]
      %v3751 = vld [vmem:[%s3715 + $0xd4] sm:$0xf]
      %v3752 = vld [vmem:[%s3715 + $0xd8] sm:$0xff]
      %v3753 = vld [vmem:[%s3715 + $0xe0] sm:$0xf]
      %v3754 = vld [vmem:[%s3715 + $0xe4] sm:$0xff]
      %v3755 = vld [vmem:[%s3715 + $0xec] sm:$0xf]
      %v3756 = vld [vmem:[%s3715 + $0xf0] sm:$0xff]
      %v3757 = vld [vmem:[%s3715 + $0xf8] sm:$0xf]
      %v3758 = vld [vmem:[%s3715 + $0xfc] sm:$0xff]
      %v3759 = vld [vmem:[%s3715 + $0x104] sm:$0xf]
      %v3760 = vld [vmem:[%s3715 + $0x108] sm:$0xff]
      %v3761 = vld [vmem:[%s3715 + $0x110] sm:$0xf]
      %v3762 = vld [vmem:[%s3715 + $0x114] sm:$0xff]
      %v3763 = vld [vmem:[%s3715 + $0x11c] sm:$0xf]
      %v3764 = vld [vmem:[%s3715 + $0x120] sm:$0xff]
      %v3765 = vld [vmem:[%s3715 + $0x128] sm:$0xf]
      %v3766 = vld [vmem:[%s3715 + $0x12c] sm:$0xff]
      %v3767 = vld [vmem:[%s3715 + $0x134] sm:$0xf]
      %v3768 = vld [vmem:[%s3715 + $0x138] sm:$0xff]
      %v3769 = vld [vmem:[%s3715 + $0x140] sm:$0xf]
      %v3770 = vld [vmem:[%s3715 + $0x144] sm:$0xff]
      %v3771 = vld [vmem:[%s3715 + $0x14c] sm:$0xf]
      %v3772 = vld [vmem:[%s3715 + $0x150] sm:$0xff]
      %v3773 = vld [vmem:[%s3715 + $0x158] sm:$0xf]
      %v3774 = vld [vmem:[%s3715 + $0x15c] sm:$0xff]
      %v3775 = vld [vmem:[%s3715 + $0x164] sm:$0xf]
      %v3776 = vld [vmem:[%s3715 + $0x168] sm:$0xff]
      %v3777 = vld [vmem:[%s3715 + $0x170] sm:$0xf]
      %v3778 = vld [vmem:[%s3715 + $0x174] sm:$0xff]
      %v3779 = vld [vmem:[%s3715 + $0x17c] sm:$0xf]
      %v3780 = vld [vmem:[%s3715 + $0x180] sm:$0xff]
      %v3781 = vld [vmem:[%s3715 + $0x188] sm:$0xf]
      %v3782 = vld [vmem:[%s3715 + $0x18c] sm:$0xff]
      %v3783 = vld [vmem:[%s3715 + $0x194] sm:$0xf]
      %v3784 = vld [vmem:[%s3715 + $0x198] sm:$0xff]
      %v3785 = vld [vmem:[%s3715 + $0x1a0] sm:$0xf]
      %v3786 = vld [vmem:[%s3715 + $0x1a4] sm:$0xff]
      %v3787 = vld [vmem:[%s3715 + $0x1ac] sm:$0xf]
      %v3788 = vld [vmem:[%s3715 + $0x1b0] sm:$0xff]
      %v3789 = vld [vmem:[%s3715 + $0x1b8] sm:$0xf]
      %v3790 = vld [vmem:[%s3715 + $0x1bc] sm:$0xff]
      %v3791 = vld [vmem:[%s3715 + $0x1c4] sm:$0xf]
      %v3792 = vld [vmem:[%s3715 + $0x1c8] sm:$0xff]
      %v3793 = vld [vmem:[%s3715 + $0x1d0] sm:$0xf]
      %v3794 = vld [vmem:[%s3715 + $0x1d4] sm:$0xff]
      %v3795 = vld [vmem:[%s3715 + $0x1dc] sm:$0xf]
      %v3796 = vld [vmem:[%s3715 + $0x1e0] sm:$0xff]
      %v3797 = vld [vmem:[%s3715 + $0x1e8] sm:$0xf]
      %v3798 = vld [vmem:[%s3715 + $0x1ec] sm:$0xff]
      %v3799 = vld [vmem:[%s3715 + $0x1f4] sm:$0xf]
      %v3800 = vld [vmem:[%s3715 + $0x1f8] sm:$0xff]
      %v3801 = vld [vmem:[%s3715 + $0x200] sm:$0xf]
      %v3802 = vld [vmem:[%s3715 + $0x204] sm:$0xff]
      %v3803 = vld [vmem:[%s3715 + $0x20c] sm:$0xf]
      %v3804 = vld [vmem:[%s3715 + $0x210] sm:$0xff]
      %v3805 = vld [vmem:[%s3715 + $0x218] sm:$0xf]
      %v3806 = vld [vmem:[%s3715 + $0x21c] sm:$0xff]
      %v3807 = vld [vmem:[%s3715 + $0x224] sm:$0xf]
      %v3808 = vld [vmem:[%s3715 + $0x228] sm:$0xff]
      %v3809 = vld [vmem:[%s3715 + $0x230] sm:$0xf]
      %v3810 = vld [vmem:[%s3715 + $0x234] sm:$0xff]
      %v3811 = vld [vmem:[%s3715 + $0x23c] sm:$0xf]
      %v3812 = vcombine.low %v3705, %v3714
      %v3814 = vunpack.c.l.s4 1966171168
      %v3815 = vunpack.c.0.s8 %v3814
      %v3816 = vlaneseq
      %v3817 = vshrl.u32 %v3816, 7
      %v3818 = vsub.s32 %v3815, %v3817
      %v3819 = vrot.slane %v3812, %v3818
      %v3820 = vcombine.high %v3819, %v3819
      %v3822 = vunpack.c.l.s4 1966171168
      %v3823 = vunpack.c.0.s8 %v3822
      %v3824 = vlaneseq
      %v3825 = vshrl.u32 %v3824, 7
      %v3826 = vsub.s32 %v3823, %v3825
      %v3827 = vrot.slane %v3819, %v3826
      %v3829 = vunpack.c.l.s4 1966171168
      %v3830 = vunpack.c.0.s8 %v3829
      %v3831 = vlaneseq
      %v3832 = vshrl.u32 %v3831, 7
      %v3833 = vsub.s32 %v3830, %v3832
      %v3834 = vrot.slane %v3820, %v3833
      %v3835 = vcombine.high %v3827, %v3827
      %v3935 = vunpack.c.l.b16 %v3716
      %v3936 = vunpack.c.h.b16 %v3716
      %v3937 = vunpack.c.l.b16 %v3717
      %v3938 = vunpack.c.l.b16 %v3718
      %v3939 = vunpack.c.h.b16 %v3718
      %v3940 = vunpack.c.l.b16 %v3719
      %v3941 = vunpack.c.l.b16 %v3720
      %v3942 = vunpack.c.h.b16 %v3720
      %v3943 = vunpack.c.l.b16 %v3721
      %v3944 = vunpack.c.l.b16 %v3722
      %v3945 = vunpack.c.h.b16 %v3722
      %v3946 = vunpack.c.l.b16 %v3723
      %v3947 = vunpack.c.l.b16 %v3724
      %v3948 = vunpack.c.h.b16 %v3724
      %v3949 = vunpack.c.l.b16 %v3725
      %v3950 = vunpack.c.l.b16 %v3726
      %v3951 = vunpack.c.h.b16 %v3726
      %v3952 = vunpack.c.l.b16 %v3727
      %v3953 = vunpack.c.l.b16 %v3728
      %v3954 = vunpack.c.h.b16 %v3728
      %v3955 = vunpack.c.l.b16 %v3729
      %v3956 = vunpack.c.l.b16 %v3730
      %v3957 = vunpack.c.h.b16 %v3730
      %v3958 = vunpack.c.l.b16 %v3731
      %v3959 = vunpack.c.l.b16 %v3732
      %v3960 = vunpack.c.h.b16 %v3732
      %v3961 = vunpack.c.l.b16 %v3733
      %v3962 = vunpack.c.l.b16 %v3734
      %v3963 = vunpack.c.h.b16 %v3734
      %v3964 = vunpack.c.l.b16 %v3735
      %v3965 = vunpack.c.l.b16 %v3736
      %v3966 = vunpack.c.h.b16 %v3736
      %v3967 = vunpack.c.l.b16 %v3737
      %v3968 = vunpack.c.l.b16 %v3738
      %v3969 = vunpack.c.h.b16 %v3738
      %v3970 = vunpack.c.l.b16 %v3739
      %v3971 = vunpack.c.l.b16 %v3740
      %v3972 = vunpack.c.h.b16 %v3740
      %v3973 = vunpack.c.l.b16 %v3741
      %v3974 = vunpack.c.l.b16 %v3742
      %v3975 = vunpack.c.h.b16 %v3742
      %v3976 = vunpack.c.l.b16 %v3743
      %v3977 = vunpack.c.l.b16 %v3744
      %v3978 = vunpack.c.h.b16 %v3744
      %v3979 = vunpack.c.l.b16 %v3745
      %v3980 = vunpack.c.l.b16 %v3746
      %v3981 = vunpack.c.h.b16 %v3746
      %v3982 = vunpack.c.l.b16 %v3747
      %v3983 = vunpack.c.l.b16 %v3748
      %v3984 = vunpack.c.h.b16 %v3748
      %v3985 = vunpack.c.l.b16 %v3749
      %v3986 = vunpack.c.l.b16 %v3750
      %v3987 = vunpack.c.h.b16 %v3750
      %v3988 = vunpack.c.l.b16 %v3751
      %v3989 = vunpack.c.l.b16 %v3752
      %v3990 = vunpack.c.h.b16 %v3752
      %v3991 = vunpack.c.l.b16 %v3753
      %v3992 = vunpack.c.l.b16 %v3754
      %v3993 = vunpack.c.h.b16 %v3754
      %v3994 = vunpack.c.l.b16 %v3755
      %v3995 = vunpack.c.l.b16 %v3756
      %v3996 = vunpack.c.h.b16 %v3756
      %v3997 = vunpack.c.l.b16 %v3757
      %v3998 = vunpack.c.l.b16 %v3758
      %v3999 = vunpack.c.h.b16 %v3758
      %v4000 = vunpack.c.l.b16 %v3759
      %v4001 = vunpack.c.l.b16 %v3760
      %v4002 = vunpack.c.h.b16 %v3760
      %v4003 = vunpack.c.l.b16 %v3761
      %v4004 = vunpack.c.l.b16 %v3762
      %v4005 = vunpack.c.h.b16 %v3762
      %v4006 = vunpack.c.l.b16 %v3763
      %v4007 = vunpack.c.l.b16 %v3764
      %v4008 = vunpack.c.h.b16 %v3764
      %v4009 = vunpack.c.l.b16 %v3765
      %v4010 = vunpack.c.l.b16 %v3766
      %v4011 = vunpack.c.h.b16 %v3766
      %v4012 = vunpack.c.l.b16 %v3767
      %v4013 = vunpack.c.l.b16 %v3768
      %v4014 = vunpack.c.h.b16 %v3768
      %v4015 = vunpack.c.l.b16 %v3769
      %v4016 = vunpack.c.l.b16 %v3770
      %v4017 = vunpack.c.h.b16 %v3770
      %v4018 = vunpack.c.l.b16 %v3771
      %v4019 = vunpack.c.l.b16 %v3772
      %v4020 = vunpack.c.h.b16 %v3772
      %v4021 = vunpack.c.l.b16 %v3773
      %v4022 = vunpack.c.l.b16 %v3774
      %v4023 = vunpack.c.h.b16 %v3774
      %v4024 = vunpack.c.l.b16 %v3775
      %v4025 = vunpack.c.l.b16 %v3776
      %v4026 = vunpack.c.h.b16 %v3776
      %v4027 = vunpack.c.l.b16 %v3777
      %v4028 = vunpack.c.l.b16 %v3778
      %v4029 = vunpack.c.h.b16 %v3778
      %v4030 = vunpack.c.l.b16 %v3779
      %v4031 = vunpack.c.l.b16 %v3780
      %v4032 = vunpack.c.h.b16 %v3780
      %v4033 = vunpack.c.l.b16 %v3781
      %v4034 = vunpack.c.l.b16 %v3782
      %v4035 = vunpack.c.h.b16 %v3782
      %v4036 = vunpack.c.l.b16 %v3783
      %v4037 = vunpack.c.l.b16 %v3784
      %v4038 = vunpack.c.h.b16 %v3784
      %v4039 = vunpack.c.l.b16 %v3785
      %v4040 = vunpack.c.l.b16 %v3786
      %v4041 = vunpack.c.h.b16 %v3786
      %v4042 = vunpack.c.l.b16 %v3787
      %v4043 = vunpack.c.l.b16 %v3788
      %v4044 = vunpack.c.h.b16 %v3788
      %v4045 = vunpack.c.l.b16 %v3789
      %v4046 = vunpack.c.l.b16 %v3790
      %v4047 = vunpack.c.h.b16 %v3790
      %v4048 = vunpack.c.l.b16 %v3791
      %v4049 = vunpack.c.l.b16 %v3792
      %v4050 = vunpack.c.h.b16 %v3792
      %v4051 = vunpack.c.l.b16 %v3793
      %v4052 = vunpack.c.l.b16 %v3794
      %v4053 = vunpack.c.h.b16 %v3794
      %v4054 = vunpack.c.l.b16 %v3795
      %v4055 = vunpack.c.l.b16 %v3796
      %v4056 = vunpack.c.h.b16 %v3796
      %v4057 = vunpack.c.l.b16 %v3797
      %v4058 = vunpack.c.l.b16 %v3798
      %v4059 = vunpack.c.h.b16 %v3798
      %v4060 = vunpack.c.l.b16 %v3799
      %v4061 = vunpack.c.l.b16 %v3800
      %v4062 = vunpack.c.h.b16 %v3800
      %v4063 = vunpack.c.l.b16 %v3801
      %v4064 = vunpack.c.l.b16 %v3802
      %v4065 = vunpack.c.h.b16 %v3802
      %v4066 = vunpack.c.l.b16 %v3803
      %v4067 = vunpack.c.l.b16 %v3804
      %v4068 = vunpack.c.h.b16 %v3804
      %v4069 = vunpack.c.l.b16 %v3805
      %v4070 = vunpack.c.l.b16 %v3806
      %v4071 = vunpack.c.h.b16 %v3806
      %v4072 = vunpack.c.l.b16 %v3807
      %v4073 = vunpack.c.l.b16 %v3808
      %v4074 = vunpack.c.h.b16 %v3808
      %v4075 = vunpack.c.l.b16 %v3809
      %v4076 = vunpack.c.l.b16 %v3810
      %v4077 = vunpack.c.h.b16 %v3810
      %v4078 = vunpack.c.l.b16 %v3811
      %v4079 = vpack.c.b16 %v3938, %v3935
      %v4080 = vpack.c.b16 %v3939, %v3936
      %v4081 = vpack.c.b16 %v3940, %v3937
      %v4082 = vpack.c.b16 %v3944, %v3941
      %v4083 = vpack.c.b16 %v3945, %v3942
      %v4084 = vpack.c.b16 %v3946, %v3943
      %v4085 = vpack.c.b16 %v3950, %v3947
      %v4086 = vpack.c.b16 %v3951, %v3948
      %v4087 = vpack.c.b16 %v3952, %v3949
      %v4088 = vpack.c.b16 %v3956, %v3953
      %v4089 = vpack.c.b16 %v3957, %v3954
      %v4090 = vpack.c.b16 %v3958, %v3955
      %v4091 = vpack.c.b16 %v3962, %v3959
      %v4092 = vpack.c.b16 %v3963, %v3960
      %v4093 = vpack.c.b16 %v3964, %v3961
      %v4094 = vpack.c.b16 %v3968, %v3965
      %v4095 = vpack.c.b16 %v3969, %v3966
      %v4096 = vpack.c.b16 %v3970, %v3967
      %v4097 = vpack.c.b16 %v3974, %v3971
      %v4098 = vpack.c.b16 %v3975, %v3972
      %v4099 = vpack.c.b16 %v3976, %v3973
      %v4100 = vpack.c.b16 %v3980, %v3977
      %v4101 = vpack.c.b16 %v3981, %v3978
      %v4102 = vpack.c.b16 %v3982, %v3979
      %v4103 = vpack.c.b16 %v3986, %v3983
      %v4104 = vpack.c.b16 %v3987, %v3984
      %v4105 = vpack.c.b16 %v3988, %v3985
      %v4106 = vpack.c.b16 %v3992, %v3989
      %v4107 = vpack.c.b16 %v3993, %v3990
      %v4108 = vpack.c.b16 %v3994, %v3991
      %v4109 = vpack.c.b16 %v3998, %v3995
      %v4110 = vpack.c.b16 %v3999, %v3996
      %v4111 = vpack.c.b16 %v4000, %v3997
      %v4112 = vpack.c.b16 %v4004, %v4001
      %v4113 = vpack.c.b16 %v4005, %v4002
      %v4114 = vpack.c.b16 %v4006, %v4003
      %v4115 = vpack.c.b16 %v4010, %v4007
      %v4116 = vpack.c.b16 %v4011, %v4008
      %v4117 = vpack.c.b16 %v4012, %v4009
      %v4118 = vpack.c.b16 %v4016, %v4013
      %v4119 = vpack.c.b16 %v4017, %v4014
      %v4120 = vpack.c.b16 %v4018, %v4015
      %v4121 = vpack.c.b16 %v4022, %v4019
      %v4122 = vpack.c.b16 %v4023, %v4020
      %v4123 = vpack.c.b16 %v4024, %v4021
      %v4124 = vpack.c.b16 %v4028, %v4025
      %v4125 = vpack.c.b16 %v4029, %v4026
      %v4126 = vpack.c.b16 %v4030, %v4027
      %v4127 = vpack.c.b16 %v4034, %v4031
      %v4128 = vpack.c.b16 %v4035, %v4032
      %v4129 = vpack.c.b16 %v4036, %v4033
      %v4130 = vpack.c.b16 %v4040, %v4037
      %v4131 = vpack.c.b16 %v4041, %v4038
      %v4132 = vpack.c.b16 %v4042, %v4039
      %v4133 = vpack.c.b16 %v4046, %v4043
      %v4134 = vpack.c.b16 %v4047, %v4044
      %v4135 = vpack.c.b16 %v4048, %v4045
      %v4136 = vpack.c.b16 %v4052, %v4049
      %v4137 = vpack.c.b16 %v4053, %v4050
      %v4138 = vpack.c.b16 %v4054, %v4051
      %v4139 = vpack.c.b16 %v4058, %v4055
      %v4140 = vpack.c.b16 %v4059, %v4056
      %v4141 = vpack.c.b16 %v4060, %v4057
      %v4142 = vpack.c.b16 %v4064, %v4061
      %v4143 = vpack.c.b16 %v4065, %v4062
      %v4144 = vpack.c.b16 %v4066, %v4063
      %v4145 = vpack.c.b16 %v4070, %v4067
      %v4146 = vpack.c.b16 %v4071, %v4068
      %v4147 = vpack.c.b16 %v4072, %v4069
      %v4148 = vpack.c.b16 %v4076, %v4073
      %v4149 = vpack.c.b16 %v4077, %v4074
      %v4150 = vpack.c.b16 %v4078, %v4075
      %4223 = vmatprep.subr.bf16.mxu0 %v4080
      %4224 = vmatpush1.bf16.msra.mxu0 %v4079
      %4225 = vmatprep.subr.bf16.mxu0 %v4083
      %4226 = vmatpush1.bf16.msra.mxu0 %v4082
      %4227 = vmatprep.subr.bf16.mxu0 %v4086
      %4228 = vmatpush1.bf16.msra.mxu0 %v4085
      %4229 = vmatprep.subr.bf16.mxu0 %v4089
      %4230 = vmatpush1.bf16.msra.mxu0 %v4088
      %4231 = vmatprep.subr.bf16.mxu0 %v4092
      %4232 = vmatpush1.bf16.msra.mxu0 %v4091
      %4233 = vmatprep.subr.bf16.mxu0 %v4095
      %4234 = vmatpush1.bf16.msra.mxu0 %v4094
      %4235 = vmatprep.subr.bf16.mxu0 %v4098
      %4236 = vmatpush1.bf16.msra.mxu0 %v4097
      %4237 = vmatprep.subr.bf16.mxu0 %v4101
      %4238 = vmatpush1.bf16.msra.mxu0 %v4100
      %4239 = vmatprep.subr.bf16.mxu0 %v4104
      %4240 = vmatpush1.bf16.msra.mxu0 %v4103
      %4241 = vmatprep.subr.bf16.mxu0 %v4107
      %4242 = vmatpush1.bf16.msra.mxu0 %v4106
      %4243 = vmatprep.subr.bf16.mxu0 %v4110
      %4244 = vmatpush1.bf16.msra.mxu0 %v4109
      %4245 = vmatprep.subr.bf16.mxu0 %v4113
      %4246 = vmatpush1.bf16.msra.mxu0 %v4112
      %4247 = vmatprep.subr.bf16.mxu0 %v4116
      %4248 = vmatpush1.bf16.msra.mxu0 %v4115
      %4249 = vmatprep.subr.bf16.mxu0 %v4119
      %4250 = vmatpush1.bf16.msra.mxu0 %v4118
      %4251 = vmatprep.subr.bf16.mxu0 %v4122
      %4252 = vmatpush1.bf16.msra.mxu0 %v4121
      %4253 = vmatprep.subr.bf16.mxu0 %v4125
      %4254 = vmatpush1.bf16.msra.mxu0 %v4124
      %4255 = vmatprep.mubr.bf16.mxu0 %v3834
      %4256 = vmatmul.mubr.bf16.gmra.mrb[0].mxu0 %v3827
      %v4257 = vpop.f32.mrb[0].mxu0
      %v4258 = vadd.f32 0.0, %v4257
      %v4259 = vpop.f32.mrb[0].mxu0
      %v4260 = vadd.f32 0.0, %v4259
      %v4261 = vpop.f32.mrb[0].mxu0
      %v4262 = vpop.f32.mrb[0].mxu0
      %4263 = vdwg.mxu0
      %4264 = vmatprep.subr.bf16.mxu0 %v4128
      %4265 = vmatpush1.bf16.msra.mxu0 %v4127
      %4266 = vmatprep.subr.bf16.mxu0 %v4131
      %4267 = vmatpush1.bf16.msra.mxu0 %v4130
      %4268 = vmatprep.subr.bf16.mxu0 %v4134
      %4269 = vmatpush1.bf16.msra.mxu0 %v4133
      %4270 = vmatprep.subr.bf16.mxu0 %v4137
      %4271 = vmatpush1.bf16.msra.mxu0 %v4136
      %4272 = vmatprep.subr.bf16.mxu0 %v4140
      %4273 = vmatpush1.bf16.msra.mxu0 %v4139
      %4274 = vmatprep.subr.bf16.mxu0 %v4143
      %4275 = vmatpush1.bf16.msra.mxu0 %v4142
      %4276 = vmatprep.subr.bf16.mxu0 %v4146
      %4277 = vmatpush1.bf16.msra.mxu0 %v4145
      %4278 = vmatprep.subr.bf16.mxu0 %v4149
      %4279 = vmatpush1.bf16.msra.mxu0 %v4148
      %4280 = vmatprep.subr.bf16.mxu0 0
      %4281 = vmatpush1.bf16.msra.mxu0 0
      %4282 = vmatprep.subr.bf16.mxu0 0
      %4283 = vmatpush1.bf16.msra.mxu0 0
      %4284 = vmatprep.subr.bf16.mxu0 0
      %4285 = vmatpush1.bf16.msra.mxu0 0
      %4286 = vmatprep.subr.bf16.mxu0 0
      %4287 = vmatpush1.bf16.msra.mxu0 0
      %4288 = vmatprep.subr.bf16.mxu0 0
      %4289 = vmatpush1.bf16.msra.mxu0 0
      %4290 = vmatprep.subr.bf16.mxu0 0
      %4291 = vmatpush1.bf16.msra.mxu0 0
      %4292 = vmatprep.subr.bf16.mxu0 0
      %4293 = vmatpush1.bf16.msra.mxu0 0
      %4294 = vmatprep.subr.bf16.mxu0 0
      %4295 = vmatpush1.bf16.msra.mxu0 0
      %4296 = vmatprep.mubr.bf16.mxu0 0
      %4297 = vmatmul.mubr.bf16.gmra.mrb[0].mxu0 %v3835
      %v4298 = vpop.f32.mrb[0].mxu0
      %v4299 = vadd.f32 %v4258, %v4298
      %v4300 = vpop.f32.mrb[0].mxu0
      %v4301 = vadd.f32 %v4260, %v4300
      %v4302 = vpop.f32.mrb[0].mxu0
      %v4303 = vpop.f32.mrb[0].mxu0
      %4304 = vdwg.mxu0
      %4305 = vmatprep.subr.bf16.mxu0 0
      %4306 = vmatpush1.bf16.msra.mxu0 %v4081
      %4307 = vmatprep.subr.bf16.mxu0 0
      %4308 = vmatpush1.bf16.msra.mxu0 %v4084
      %4309 = vmatprep.subr.bf16.mxu0 0
      %4310 = vmatpush1.bf16.msra.mxu0 %v4087
      %4311 = vmatprep.subr.bf16.mxu0 0
      %4312 = vmatpush1.bf16.msra.mxu0 %v4090
      %4313 = vmatprep.subr.bf16.mxu0 0
      %4314 = vmatpush1.bf16.msra.mxu0 %v4093
      %4315 = vmatprep.subr.bf16.mxu0 0
      %4316 = vmatpush1.bf16.msra.mxu0 %v4096
      %4317 = vmatprep.subr.bf16.mxu0 0
      %4318 = vmatpush1.bf16.msra.mxu0 %v4099
      %4319 = vmatprep.subr.bf16.mxu0 0
      %4320 = vmatpush1.bf16.msra.mxu0 %v4102
      %4321 = vmatprep.subr.bf16.mxu0 0
      %4322 = vmatpush1.bf16.msra.mxu0 %v4105
      %4323 = vmatprep.subr.bf16.mxu0 0
      %4324 = vmatpush1.bf16.msra.mxu0 %v4108
      %4325 = vmatprep.subr.bf16.mxu0 0
      %4326 = vmatpush1.bf16.msra.mxu0 %v4111
      %4327 = vmatprep.subr.bf16.mxu0 0
      %4328 = vmatpush1.bf16.msra.mxu0 %v4114
      %4329 = vmatprep.subr.bf16.mxu0 0
      %4330 = vmatpush1.bf16.msra.mxu0 %v4117
      %4331 = vmatprep.subr.bf16.mxu0 0
      %4332 = vmatpush1.bf16.msra.mxu0 %v4120
      %4333 = vmatprep.subr.bf16.mxu0 0
      %4334 = vmatpush1.bf16.msra.mxu0 %v4123
      %4335 = vmatprep.subr.bf16.mxu0 0
      %4336 = vmatpush1.bf16.msra.mxu0 %v4126
      %4337 = vmatprep.mubr.bf16.mxu0 %v3834
      %4338 = vmatmul.mubr.bf16.gmra.mrb[0].mxu0 %v3827
      %v4339 = vpop.f32.mrb[0].mxu0
      %v4340 = vadd.f32 0.0, %v4339
      %v4341 = vpop.f32.mrb[0].mxu0
      %v4342 = vpop.f32.mrb[0].mxu0
      %v4343 = vpop.f32.mrb[0].mxu0
      %4344 = vdwg.mxu0
      %4345 = vmatprep.subr.bf16.mxu0 0
      %4346 = vmatpush1.bf16.msra.mxu0 %v4129
      %4347 = vmatprep.subr.bf16.mxu0 0
      %4348 = vmatpush1.bf16.msra.mxu0 %v4132
      %4349 = vmatprep.subr.bf16.mxu0 0
      %4350 = vmatpush1.bf16.msra.mxu0 %v4135
      %4351 = vmatprep.subr.bf16.mxu0 0
      %4352 = vmatpush1.bf16.msra.mxu0 %v4138
      %4353 = vmatprep.subr.bf16.mxu0 0
      %4354 = vmatpush1.bf16.msra.mxu0 %v4141
      %4355 = vmatprep.subr.bf16.mxu0 0
      %4356 = vmatpush1.bf16.msra.mxu0 %v4144
      %4357 = vmatprep.subr.bf16.mxu0 0
      %4358 = vmatpush1.bf16.msra.mxu0 %v4147
      %4359 = vmatprep.subr.bf16.mxu0 0
      %4360 = vmatpush1.bf16.msra.mxu0 %v4150
      %4361 = vmatprep.subr.bf16.mxu0 0
      %4362 = vmatpush1.bf16.msra.mxu0 0
      %4363 = vmatprep.subr.bf16.mxu0 0
      %4364 = vmatpush1.bf16.msra.mxu0 0
      %4365 = vmatprep.subr.bf16.mxu0 0
      %4366 = vmatpush1.bf16.msra.mxu0 0
      %4367 = vmatprep.subr.bf16.mxu0 0
      %4368 = vmatpush1.bf16.msra.mxu0 0
      %4369 = vmatprep.subr.bf16.mxu0 0
      %4370 = vmatpush1.bf16.msra.mxu0 0
      %4371 = vmatprep.subr.bf16.mxu0 0
      %4372 = vmatpush1.bf16.msra.mxu0 0
      %4373 = vmatprep.subr.bf16.mxu0 0
      %4374 = vmatpush1.bf16.msra.mxu0 0
      %4375 = vmatprep.subr.bf16.mxu0 0
      %4376 = vmatpush1.bf16.msra.mxu0 0
      %4377 = vmatprep.mubr.bf16.mxu0 0
      %4378 = vmatmul.mubr.bf16.gmra.mrb[0].mxu0 %v3835
      %v4379 = vpop.f32.mrb[0].mxu0
      %v4380 = vadd.f32 %v4340, %v4379
      %v4381 = vpop.f32.mrb[0].mxu0
      %v4382 = vpop.f32.mrb[0].mxu0
      %v4383 = vpop.f32.mrb[0].mxu0
      %4384 = vdwg.mxu0
      %v4385 = vadd.f32 %v3674, %v4299
      %v4386 = vadd.f32 %v3675, %v4301
      %v4387 = vadd.f32 %v3676, %v4380
      %v4388 = vld [vmem:[%s2] sm:$0x7]
      %v4390 = vlaneseq
      %v4391 = vshrl.u32 %v4390, 7
      %v4392 = vsub.s32 0, %v4391
      %v4393 = vrot.slane %v4388, %v4392
      %v4394 = vlaneseq
      %v4395 = vshrl.u32 %v4394, 7
      %v4396 = vsub.s32 1, %v4395
      %v4397 = vrot.slane %v4388, %v4396
      %v4398 = vlaneseq
      %v4399 = vshrl.u32 %v4398, 7
      %v4400 = vsub.s32 2, %v4399
      %v4401 = vrot.slane %v4388, %v4400
      %v4405 = vadd.f32 %v4385, %v4393
      %v4406 = vadd.f32 %v4386, %v4397
      %v4407 = vadd.f32 %v4387, %v4401
      %v4410 = vcombine.low %v4405, %v4406
      %4412 = vst [vmem:[%s170] sm:$0xff] %v4410
      %4413 = vst [vmem:[%s170 + $0x8] sm:$0xf] %v4407
      %p4414 = scmp.lt.s32.totalorder %s14, 1
      %s4415 = scalar_select %p4414, %s14, 1
      %s4416 = smul.addr %s4415, 3
      %s4417 = smul.addr %s4416, 4
      %s4418 = scalar_lea.vmem %s3, %s4417
      // Predicated region
      $region33: #{a_call__.1} parent=31 // pred_check
        %p4419 = pneg %p100
      $region34: #{a_call__.1} parent=31 // pred_check_branch
        %4421 = sbr.rel (%p4419) target = $region36
      $region35: #{a_call__.1} parent=31 // pred_region
        _
      $region36: #{a_call__.1} parent=31 // pred_fallthru
        _
    $region32: #{a_call__.1} parent=5 // pred_fallthru
      _
    %p4422 = scmp.le.s32.totalorder 2, %s9
    // Predicated region
    $region37: #{a_call__.1} parent=5 // pred_check
      %p4423 = pneg %p4422
    $region38: #{a_call__.1} parent=5 // pred_check_branch
      %4425 = sbr.rel (%p4423) target = $region40
    $region39: #{a_call__.1} parent=5 // pred_region
      %s4426 = ssub.s32 %s9, 2
      // Predicated region
      $region41: #{a_call__.1} parent=39 // pred_check
        %p4427 = pneg %p106
      $region42: #{a_call__.1} parent=39 // pred_check_branch
        %4429 = sbr.rel (%p4427) target = $region44
      $region43: #{a_call__.1} parent=39 // pred_region
        %p4430 = scmp.lt.s32.totalorder %s15, 1
        %s4431 = scalar_select %p4430, %s15, 1
        %s4432 = smul.addr %s4431, 3
        %s4433 = smul.addr %s4432, 4
        %s4434 = scalar_lea.vmem %s3, %s4433
      $region44: #{a_call__.1} parent=39 // pred_fallthru
        _
    $region40: #{a_call__.1} parent=5 // pred_fallthru
      _
  $region6: #{a_call__.1} parent=0 // loop_footer
    %s13 = sadd.s32 1, %s9
  $region7: #{a_call__.1} parent=0 // loop_footer_branch
    %8 = sbr.rel target = $region3
  $region8: #{a_call__.1} parent=0 // loop_exit
    _

</llo_original>
